<compile_context>
chip_gen: v7x
topology: tpu7x:2x2x1
jax: 0.10.0
libtpu: 0.0.40
codegen_flags: <defaults>
</compile_context>

<pallas_src>
import jax
import jax.numpy as jnp
from jax import lax
from jax.experimental import pallas as pl
from jax.experimental.pallas import tpu as pltpu

# ---------------- hyperparameters (small, consistent with the module) ----------------
NUM_LAYERS  = 2
D_MODEL     = 32
N_HEAD      = 4
INPUT_SIZE  = 3
OUTPUT_SIZE = 3
DIM_FF      = 64
SEQ         = 8
BATCH       = 2
HEAD_DIM    = D_MODEL // N_HEAD
LN_EPS      = 1e-5
TOKENS      = BATCH * SEQ          # token index = s * BATCH + b  (row-major (S, B))
NEG_INF     = -1e9


# ------------------------------- Pallas kernel --------------------------------------
def _layer_norm(x, w, b):
    # x: (N, D), w/b: (1, D); LayerNorm over last dim, biased variance, eps=1e-5
    mu = jnp.mean(x, axis=-1, keepdims=True)
    xc = x - mu
    var = jnp.mean(xc * xc, axis=-1, keepdims=True)
    return xc * lax.rsqrt(var + LN_EPS) * w + b


def transformer_kernel(x_ref, mask_ref, win_ref, bin_ref,
                       wqkv_ref, bqkv_ref, wo_ref, bo_ref,
                       n1w_ref, n1b_ref, n2w_ref, n2b_ref,
                       w1_ref, b1_ref, w2_ref, b2_ref,
                       pool_ref, wdec_ref, bdec_ref, o_ref):
    # x_ref: (TOKENS, INPUT_SIZE), token = s*BATCH + b; o_ref: (BATCH, OUTPUT_SIZE).
    f32 = jnp.float32

    # Input projection for all tokens at once: (16, 3) @ (3, 32) + bias.
    h = jnp.dot(x_ref[...], win_ref[...], preferred_element_type=f32) + bin_ref[...]
    mask = mask_ref[...]                              # (T, T): 0 same-batch, -1e9 otherwise

    for l in range(NUM_LAYERS):                       # static loop over layers
        # ---- fused QKV projection, feature-major: (3D, D) @ (D, T) per layer ----
        # (1/sqrt(head_dim) pre-folded into the Q rows / Q bias)
        hT = h.T                                                              # (D, T)
        qkvT = jnp.dot(wqkv_ref[l], hT, preferred_element_type=f32) + bqkv_ref[l]  # (3D, T)
        # Q/K/V split: sublane slices (row offsets multiples of 8 -> free);
        # head split: leading-dim reshape (minor dim untouched -> cheap).
        qT = qkvT[0 * D_MODEL:1 * D_MODEL, :].reshape(N_HEAD, HEAD_DIM, TOKENS)
        kT = qkvT[1 * D_MODEL:2 * D_MODEL, :].reshape(N_HEAD, HEAD_DIM, TOKENS)
        vT = qkvT[2 * D_MODEL:3 * D_MODEL, :].reshape(N_HEAD, HEAD_DIM, TOKENS)
        q = jnp.transpose(qT, (0, 2, 1))                                      # (H, T, Dh)

        # ---- head-batched attention over all tokens with a cross-batch mask ----
        s = jnp.einsum('hsd,hdt->hst', q, kT,
                       preferred_element_type=f32) + mask                     # (H, T, T)
        s = s - jnp.max(s, axis=-1, keepdims=True)
        p = jnp.exp(s)                                # masked entries underflow to exact 0
        p = p * pl.reciprocal(jnp.sum(p, axis=-1, keepdims=True), approx=True)
        ctx = jnp.einsum('hst,hdt->hsd', p, vT,
                         preferred_element_type=f32)                          # (H, T, Dh)

        # ---- fused output projection: one batched contraction + 4-way add ----
        attn = jnp.sum(jnp.einsum('hsd,hde->hse', ctx, wo_ref[l],
                                  preferred_element_type=f32), axis=0) + bo_ref[l]  # (T, D)
        h = _layer_norm(h + attn, n1w_ref[l], n1b_ref[l])

        # ---- feed-forward (relu), all tokens at once ----
        ff = jnp.dot(h, w1_ref[l], preferred_element_type=f32) + b1_ref[l]
        ff = jnp.maximum(ff, 0.0)
        ff = jnp.dot(ff, w2_ref[l], preferred_element_type=f32) + b2_ref[l]
        h = _layer_norm(h + ff, n2w_ref[l], n2b_ref[l])

    # ---- mean pool over sequence as a tiny matmul (1/SEQ folded into pool_ref) ----
    pooled = jnp.dot(pool_ref[...], h, preferred_element_type=f32)            # (B, D)
    o_ref[...] = jnp.dot(pooled, wdec_ref[...],
                         preferred_element_type=f32) + bdec_ref[...]          # (B, OUT)


# ---------------------------------- wrapper ------------------------------------------
def transformer_forward(x_sbi, kernel_params):
    # x_sbi: (S, B, INPUT_SIZE) — PyTorch layout.  Row-major flatten to (S*B, IN) is a
    # free reshape (no transpose, no extra dispatch): token index = s*BATCH + b.
    x_tok = x_sbi.reshape(TOKENS, INPUT_SIZE)
    n_in = 1 + len(kernel_params)
    return pl.pallas_call(
        transformer_kernel,
        out_shape=jax.ShapeDtypeStruct((BATCH, OUTPUT_SIZE), jnp.float32),
        in_specs=[pl.BlockSpec(memory_space=pltpu.MemorySpace.VMEM)] * n_in,
        out_specs=pl.BlockSpec(memory_space=pltpu.MemorySpace.VMEM),
    )(x_tok, *kernel_params)


# ------------------------- deterministic parameter setup -----------------------------
def make_params(key):
    keys = iter(jax.random.split(key, 64))
    nxt = lambda: next(keys)
    p = {
        # matches init_weights(): weight ~ U(-0.1, 0.1), bias = 0
        "w_in":  jax.random.uniform(nxt(), (D_MODEL, INPUT_SIZE), jnp.float32, -0.1, 0.1),
        "b_in":  jnp.zeros((D_MODEL,), jnp.float32),
        "w_dec": jax.random.uniform(nxt(), (OUTPUT_SIZE, D_MODEL), jnp.float32, -0.1, 0.1),
        "b_dec": jnp.zeros((OUTPUT_SIZE,), jnp.float32),
        "layers": [],
    }
    for _ in range(NUM_LAYERS):
        p["layers"].append({
            "w_qkv": 0.1 * jax.random.normal(nxt(), (3 * D_MODEL, D_MODEL), jnp.float32),
            "b_qkv": 0.1 * jax.random.normal(nxt(), (3 * D_MODEL,), jnp.float32),
            "w_o":   0.1 * jax.random.normal(nxt(), (D_MODEL, D_MODEL), jnp.float32),
            "b_o":   jnp.zeros((D_MODEL,), jnp.float32),
            "n1_w":  jnp.ones((D_MODEL,), jnp.float32),
            "n1_b":  jnp.zeros((D_MODEL,), jnp.float32),
            "n2_w":  jnp.ones((D_MODEL,), jnp.float32),
            "n2_b":  jnp.zeros((D_MODEL,), jnp.float32),
            "w1":    0.1 * jax.random.normal(nxt(), (DIM_FF, D_MODEL), jnp.float32),
            "b1":    jnp.zeros((DIM_FF,), jnp.float32),
            "w2":    0.1 * jax.random.normal(nxt(), (D_MODEL, DIM_FF), jnp.float32),
            "b2":    jnp.zeros((D_MODEL,), jnp.float32),
        })
    return p


def to_kernel_params(p):
    """Re-layout PyTorch-shaped weights into kernel-friendly tensors (host-side, free).

    * 1/sqrt(head_dim) folded into the Q rows of the fused, feature-major QKV weight/bias.
    * Output projection pre-split per head as (L, H, Dh, D).
    * Cross-batch attention mask and mean-pool matrix (1/SEQ folded in) precomputed.
    """
    L = NUM_LAYERS
    scale = 1.0 / float(HEAD_DIM) ** 0.5
    stack = lambda name: jnp.stack([lp[name] for lp in p["layers"]])

    # Fused QKV weight kept feature-major, (L, 3D, D): rows [q(0:32), k(32:64), v(64:96)].
    row_scale = jnp.concatenate([jnp.full((D_MODEL,), scale, jnp.float32),
                                 jnp.ones((2 * D_MODEL,), jnp.float32)])        # (3D,)
    wqkv = stack("w_qkv") * row_scale[None, :, None]                            # (L, 3D, D)
    bqkv = (stack("b_qkv") * row_scale[None, :]).reshape(L, 3 * D_MODEL, 1)     # (L, 3D, 1)

    # Output projection Wo.T split per head along its rows: (L, H, Dh, D).
    wo   = stack("w_o").transpose(0, 2, 1).reshape(L, N_HEAD, HEAD_DIM, D_MODEL)
    bo   = stack("b_o").reshape(L, 1, D_MODEL)
    n1w  = stack("n1_w").reshape(L, 1, D_MODEL)
    n1b  = stack("n1_b").reshape(L, 1, D_MODEL)
    n2w  = stack("n2_w").reshape(L, 1, D_MODEL)
    n2b  = stack("n2_b").reshape(L, 1, D_MODEL)
    w1   = stack("w1").transpose(0, 2, 1)                                        # (L, D, F)
    b1   = stack("b1").reshape(L, 1, DIM_FF)
    w2   = stack("w2").transpose(0, 2, 1)                                        # (L, F, D)
    b2   = stack("b2").reshape(L, 1, D_MODEL)

    # Token order is (s, b): token = s*BATCH + b, so batch index = token % BATCH.
    tok = jnp.arange(TOKENS)
    same = (tok[:, None] % BATCH) == (tok[None, :] % BATCH)
    mask = jnp.where(same, 0.0, NEG_INF).astype(jnp.float32)                     # (T, T)
    pool = jnp.where((tok[None, :] % BATCH) == jnp.arange(BATCH)[:, None],
                     1.0 / SEQ, 0.0).astype(jnp.float32)                         # (B, T)

    return [
        mask,
        p["w_in"].T,                                # (IN, D)
        p["b_in"].reshape(1, D_MODEL),              # (1, D)
        wqkv, bqkv, wo, bo,
        n1w, n1b, n2w, n2b,
        w1, b1, w2, b2,
        pool,                                       # (B, T), mean-pool matrix
        p["w_dec"].T,                               # (D, OUT)
        p["b_dec"].reshape(1, OUTPUT_SIZE),         # (1, OUT)
    ]


# --------------------------- pure-JAX reference (for checking) -----------------------
def _ln_ref(x, w, b):
    mu = jnp.mean(x, -1, keepdims=True)
    var = jnp.mean((x - mu) ** 2, -1, keepdims=True)
    return (x - mu) / jnp.sqrt(var + LN_EPS) * w + b


def reference_forward(x, p):
    h = x @ p["w_in"].T + p["b_in"]                                  # (S, B, D)
    S, B, D = h.shape
    for lp in p["layers"]:
        qkv = h @ lp["w_qkv"].T + lp["b_qkv"]
        q, k, v = jnp.split(qkv, 3, axis=-1)
        rh = lambda t: t.reshape(S, B, N_HEAD, HEAD_DIM).transpose(1, 2, 0, 3)
        qh, kh, vh = rh(q), rh(k), rh(v)
        scores = jnp.einsum("bhsd,bhtd->bhst", qh, kh) / jnp.sqrt(float(HEAD_DIM))
        attn = jnp.einsum("bhst,bhtd->bhsd", jax.nn.softmax(scores, -1), vh)
        attn = attn.transpose(2, 0, 1, 3).reshape(S, B, D)
        attn = attn @ lp["w_o"].T + lp["b_o"]
        h = _ln_ref(h + attn, lp["n1_w"], lp["n1_b"])
        ff = jax.nn.relu(h @ lp["w1"].T + lp["b1"]) @ lp["w2"].T + lp["b2"]
        h = _ln_ref(h + ff, lp["n2_w"], lp["n2_b"])
    pooled = jnp.mean(h, axis=0)                                     # (B, D)
    return pooled @ p["w_dec"].T + p["b_dec"]                        # (B, OUT)


# -------------------------------------- main -----------------------------------------
if __name__ == "__main__":
    key = jax.random.PRNGKey(0)
    pkey, xkey = jax.random.split(key)
    params = make_params(pkey)
    kernel_params = to_kernel_params(params)

    # PyTorch layout: (seq, batch, input_size)
    x = jax.random.normal(xkey, (SEQ, BATCH, INPUT_SIZE), jnp.float32)

    out = transformer_forward(x, kernel_params)
    out = jax.block_until_ready(out)

    ref = reference_forward(x, params)
    assert out.shape == (BATCH, OUTPUT_SIZE)
    assert bool(jnp.all(jnp.isfinite(out)))
    # approx (EUP) reciprocal in the softmax adds ~2^-12 relative error -> allow 2e-4
    assert bool(jnp.allclose(out, ref, atol=2e-4, rtol=2e-4)), (out, ref)

    print("KERNEL_OK")
</pallas_src>

<mosaic_0001>
module attributes {stable_mosaic.version = 11 : i64} {
  func.func @transformer_kernel(%arg0: memref<16x3xf32, #tpu.memory_space<vmem>>, %arg1: memref<16x16xf32, #tpu.memory_space<vmem>>, %arg2: memref<3x32xf32, #tpu.memory_space<vmem>>, %arg3: memref<1x32xf32, #tpu.memory_space<vmem>>, %arg4: memref<2x96x32xf32, #tpu.memory_space<vmem>>, %arg5: memref<2x96x1xf32, #tpu.memory_space<vmem>>, %arg6: memref<2x4x8x32xf32, #tpu.memory_space<vmem>>, %arg7: memref<2x1x32xf32, #tpu.memory_space<vmem>>, %arg8: memref<2x1x32xf32, #tpu.memory_space<vmem>>, %arg9: memref<2x1x32xf32, #tpu.memory_space<vmem>>, %arg10: memref<2x1x32xf32, #tpu.memory_space<vmem>>, %arg11: memref<2x1x32xf32, #tpu.memory_space<vmem>>, %arg12: memref<2x32x64xf32, #tpu.memory_space<vmem>>, %arg13: memref<2x1x64xf32, #tpu.memory_space<vmem>>, %arg14: memref<2x64x32xf32, #tpu.memory_space<vmem>>, %arg15: memref<2x1x32xf32, #tpu.memory_space<vmem>>, %arg16: memref<2x16xf32, #tpu.memory_space<vmem>>, %arg17: memref<32x3xf32, #tpu.memory_space<vmem>>, %arg18: memref<1x3xf32, #tpu.memory_space<vmem>>, %arg19: memref<2x3xf32, #tpu.memory_space<vmem>>) attributes {dimension_semantics = [], scalar_prefetch = 0 : i64, scratch_operands = 0 : i64, tpu.core_type = #tpu.core_type<tc>} {
    %c0 = arith.constant 0 : index
    %c0_0 = arith.constant 0 : index
    %0 = vector.load %arg0[%c0, %c0_0] : memref<16x3xf32, #tpu.memory_space<vmem>>, vector<16x3xf32>
    %c0_1 = arith.constant 0 : index
    %c0_2 = arith.constant 0 : index
    %1 = vector.load %arg2[%c0_1, %c0_2] : memref<3x32xf32, #tpu.memory_space<vmem>>, vector<3x32xf32>
    %cst = arith.constant dense<0.000000e+00> : vector<16x32xf32>
    %2 = tpu.matmul %0, %1, %cst {dimension_numbers = #tpu.dot_dimension_numbers<[1], [0], [0], [1], [0, 0, 1, 1], [], []>} : vector<16x3xf32>, vector<3x32xf32>, vector<16x32xf32> -> vector<16x32xf32>
    %c0_3 = arith.constant 0 : index
    %c0_4 = arith.constant 0 : index
    %3 = vector.load %arg3[%c0_3, %c0_4] : memref<1x32xf32, #tpu.memory_space<vmem>>, vector<1x32xf32>
    %4 = vector.broadcast %3 : vector<1x32xf32> to vector<16x32xf32>
    %5 = arith.addf %2, %4 : vector<16x32xf32>
    %c0_5 = arith.constant 0 : index
    %c0_6 = arith.constant 0 : index
    %6 = vector.load %arg1[%c0_5, %c0_6] : memref<16x16xf32, #tpu.memory_space<vmem>>, vector<16x16xf32>
    %7 = tpu.transpose %5, [1, 0] : vector<16x32xf32> -> vector<32x16xf32>
    %c0_7 = arith.constant 0 : index
    %c0_8 = arith.constant 0 : index
    %c0_9 = arith.constant 0 : index
    %8 = vector.load %arg4[%c0_7, %c0_8, %c0_9] : memref<2x96x32xf32, #tpu.memory_space<vmem>>, vector<1x96x32xf32>
    %9 = vector.shape_cast %8 : vector<1x96x32xf32> to vector<96x32xf32>
    %cst_10 = arith.constant dense<0.000000e+00> : vector<96x16xf32>
    %10 = tpu.matmul %9, %7, %cst_10 {dimension_numbers = #tpu.dot_dimension_numbers<[1], [0], [0], [1], [0, 0, 1, 1], [], []>} : vector<96x32xf32>, vector<32x16xf32>, vector<96x16xf32> -> vector<96x16xf32>
    %c0_11 = arith.constant 0 : index
    %c0_12 = arith.constant 0 : index
    %c0_13 = arith.constant 0 : index
    %11 = vector.load %arg5[%c0_11, %c0_12, %c0_13] : memref<2x96x1xf32, #tpu.memory_space<vmem>>, vector<1x96x1xf32>
    %12 = vector.shape_cast %11 : vector<1x96x1xf32> to vector<96x1xf32>
    %13 = vector.broadcast %12 : vector<96x1xf32> to vector<96x16xf32>
    %14 = arith.addf %10, %13 : vector<96x16xf32>
    %15 = vector.extract_strided_slice %14 {offsets = [0, 0], sizes = [32, 16], strides = [1, 1]} : vector<96x16xf32> to vector<32x16xf32>
    %16 = vector.shape_cast %15 : vector<32x16xf32> to vector<4x8x16xf32>
    %17 = vector.extract_strided_slice %14 {offsets = [32, 0], sizes = [32, 16], strides = [1, 1]} : vector<96x16xf32> to vector<32x16xf32>
    %18 = vector.shape_cast %17 : vector<32x16xf32> to vector<4x8x16xf32>
    %19 = vector.extract_strided_slice %14 {offsets = [64, 0], sizes = [32, 16], strides = [1, 1]} : vector<96x16xf32> to vector<32x16xf32>
    %20 = vector.shape_cast %19 : vector<32x16xf32> to vector<4x8x16xf32>
    %21 = tpu.transpose %16, [0, 2, 1] : vector<4x8x16xf32> -> vector<4x16x8xf32>
    "tpu.trace_start"() <{level = 10 : i32, message = "hsd,hdt->hst"}> : () -> ()
    %cst_14 = arith.constant dense<0.000000e+00> : vector<4x16x16xf32>
    %22 = tpu.matmul %21, %18, %cst_14 {dimension_numbers = #tpu.dot_dimension_numbers<[2], [1], [1], [2], [0, 0, 0, 1, 1, 2], [0], [0]>} : vector<4x16x8xf32>, vector<4x8x16xf32>, vector<4x16x16xf32> -> vector<4x16x16xf32>
    "tpu.trace_stop"() : () -> ()
    %23 = vector.shape_cast %6 : vector<16x16xf32> to vector<1x16x16xf32>
    %24 = vector.broadcast %23 : vector<1x16x16xf32> to vector<4x16x16xf32>
    %25 = arith.addf %22, %24 : vector<4x16x16xf32>
    %cst_15 = arith.constant dense<0xFF800000> : vector<4x16xf32>
    %26 = vector.multi_reduction <maximumf>, %25, %cst_15 [2] : vector<4x16x16xf32> to vector<4x16xf32>
    %27 = vector.shape_cast %26 : vector<4x16xf32> to vector<4x16x1xf32>
    %28 = vector.broadcast %27 : vector<4x16x1xf32> to vector<4x16x16xf32>
    %29 = arith.subf %25, %28 : vector<4x16x16xf32>
    %30 = math.exp %29 : vector<4x16x16xf32>
    %cst_16 = arith.constant dense<0.000000e+00> : vector<4x16xf32>
    %31 = vector.multi_reduction <add>, %30, %cst_16 [2] : vector<4x16x16xf32> to vector<4x16xf32>
    %32 = vector.shape_cast %31 : vector<4x16xf32> to vector<4x16x1xf32>
    %33 = tpu.reciprocal %32 {approx = true} : vector<4x16x1xf32> -> vector<4x16x1xf32>
    %34 = vector.broadcast %33 : vector<4x16x1xf32> to vector<4x16x16xf32>
    %35 = arith.mulf %30, %34 : vector<4x16x16xf32>
    "tpu.trace_start"() <{level = 10 : i32, message = "hst,hdt->hsd"}> : () -> ()
    %cst_17 = arith.constant dense<0.000000e+00> : vector<4x16x8xf32>
    %36 = tpu.matmul %35, %20, %cst_17 {dimension_numbers = #tpu.dot_dimension_numbers<[2], [2], [1], [1], [0, 0, 0, 1, 1, 1], [0], [0]>} : vector<4x16x16xf32>, vector<4x8x16xf32>, vector<4x16x8xf32> -> vector<4x16x8xf32>
    "tpu.trace_stop"() : () -> ()
    %c0_18 = arith.constant 0 : index
    %c0_19 = arith.constant 0 : index
    %c0_20 = arith.constant 0 : index
    %c0_21 = arith.constant 0 : index
    %37 = vector.load %arg6[%c0_18, %c0_19, %c0_20, %c0_21] : memref<2x4x8x32xf32, #tpu.memory_space<vmem>>, vector<1x4x8x32xf32>
    %38 = vector.shape_cast %37 : vector<1x4x8x32xf32> to vector<4x8x32xf32>
    "tpu.trace_start"() <{level = 10 : i32, message = "hsd,hde->hse"}> : () -> ()
    %cst_22 = arith.constant dense<0.000000e+00> : vector<4x16x32xf32>
    %39 = tpu.matmul %36, %38, %cst_22 {dimension_numbers = #tpu.dot_dimension_numbers<[2], [1], [1], [2], [0, 0, 0, 1, 1, 2], [0], [0]>} : vector<4x16x8xf32>, vector<4x8x32xf32>, vector<4x16x32xf32> -> vector<4x16x32xf32>
    "tpu.trace_stop"() : () -> ()
    %cst_23 = arith.constant dense<0.000000e+00> : vector<16x32xf32>
    %40 = vector.multi_reduction <add>, %39, %cst_23 [0] : vector<4x16x32xf32> to vector<16x32xf32>
    %c0_24 = arith.constant 0 : index
    %c0_25 = arith.constant 0 : index
    %c0_26 = arith.constant 0 : index
    %41 = vector.load %arg7[%c0_24, %c0_25, %c0_26] : memref<2x1x32xf32, #tpu.memory_space<vmem>>, vector<1x1x32xf32>
    %42 = vector.shape_cast %41 : vector<1x1x32xf32> to vector<1x32xf32>
    %43 = vector.broadcast %42 : vector<1x32xf32> to vector<16x32xf32>
    %44 = arith.addf %40, %43 : vector<16x32xf32>
    %45 = arith.addf %5, %44 : vector<16x32xf32>
    %c0_27 = arith.constant 0 : index
    %c0_28 = arith.constant 0 : index
    %c0_29 = arith.constant 0 : index
    %46 = vector.load %arg8[%c0_27, %c0_28, %c0_29] : memref<2x1x32xf32, #tpu.memory_space<vmem>>, vector<1x1x32xf32>
    %47 = vector.shape_cast %46 : vector<1x1x32xf32> to vector<1x32xf32>
    %c0_30 = arith.constant 0 : index
    %c0_31 = arith.constant 0 : index
    %c0_32 = arith.constant 0 : index
    %48 = vector.load %arg9[%c0_30, %c0_31, %c0_32] : memref<2x1x32xf32, #tpu.memory_space<vmem>>, vector<1x1x32xf32>
    %49 = vector.shape_cast %48 : vector<1x1x32xf32> to vector<1x32xf32>
    %cst_33 = arith.constant dense<0.000000e+00> : vector<16xf32>
    %50 = vector.multi_reduction <add>, %45, %cst_33 [1] : vector<16x32xf32> to vector<16xf32>
    %51 = vector.shape_cast %50 : vector<16xf32> to vector<16x1xf32>
    %cst_34 = arith.constant 3.200000e+01 : f32
    %52 = vector.broadcast %cst_34 : f32 to vector<16x1xf32>
    %53 = arith.divf %51, %52 : vector<16x1xf32>
    %54 = vector.broadcast %53 : vector<16x1xf32> to vector<16x32xf32>
    %55 = arith.subf %45, %54 : vector<16x32xf32>
    %56 = arith.mulf %55, %55 : vector<16x32xf32>
    %cst_35 = arith.constant dense<0.000000e+00> : vector<16xf32>
    %57 = vector.multi_reduction <add>, %56, %cst_35 [1] : vector<16x32xf32> to vector<16xf32>
    %58 = vector.shape_cast %57 : vector<16xf32> to vector<16x1xf32>
    %cst_36 = arith.constant 3.200000e+01 : f32
    %59 = vector.broadcast %cst_36 : f32 to vector<16x1xf32>
    %60 = arith.divf %58, %59 : vector<16x1xf32>
    %cst_37 = arith.constant 9.99999974E-6 : f32
    %61 = vector.broadcast %cst_37 : f32 to vector<16x1xf32>
    %62 = arith.addf %60, %61 : vector<16x1xf32>
    %63 = math.rsqrt %62 : vector<16x1xf32>
    %64 = vector.broadcast %63 : vector<16x1xf32> to vector<16x32xf32>
    %65 = arith.mulf %55, %64 : vector<16x32xf32>
    %66 = vector.broadcast %47 : vector<1x32xf32> to vector<16x32xf32>
    %67 = arith.mulf %65, %66 : vector<16x32xf32>
    %68 = vector.broadcast %49 : vector<1x32xf32> to vector<16x32xf32>
    %69 = arith.addf %67, %68 : vector<16x32xf32>
    %c0_38 = arith.constant 0 : index
    %c0_39 = arith.constant 0 : index
    %c0_40 = arith.constant 0 : index
    %70 = vector.load %arg12[%c0_38, %c0_39, %c0_40] : memref<2x32x64xf32, #tpu.memory_space<vmem>>, vector<1x32x64xf32>
    %71 = vector.shape_cast %70 : vector<1x32x64xf32> to vector<32x64xf32>
    %cst_41 = arith.constant dense<0.000000e+00> : vector<16x64xf32>
    %72 = tpu.matmul %69, %71, %cst_41 {dimension_numbers = #tpu.dot_dimension_numbers<[1], [0], [0], [1], [0, 0, 1, 1], [], []>} : vector<16x32xf32>, vector<32x64xf32>, vector<16x64xf32> -> vector<16x64xf32>
    %c0_42 = arith.constant 0 : index
    %c0_43 = arith.constant 0 : index
    %c0_44 = arith.constant 0 : index
    %73 = vector.load %arg13[%c0_42, %c0_43, %c0_44] : memref<2x1x64xf32, #tpu.memory_space<vmem>>, vector<1x1x64xf32>
    %74 = vector.shape_cast %73 : vector<1x1x64xf32> to vector<1x64xf32>
    %75 = vector.broadcast %74 : vector<1x64xf32> to vector<16x64xf32>
    %76 = arith.addf %72, %75 : vector<16x64xf32>
    %cst_45 = arith.constant 0.000000e+00 : f32
    %77 = vector.broadcast %cst_45 : f32 to vector<16x64xf32>
    %78 = arith.maximumf %76, %77 : vector<16x64xf32>
    %c0_46 = arith.constant 0 : index
    %c0_47 = arith.constant 0 : index
    %c0_48 = arith.constant 0 : index
    %79 = vector.load %arg14[%c0_46, %c0_47, %c0_48] : memref<2x64x32xf32, #tpu.memory_space<vmem>>, vector<1x64x32xf32>
    %80 = vector.shape_cast %79 : vector<1x64x32xf32> to vector<64x32xf32>
    %cst_49 = arith.constant dense<0.000000e+00> : vector<16x32xf32>
    %81 = tpu.matmul %78, %80, %cst_49 {dimension_numbers = #tpu.dot_dimension_numbers<[1], [0], [0], [1], [0, 0, 1, 1], [], []>} : vector<16x64xf32>, vector<64x32xf32>, vector<16x32xf32> -> vector<16x32xf32>
    %c0_50 = arith.constant 0 : index
    %c0_51 = arith.constant 0 : index
    %c0_52 = arith.constant 0 : index
    %82 = vector.load %arg15[%c0_50, %c0_51, %c0_52] : memref<2x1x32xf32, #tpu.memory_space<vmem>>, vector<1x1x32xf32>
    %83 = vector.shape_cast %82 : vector<1x1x32xf32> to vector<1x32xf32>
    %84 = vector.broadcast %83 : vector<1x32xf32> to vector<16x32xf32>
    %85 = arith.addf %81, %84 : vector<16x32xf32>
    %86 = arith.addf %69, %85 : vector<16x32xf32>
    %c0_53 = arith.constant 0 : index
    %c0_54 = arith.constant 0 : index
    %c0_55 = arith.constant 0 : index
    %87 = vector.load %arg10[%c0_53, %c0_54, %c0_55] : memref<2x1x32xf32, #tpu.memory_space<vmem>>, vector<1x1x32xf32>
    %88 = vector.shape_cast %87 : vector<1x1x32xf32> to vector<1x32xf32>
    %c0_56 = arith.constant 0 : index
    %c0_57 = arith.constant 0 : index
    %c0_58 = arith.constant 0 : index
    %89 = vector.load %arg11[%c0_56, %c0_57, %c0_58] : memref<2x1x32xf32, #tpu.memory_space<vmem>>, vector<1x1x32xf32>
    %90 = vector.shape_cast %89 : vector<1x1x32xf32> to vector<1x32xf32>
    %cst_59 = arith.constant dense<0.000000e+00> : vector<16xf32>
    %91 = vector.multi_reduction <add>, %86, %cst_59 [1] : vector<16x32xf32> to vector<16xf32>
    %92 = vector.shape_cast %91 : vector<16xf32> to vector<16x1xf32>
    %cst_60 = arith.constant 3.200000e+01 : f32
    %93 = vector.broadcast %cst_60 : f32 to vector<16x1xf32>
    %94 = arith.divf %92, %93 : vector<16x1xf32>
    %95 = vector.broadcast %94 : vector<16x1xf32> to vector<16x32xf32>
    %96 = arith.subf %86, %95 : vector<16x32xf32>
    %97 = arith.mulf %96, %96 : vector<16x32xf32>
    %cst_61 = arith.constant dense<0.000000e+00> : vector<16xf32>
    %98 = vector.multi_reduction <add>, %97, %cst_61 [1] : vector<16x32xf32> to vector<16xf32>
    %99 = vector.shape_cast %98 : vector<16xf32> to vector<16x1xf32>
    %cst_62 = arith.constant 3.200000e+01 : f32
    %100 = vector.broadcast %cst_62 : f32 to vector<16x1xf32>
    %101 = arith.divf %99, %100 : vector<16x1xf32>
    %cst_63 = arith.constant 9.99999974E-6 : f32
    %102 = vector.broadcast %cst_63 : f32 to vector<16x1xf32>
    %103 = arith.addf %101, %102 : vector<16x1xf32>
    %104 = math.rsqrt %103 : vector<16x1xf32>
    %105 = vector.broadcast %104 : vector<16x1xf32> to vector<16x32xf32>
    %106 = arith.mulf %96, %105 : vector<16x32xf32>
    %107 = vector.broadcast %88 : vector<1x32xf32> to vector<16x32xf32>
    %108 = arith.mulf %106, %107 : vector<16x32xf32>
    %109 = vector.broadcast %90 : vector<1x32xf32> to vector<16x32xf32>
    %110 = arith.addf %108, %109 : vector<16x32xf32>
    %111 = tpu.transpose %110, [1, 0] : vector<16x32xf32> -> vector<32x16xf32>
    %c1 = arith.constant 1 : index
    %c0_64 = arith.constant 0 : index
    %c0_65 = arith.constant 0 : index
    %112 = vector.load %arg4[%c1, %c0_64, %c0_65] : memref<2x96x32xf32, #tpu.memory_space<vmem>>, vector<1x96x32xf32>
    %113 = vector.shape_cast %112 : vector<1x96x32xf32> to vector<96x32xf32>
    %cst_66 = arith.constant dense<0.000000e+00> : vector<96x16xf32>
    %114 = tpu.matmul %113, %111, %cst_66 {dimension_numbers = #tpu.dot_dimension_numbers<[1], [0], [0], [1], [0, 0, 1, 1], [], []>} : vector<96x32xf32>, vector<32x16xf32>, vector<96x16xf32> -> vector<96x16xf32>
    %c1_67 = arith.constant 1 : index
    %c0_68 = arith.constant 0 : index
    %c0_69 = arith.constant 0 : index
    %115 = vector.load %arg5[%c1_67, %c0_68, %c0_69] : memref<2x96x1xf32, #tpu.memory_space<vmem>>, vector<1x96x1xf32>
    %116 = vector.shape_cast %115 : vector<1x96x1xf32> to vector<96x1xf32>
    %117 = vector.broadcast %116 : vector<96x1xf32> to vector<96x16xf32>
    %118 = arith.addf %114, %117 : vector<96x16xf32>
    %119 = vector.extract_strided_slice %118 {offsets = [0, 0], sizes = [32, 16], strides = [1, 1]} : vector<96x16xf32> to vector<32x16xf32>
    %120 = vector.shape_cast %119 : vector<32x16xf32> to vector<4x8x16xf32>
    %121 = vector.extract_strided_slice %118 {offsets = [32, 0], sizes = [32, 16], strides = [1, 1]} : vector<96x16xf32> to vector<32x16xf32>
    %122 = vector.shape_cast %121 : vector<32x16xf32> to vector<4x8x16xf32>
    %123 = vector.extract_strided_slice %118 {offsets = [64, 0], sizes = [32, 16], strides = [1, 1]} : vector<96x16xf32> to vector<32x16xf32>
    %124 = vector.shape_cast %123 : vector<32x16xf32> to vector<4x8x16xf32>
    %125 = tpu.transpose %120, [0, 2, 1] : vector<4x8x16xf32> -> vector<4x16x8xf32>
    "tpu.trace_start"() <{level = 10 : i32, message = "hsd,hdt->hst"}> : () -> ()
    %cst_70 = arith.constant dense<0.000000e+00> : vector<4x16x16xf32>
    %126 = tpu.matmul %125, %122, %cst_70 {dimension_numbers = #tpu.dot_dimension_numbers<[2], [1], [1], [2], [0, 0, 0, 1, 1, 2], [0], [0]>} : vector<4x16x8xf32>, vector<4x8x16xf32>, vector<4x16x16xf32> -> vector<4x16x16xf32>
    "tpu.trace_stop"() : () -> ()
    %127 = vector.shape_cast %6 : vector<16x16xf32> to vector<1x16x16xf32>
    %128 = vector.broadcast %127 : vector<1x16x16xf32> to vector<4x16x16xf32>
    %129 = arith.addf %126, %128 : vector<4x16x16xf32>
    %cst_71 = arith.constant dense<0xFF800000> : vector<4x16xf32>
    %130 = vector.multi_reduction <maximumf>, %129, %cst_71 [2] : vector<4x16x16xf32> to vector<4x16xf32>
    %131 = vector.shape_cast %130 : vector<4x16xf32> to vector<4x16x1xf32>
    %132 = vector.broadcast %131 : vector<4x16x1xf32> to vector<4x16x16xf32>
    %133 = arith.subf %129, %132 : vector<4x16x16xf32>
    %134 = math.exp %133 : vector<4x16x16xf32>
    %cst_72 = arith.constant dense<0.000000e+00> : vector<4x16xf32>
    %135 = vector.multi_reduction <add>, %134, %cst_72 [2] : vector<4x16x16xf32> to vector<4x16xf32>
    %136 = vector.shape_cast %135 : vector<4x16xf32> to vector<4x16x1xf32>
    %137 = tpu.reciprocal %136 {approx = true} : vector<4x16x1xf32> -> vector<4x16x1xf32>
    %138 = vector.broadcast %137 : vector<4x16x1xf32> to vector<4x16x16xf32>
    %139 = arith.mulf %134, %138 : vector<4x16x16xf32>
    "tpu.trace_start"() <{level = 10 : i32, message = "hst,hdt->hsd"}> : () -> ()
    %cst_73 = arith.constant dense<0.000000e+00> : vector<4x16x8xf32>
    %140 = tpu.matmul %139, %124, %cst_73 {dimension_numbers = #tpu.dot_dimension_numbers<[2], [2], [1], [1], [0, 0, 0, 1, 1, 1], [0], [0]>} : vector<4x16x16xf32>, vector<4x8x16xf32>, vector<4x16x8xf32> -> vector<4x16x8xf32>
    "tpu.trace_stop"() : () -> ()
    %c1_74 = arith.constant 1 : index
    %c0_75 = arith.constant 0 : index
    %c0_76 = arith.constant 0 : index
    %c0_77 = arith.constant 0 : index
    %141 = vector.load %arg6[%c1_74, %c0_75, %c0_76, %c0_77] : memref<2x4x8x32xf32, #tpu.memory_space<vmem>>, vector<1x4x8x32xf32>
    %142 = vector.shape_cast %141 : vector<1x4x8x32xf32> to vector<4x8x32xf32>
    "tpu.trace_start"() <{level = 10 : i32, message = "hsd,hde->hse"}> : () -> ()
    %cst_78 = arith.constant dense<0.000000e+00> : vector<4x16x32xf32>
    %143 = tpu.matmul %140, %142, %cst_78 {dimension_numbers = #tpu.dot_dimension_numbers<[2], [1], [1], [2], [0, 0, 0, 1, 1, 2], [0], [0]>} : vector<4x16x8xf32>, vector<4x8x32xf32>, vector<4x16x32xf32> -> vector<4x16x32xf32>
    "tpu.trace_stop"() : () -> ()
    %cst_79 = arith.constant dense<0.000000e+00> : vector<16x32xf32>
    %144 = vector.multi_reduction <add>, %143, %cst_79 [0] : vector<4x16x32xf32> to vector<16x32xf32>
    %c1_80 = arith.constant 1 : index
    %c0_81 = arith.constant 0 : index
    %c0_82 = arith.constant 0 : index
    %145 = vector.load %arg7[%c1_80, %c0_81, %c0_82] : memref<2x1x32xf32, #tpu.memory_space<vmem>>, vector<1x1x32xf32>
    %146 = vector.shape_cast %145 : vector<1x1x32xf32> to vector<1x32xf32>
    %147 = vector.broadcast %146 : vector<1x32xf32> to vector<16x32xf32>
    %148 = arith.addf %144, %147 : vector<16x32xf32>
    %149 = arith.addf %110, %148 : vector<16x32xf32>
    %c1_83 = arith.constant 1 : index
    %c0_84 = arith.constant 0 : index
    %c0_85 = arith.constant 0 : index
    %150 = vector.load %arg8[%c1_83, %c0_84, %c0_85] : memref<2x1x32xf32, #tpu.memory_space<vmem>>, vector<1x1x32xf32>
    %151 = vector.shape_cast %150 : vector<1x1x32xf32> to vector<1x32xf32>
    %c1_86 = arith.constant 1 : index
    %c0_87 = arith.constant 0 : index
    %c0_88 = arith.constant 0 : index
    %152 = vector.load %arg9[%c1_86, %c0_87, %c0_88] : memref<2x1x32xf32, #tpu.memory_space<vmem>>, vector<1x1x32xf32>
    %153 = vector.shape_cast %152 : vector<1x1x32xf32> to vector<1x32xf32>
    %cst_89 = arith.constant dense<0.000000e+00> : vector<16xf32>
    %154 = vector.multi_reduction <add>, %149, %cst_89 [1] : vector<16x32xf32> to vector<16xf32>
    %155 = vector.shape_cast %154 : vector<16xf32> to vector<16x1xf32>
    %cst_90 = arith.constant 3.200000e+01 : f32
    %156 = vector.broadcast %cst_90 : f32 to vector<16x1xf32>
    %157 = arith.divf %155, %156 : vector<16x1xf32>
    %158 = vector.broadcast %157 : vector<16x1xf32> to vector<16x32xf32>
    %159 = arith.subf %149, %158 : vector<16x32xf32>
    %160 = arith.mulf %159, %159 : vector<16x32xf32>
    %cst_91 = arith.constant dense<0.000000e+00> : vector<16xf32>
    %161 = vector.multi_reduction <add>, %160, %cst_91 [1] : vector<16x32xf32> to vector<16xf32>
    %162 = vector.shape_cast %161 : vector<16xf32> to vector<16x1xf32>
    %cst_92 = arith.constant 3.200000e+01 : f32
    %163 = vector.broadcast %cst_92 : f32 to vector<16x1xf32>
    %164 = arith.divf %162, %163 : vector<16x1xf32>
    %cst_93 = arith.constant 9.99999974E-6 : f32
    %165 = vector.broadcast %cst_93 : f32 to vector<16x1xf32>
    %166 = arith.addf %164, %165 : vector<16x1xf32>
    %167 = math.rsqrt %166 : vector<16x1xf32>
    %168 = vector.broadcast %167 : vector<16x1xf32> to vector<16x32xf32>
    %169 = arith.mulf %159, %168 : vector<16x32xf32>
    %170 = vector.broadcast %151 : vector<1x32xf32> to vector<16x32xf32>
    %171 = arith.mulf %169, %170 : vector<16x32xf32>
    %172 = vector.broadcast %153 : vector<1x32xf32> to vector<16x32xf32>
    %173 = arith.addf %171, %172 : vector<16x32xf32>
    %c1_94 = arith.constant 1 : index
    %c0_95 = arith.constant 0 : index
    %c0_96 = arith.constant 0 : index
    %174 = vector.load %arg12[%c1_94, %c0_95, %c0_96] : memref<2x32x64xf32, #tpu.memory_space<vmem>>, vector<1x32x64xf32>
    %175 = vector.shape_cast %174 : vector<1x32x64xf32> to vector<32x64xf32>
    %cst_97 = arith.constant dense<0.000000e+00> : vector<16x64xf32>
    %176 = tpu.matmul %173, %175, %cst_97 {dimension_numbers = #tpu.dot_dimension_numbers<[1], [0], [0], [1], [0, 0, 1, 1], [], []>} : vector<16x32xf32>, vector<32x64xf32>, vector<16x64xf32> -> vector<16x64xf32>
    %c1_98 = arith.constant 1 : index
    %c0_99 = arith.constant 0 : index
    %c0_100 = arith.constant 0 : index
    %177 = vector.load %arg13[%c1_98, %c0_99, %c0_100] : memref<2x1x64xf32, #tpu.memory_space<vmem>>, vector<1x1x64xf32>
    %178 = vector.shape_cast %177 : vector<1x1x64xf32> to vector<1x64xf32>
    %179 = vector.broadcast %178 : vector<1x64xf32> to vector<16x64xf32>
    %180 = arith.addf %176, %179 : vector<16x64xf32>
    %cst_101 = arith.constant 0.000000e+00 : f32
    %181 = vector.broadcast %cst_101 : f32 to vector<16x64xf32>
    %182 = arith.maximumf %180, %181 : vector<16x64xf32>
    %c1_102 = arith.constant 1 : index
    %c0_103 = arith.constant 0 : index
    %c0_104 = arith.constant 0 : index
    %183 = vector.load %arg14[%c1_102, %c0_103, %c0_104] : memref<2x64x32xf32, #tpu.memory_space<vmem>>, vector<1x64x32xf32>
    %184 = vector.shape_cast %183 : vector<1x64x32xf32> to vector<64x32xf32>
    %cst_105 = arith.constant dense<0.000000e+00> : vector<16x32xf32>
    %185 = tpu.matmul %182, %184, %cst_105 {dimension_numbers = #tpu.dot_dimension_numbers<[1], [0], [0], [1], [0, 0, 1, 1], [], []>} : vector<16x64xf32>, vector<64x32xf32>, vector<16x32xf32> -> vector<16x32xf32>
    %c1_106 = arith.constant 1 : index
    %c0_107 = arith.constant 0 : index
    %c0_108 = arith.constant 0 : index
    %186 = vector.load %arg15[%c1_106, %c0_107, %c0_108] : memref<2x1x32xf32, #tpu.memory_space<vmem>>, vector<1x1x32xf32>
    %187 = vector.shape_cast %186 : vector<1x1x32xf32> to vector<1x32xf32>
    %188 = vector.broadcast %187 : vector<1x32xf32> to vector<16x32xf32>
    %189 = arith.addf %185, %188 : vector<16x32xf32>
    %190 = arith.addf %173, %189 : vector<16x32xf32>
    %c1_109 = arith.constant 1 : index
    %c0_110 = arith.constant 0 : index
    %c0_111 = arith.constant 0 : index
    %191 = vector.load %arg10[%c1_109, %c0_110, %c0_111] : memref<2x1x32xf32, #tpu.memory_space<vmem>>, vector<1x1x32xf32>
    %192 = vector.shape_cast %191 : vector<1x1x32xf32> to vector<1x32xf32>
    %c1_112 = arith.constant 1 : index
    %c0_113 = arith.constant 0 : index
    %c0_114 = arith.constant 0 : index
    %193 = vector.load %arg11[%c1_112, %c0_113, %c0_114] : memref<2x1x32xf32, #tpu.memory_space<vmem>>, vector<1x1x32xf32>
    %194 = vector.shape_cast %193 : vector<1x1x32xf32> to vector<1x32xf32>
    %cst_115 = arith.constant dense<0.000000e+00> : vector<16xf32>
    %195 = vector.multi_reduction <add>, %190, %cst_115 [1] : vector<16x32xf32> to vector<16xf32>
    %196 = vector.shape_cast %195 : vector<16xf32> to vector<16x1xf32>
    %cst_116 = arith.constant 3.200000e+01 : f32
    %197 = vector.broadcast %cst_116 : f32 to vector<16x1xf32>
    %198 = arith.divf %196, %197 : vector<16x1xf32>
    %199 = vector.broadcast %198 : vector<16x1xf32> to vector<16x32xf32>
    %200 = arith.subf %190, %199 : vector<16x32xf32>
    %201 = arith.mulf %200, %200 : vector<16x32xf32>
    %cst_117 = arith.constant dense<0.000000e+00> : vector<16xf32>
    %202 = vector.multi_reduction <add>, %201, %cst_117 [1] : vector<16x32xf32> to vector<16xf32>
    %203 = vector.shape_cast %202 : vector<16xf32> to vector<16x1xf32>
    %cst_118 = arith.constant 3.200000e+01 : f32
    %204 = vector.broadcast %cst_118 : f32 to vector<16x1xf32>
    %205 = arith.divf %203, %204 : vector<16x1xf32>
    %cst_119 = arith.constant 9.99999974E-6 : f32
    %206 = vector.broadcast %cst_119 : f32 to vector<16x1xf32>
    %207 = arith.addf %205, %206 : vector<16x1xf32>
    %208 = math.rsqrt %207 : vector<16x1xf32>
    %209 = vector.broadcast %208 : vector<16x1xf32> to vector<16x32xf32>
    %210 = arith.mulf %200, %209 : vector<16x32xf32>
    %211 = vector.broadcast %192 : vector<1x32xf32> to vector<16x32xf32>
    %212 = arith.mulf %210, %211 : vector<16x32xf32>
    %213 = vector.broadcast %194 : vector<1x32xf32> to vector<16x32xf32>
    %214 = arith.addf %212, %213 : vector<16x32xf32>
    %c0_120 = arith.constant 0 : index
    %c0_121 = arith.constant 0 : index
    %215 = vector.load %arg16[%c0_120, %c0_121] : memref<2x16xf32, #tpu.memory_space<vmem>>, vector<2x16xf32>
    %cst_122 = arith.constant dense<0.000000e+00> : vector<2x32xf32>
    %216 = tpu.matmul %215, %214, %cst_122 {dimension_numbers = #tpu.dot_dimension_numbers<[1], [0], [0], [1], [0, 0, 1, 1], [], []>} : vector<2x16xf32>, vector<16x32xf32>, vector<2x32xf32> -> vector<2x32xf32>
    %c0_123 = arith.constant 0 : index
    %c0_124 = arith.constant 0 : index
    %217 = vector.load %arg17[%c0_123, %c0_124] : memref<32x3xf32, #tpu.memory_space<vmem>>, vector<32x3xf32>
    %cst_125 = arith.constant dense<0.000000e+00> : vector<2x3xf32>
    %218 = tpu.matmul %216, %217, %cst_125 {dimension_numbers = #tpu.dot_dimension_numbers<[1], [0], [0], [1], [0, 0, 1, 1], [], []>} : vector<2x32xf32>, vector<32x3xf32>, vector<2x3xf32> -> vector<2x3xf32>
    %c0_126 = arith.constant 0 : index
    %c0_127 = arith.constant 0 : index
    %219 = vector.load %arg18[%c0_126, %c0_127] : memref<1x3xf32, #tpu.memory_space<vmem>>, vector<1x3xf32>
    %220 = vector.broadcast %219 : vector<1x3xf32> to vector<2x3xf32>
    %221 = arith.addf %218, %220 : vector<2x3xf32>
    %c0_128 = arith.constant 0 : index
    %c0_129 = arith.constant 0 : index
    %222 = vector.load %arg19[%c0_128, %c0_129] : memref<2x3xf32, #tpu.memory_space<vmem>>, vector<2x3xf32>
    tpu.vector_store %arg19[%c0_128, %c0_129], %221 {strides = array<i32>} : memref<2x3xf32, #tpu.memory_space<vmem>>, vector<2x3xf32>,
    return
  }
}

</mosaic_0001>

<llo_original>
// kernel: tpu_custom_call.1
$region0: #{tpu_custom_call.1}
  #allocation0 [shape = 'u32[]', space=smem, size = 0x4, offset = 0x4, fixed_abs, tag = 'smem constant byte address 0x4 - core index']
  #allocation1 [shape = 'u32[144,128]{1,0:T(1,128)}', space=vmem, size = 0x12000, scoped, tag = 'internal scratch']
  %s0 = inlined_call_operand.vmem [shape: f32[16,3], index: 0, kind: input, shape index: {}]
  %s1 = inlined_call_operand.vmem [shape: f32[16,16], index: 1, kind: input, shape index: {}]
  %s2 = inlined_call_operand.vmem [shape: f32[3,32], index: 2, kind: input, shape index: {}]
  %s3 = inlined_call_operand.vmem [shape: f32[1,32], index: 3, kind: input, shape index: {}]
  %s4 = inlined_call_operand.vmem [shape: f32[2,96,32], index: 4, kind: input, shape index: {}]
  %s5 = inlined_call_operand.vmem [shape: f32[2,96,1], index: 5, kind: input, shape index: {}]
  %s6 = inlined_call_operand.vmem [shape: f32[2,4,8,32], index: 6, kind: input, shape index: {}]
  %s7 = inlined_call_operand.vmem [shape: f32[2,1,32], index: 7, kind: input, shape index: {}]
  %s8 = inlined_call_operand.vmem [shape: f32[2,1,32], index: 8, kind: input, shape index: {}]
  %s9 = inlined_call_operand.vmem [shape: f32[2,1,32], index: 9, kind: input, shape index: {}]
  %s10 = inlined_call_operand.vmem [shape: f32[2,1,32], index: 10, kind: input, shape index: {}]
  %s11 = inlined_call_operand.vmem [shape: f32[2,1,32], index: 11, kind: input, shape index: {}]
  %s12 = inlined_call_operand.vmem [shape: f32[2,32,64], index: 12, kind: input, shape index: {}]
  %s13 = inlined_call_operand.vmem [shape: f32[2,1,64], index: 13, kind: input, shape index: {}]
  %s14 = inlined_call_operand.vmem [shape: f32[2,64,32], index: 14, kind: input, shape index: {}]
  %s15 = inlined_call_operand.vmem [shape: f32[2,1,32], index: 15, kind: input, shape index: {}]
  %s16 = inlined_call_operand.vmem [shape: f32[2,16], index: 16, kind: input, shape index: {}]
  %s17 = inlined_call_operand.vmem [shape: f32[32,3], index: 17, kind: input, shape index: {}]
  %s18 = inlined_call_operand.vmem [shape: f32[1,3], index: 18, kind: input, shape index: {}]
  %s19 = inlined_call_operand.hbm [shape: f32[2,3], index: 19, kind: output, shape index: {}]
  %s20 = sld [smem:[#allocation0]]
  $region86: #{tpu_custom_call.1} parent=0
    _
  %s22 = ssub.s32 1, %s20
  %s23 = scalar_select 0, %s22, %s20
  $region1: #{tpu_custom_call.1} parent=0
    #allocation2 [shape = 'u8[1024]{0}', space=vmem, size = 0x400, scoped, tag = 'output window, operand 0, single buffered']
    #allocation3 [shape = 's32[1]{0}', space=sflag, size = 0x4, scoped, tag = 'scoped memory for tpu_custom_call.1']
    %24 = vsyncpa [#allocation3], 0
    // Predicated region
    $region2: #{tpu_custom_call.1} parent=1 // pred_check
      _
    $region3: #{tpu_custom_call.1} parent=1 // pred_check_branch
      %26 = sbr.rel (0) target = $region5
    $region4: #{tpu_custom_call.1} parent=1 // pred_region
      _
    $region5: #{tpu_custom_call.1} parent=1 // pred_fallthru
      _
    // Predicated region
    $region6: #{tpu_custom_call.1} parent=1 // pred_check
      _
    $region7: #{tpu_custom_call.1} parent=1 // pred_check_branch
      %28 = sbr.rel (0) target = $region9
    $region8: #{tpu_custom_call.1} parent=1 // pred_region
      _
    $region9: #{tpu_custom_call.1} parent=1 // pred_fallthru
      _
    // Predicated region
    $region10: #{tpu_custom_call.1} parent=1 // pred_check
      _
    $region11: #{tpu_custom_call.1} parent=1 // pred_check_branch
      %30 = sbr.rel (0) target = $region13
    $region12: #{tpu_custom_call.1} parent=1 // pred_region
      _
    $region13: #{tpu_custom_call.1} parent=1 // pred_fallthru
      _
    // Predicated region
    $region14: #{tpu_custom_call.1} parent=1 // pred_check
      _
    $region15: #{tpu_custom_call.1} parent=1 // pred_check_branch
      %32 = sbr.rel (0) target = $region17
    $region16: #{tpu_custom_call.1} parent=1 // pred_region
      _
    $region17: #{tpu_custom_call.1} parent=1 // pred_fallthru
      _
    // Predicated region
    $region18: #{tpu_custom_call.1} parent=1 // pred_check
      _
    $region19: #{tpu_custom_call.1} parent=1 // pred_check_branch
      %34 = sbr.rel (0) target = $region21
    $region20: #{tpu_custom_call.1} parent=1 // pred_region
      _
    $region21: #{tpu_custom_call.1} parent=1 // pred_fallthru
      _
    // Predicated region
    $region22: #{tpu_custom_call.1} parent=1 // pred_check
      _
    $region23: #{tpu_custom_call.1} parent=1 // pred_check_branch
      %36 = sbr.rel (0) target = $region25
    $region24: #{tpu_custom_call.1} parent=1 // pred_region
      _
    $region25: #{tpu_custom_call.1} parent=1 // pred_fallthru
      _
    // Predicated region
    $region26: #{tpu_custom_call.1} parent=1 // pred_check
      _
    $region27: #{tpu_custom_call.1} parent=1 // pred_check_branch
      %38 = sbr.rel (0) target = $region29
    $region28: #{tpu_custom_call.1} parent=1 // pred_region
      _
    $region29: #{tpu_custom_call.1} parent=1 // pred_fallthru
      _
    // Predicated region
    $region30: #{tpu_custom_call.1} parent=1 // pred_check
      _
    $region31: #{tpu_custom_call.1} parent=1 // pred_check_branch
      %40 = sbr.rel (0) target = $region33
    $region32: #{tpu_custom_call.1} parent=1 // pred_region
      _
    $region33: #{tpu_custom_call.1} parent=1 // pred_fallthru
      _
    // Predicated region
    $region34: #{tpu_custom_call.1} parent=1 // pred_check
      _
    $region35: #{tpu_custom_call.1} parent=1 // pred_check_branch
      %42 = sbr.rel (0) target = $region37
    $region36: #{tpu_custom_call.1} parent=1 // pred_region
      _
    $region37: #{tpu_custom_call.1} parent=1 // pred_fallthru
      _
    // Predicated region
    $region38: #{tpu_custom_call.1} parent=1 // pred_check
      _
    $region39: #{tpu_custom_call.1} parent=1 // pred_check_branch
      %44 = sbr.rel (0) target = $region41
    $region40: #{tpu_custom_call.1} parent=1 // pred_region
      _
    $region41: #{tpu_custom_call.1} parent=1 // pred_fallthru
      _
    // Predicated region
    $region42: #{tpu_custom_call.1} parent=1 // pred_check
      _
    $region43: #{tpu_custom_call.1} parent=1 // pred_check_branch
      %46 = sbr.rel (0) target = $region45
    $region44: #{tpu_custom_call.1} parent=1 // pred_region
      _
    $region45: #{tpu_custom_call.1} parent=1 // pred_fallthru
      _
    // Predicated region
    $region46: #{tpu_custom_call.1} parent=1 // pred_check
      _
    $region47: #{tpu_custom_call.1} parent=1 // pred_check_branch
      %48 = sbr.rel (0) target = $region49
    $region48: #{tpu_custom_call.1} parent=1 // pred_region
      _
    $region49: #{tpu_custom_call.1} parent=1 // pred_fallthru
      _
    // Predicated region
    $region50: #{tpu_custom_call.1} parent=1 // pred_check
      _
    $region51: #{tpu_custom_call.1} parent=1 // pred_check_branch
      %50 = sbr.rel (0) target = $region53
    $region52: #{tpu_custom_call.1} parent=1 // pred_region
      _
    $region53: #{tpu_custom_call.1} parent=1 // pred_fallthru
      _
    // Predicated region
    $region54: #{tpu_custom_call.1} parent=1 // pred_check
      _
    $region55: #{tpu_custom_call.1} parent=1 // pred_check_branch
      %52 = sbr.rel (0) target = $region57
    $region56: #{tpu_custom_call.1} parent=1 // pred_region
      _
    $region57: #{tpu_custom_call.1} parent=1 // pred_fallthru
      _
    // Predicated region
    $region58: #{tpu_custom_call.1} parent=1 // pred_check
      _
    $region59: #{tpu_custom_call.1} parent=1 // pred_check_branch
      %54 = sbr.rel (0) target = $region61
    $region60: #{tpu_custom_call.1} parent=1 // pred_region
      _
    $region61: #{tpu_custom_call.1} parent=1 // pred_fallthru
      _
    // Predicated region
    $region62: #{tpu_custom_call.1} parent=1 // pred_check
      _
    $region63: #{tpu_custom_call.1} parent=1 // pred_check_branch
      %56 = sbr.rel (0) target = $region65
    $region64: #{tpu_custom_call.1} parent=1 // pred_region
      _
    $region65: #{tpu_custom_call.1} parent=1 // pred_fallthru
      _
    // Predicated region
    $region66: #{tpu_custom_call.1} parent=1 // pred_check
      _
    $region67: #{tpu_custom_call.1} parent=1 // pred_check_branch
      %58 = sbr.rel (0) target = $region69
    $region68: #{tpu_custom_call.1} parent=1 // pred_region
      _
    $region69: #{tpu_custom_call.1} parent=1 // pred_fallthru
      _
    // Predicated region
    $region70: #{tpu_custom_call.1} parent=1 // pred_check
      _
    $region71: #{tpu_custom_call.1} parent=1 // pred_check_branch
      %60 = sbr.rel (0) target = $region73
    $region72: #{tpu_custom_call.1} parent=1 // pred_region
      _
    $region73: #{tpu_custom_call.1} parent=1 // pred_fallthru
      _
    // Predicated region
    $region74: #{tpu_custom_call.1} parent=1 // pred_check
      _
    $region75: #{tpu_custom_call.1} parent=1 // pred_check_branch
      %62 = sbr.rel (0) target = $region77
    $region76: #{tpu_custom_call.1} parent=1 // pred_region
      _
    $region77: #{tpu_custom_call.1} parent=1 // pred_fallthru
      _
    %v63 = vld [vmem:[%s0] sm:$0xff]
    %v64 = vld [vmem:[%s0 + $0x8] sm:$0xff]
    %v65 = vld [vmem:[%s2] sm:$0x7]
    %v66 = vld [vmem:[%s3] sm:$0x1]
    %v68 = vlaneseq
    %v69 = vshrl.u32 %v68, 7
    %v70 = vsub.s32 0, %v69
    %v71 = vrot.slane %v66, %v70
    %vm73 = vcmask 23552
    %v75 = vsel %vm73, %v63, 0
    %v78 = vsel %vm73, %v64, 0
    %vm80 = vcmask 1042432
    %v82 = vsel %vm80, %v65, 0
    %84 = vmatprep.subr.mxu0 0.0
    %85 = vmatpush1.msra.mxu0 %v82
    %86 = vmatprep.subr.mxu0 0.0
    %87 = vmatpush1.msra.mxu0 0.0
    %88 = vmatprep.subr.mxu0 0.0
    %89 = vmatpush1.msra.mxu0 0.0
    %90 = vmatprep.subr.mxu0 0.0
    %91 = vmatpush1.msra.mxu0 0.0
    %92 = vmatprep.subr.mxu0 0.0
    %93 = vmatpush1.msra.mxu0 0.0
    %94 = vmatprep.subr.mxu0 0.0
    %95 = vmatpush1.msra.mxu0 0.0
    %96 = vmatprep.subr.mxu0 0.0
    %97 = vmatpush1.msra.mxu0 0.0
    %98 = vmatprep.subr.mxu0 0.0
    %99 = vmatpush1.msra.mxu0 0.0
    %100 = vmatprep.subr.mxu0 0.0
    %101 = vmatpush1.msra.mxu0 0.0
    %102 = vmatprep.subr.mxu0 0.0
    %103 = vmatpush1.msra.mxu0 0.0
    %104 = vmatprep.subr.mxu0 0.0
    %105 = vmatpush1.msra.mxu0 0.0
    %106 = vmatprep.subr.mxu0 0.0
    %107 = vmatpush1.msra.mxu0 0.0
    %108 = vmatprep.subr.mxu0 0.0
    %109 = vmatpush1.msra.mxu0 0.0
    %110 = vmatprep.subr.mxu0 0.0
    %111 = vmatpush1.msra.mxu0 0.0
    %112 = vmatprep.subr.mxu0 0.0
    %113 = vmatpush1.msra.mxu0 0.0
    %114 = vmatprep.subr.mxu0 0.0
    %115 = vmatpush1.msra.mxu0 0.0
    %116 = vmatprep.subr.mxu0 0.0
    %117 = vmatpush1.msra.mxu0 0.0
    %118 = vmatprep.subr.mxu0 0.0
    %119 = vmatpush1.msra.mxu0 0.0
    %120 = vmatprep.subr.mxu0 0.0
    %121 = vmatpush1.msra.mxu0 0.0
    %122 = vmatprep.subr.mxu0 0.0
    %123 = vmatpush1.msra.mxu0 0.0
    %124 = vmatprep.subr.mxu0 0.0
    %125 = vmatpush1.msra.mxu0 0.0
    %126 = vmatprep.subr.mxu0 0.0
    %127 = vmatpush1.msra.mxu0 0.0
    %128 = vmatprep.subr.mxu0 0.0
    %129 = vmatpush1.msra.mxu0 0.0
    %130 = vmatprep.subr.mxu0 0.0
    %131 = vmatpush1.msra.mxu0 0.0
    %132 = vmatprep.subr.mxu0 0.0
    %133 = vmatpush1.msra.mxu0 0.0
    %134 = vmatprep.subr.mxu0 0.0
    %135 = vmatpush1.msra.mxu0 0.0
    %136 = vmatprep.subr.mxu0 0.0
    %137 = vmatpush1.msra.mxu0 0.0
    %138 = vmatprep.subr.mxu0 0.0
    %139 = vmatpush1.msra.mxu0 0.0
    %140 = vmatprep.subr.mxu0 0.0
    %141 = vmatpush1.msra.mxu0 0.0
    %142 = vmatprep.subr.mxu0 0.0
    %143 = vmatpush1.msra.mxu0 0.0
    %144 = vmatprep.subr.mxu0 0.0
    %145 = vmatpush1.msra.mxu0 0.0
    %146 = vmatprep.subr.mxu0 0.0
    %147 = vmatpush1.msra.mxu0 0.0
    %148 = vmatprep.mubr.f32.mxu0 0.0
    %149 = vmatmul.mubr.f32.gmra.mrb[0].mxu0 %v75
    %v150 = vpop.f32.mrb[0].mxu0
    %v151 = vadd.f32 %v71, %v150
    %v152 = vpop.f32.mrb[0].mxu0
    %153 = vmatprep.mubr.f32.mxu0 0.0
    %154 = vmatmul.mubr.f32.gmra.mrb[0].mxu0 %v78
    %v155 = vpop.f32.mrb[0].mxu0
    %v156 = vadd.f32 %v71, %v155
    %v157 = vpop.f32.mrb[0].mxu0
    %158 = vdwg.mxu0
    %v159 = vld [vmem:[%s1] sm:$0xff]
    %v160 = vld [vmem:[%s1 + $0x8] sm:$0xff]
    %v161 = vld [vmem:[%s4] sm:$0xff]
    %v162 = vld [vmem:[%s4 + $0x8] sm:$0xff]
    %v163 = vld [vmem:[%s4 + $0x10] sm:$0xff]
    %v164 = vld [vmem:[%s4 + $0x18] sm:$0xff]
    %v165 = vld [vmem:[%s4 + $0x20] sm:$0xff]
    %v166 = vld [vmem:[%s4 + $0x28] sm:$0xff]
    %v167 = vld [vmem:[%s4 + $0x30] sm:$0xff]
    %v168 = vld [vmem:[%s4 + $0x38] sm:$0xff]
    %v169 = vld [vmem:[%s4 + $0x40] sm:$0xff]
    %v170 = vld [vmem:[%s4 + $0x48] sm:$0xff]
    %v171 = vld [vmem:[%s4 + $0x50] sm:$0xff]
    %v172 = vld [vmem:[%s4 + $0x58] sm:$0xff]
    %v173 = vld [vmem:[%s5] sm:$0xff]
    %v174 = vld [vmem:[%s5 + $0x8] sm:$0xff]
    %v175 = vld [vmem:[%s5 + $0x10] sm:$0xff]
    %v176 = vld [vmem:[%s5 + $0x18] sm:$0xff]
    %v177 = vld [vmem:[%s5 + $0x20] sm:$0xff]
    %v178 = vld [vmem:[%s5 + $0x28] sm:$0xff]
    %v179 = vld [vmem:[%s5 + $0x30] sm:$0xff]
    %v180 = vld [vmem:[%s5 + $0x38] sm:$0xff]
    %v181 = vld [vmem:[%s5 + $0x40] sm:$0xff]
    %v182 = vld [vmem:[%s5 + $0x48] sm:$0xff]
    %v183 = vld [vmem:[%s5 + $0x50] sm:$0xff]
    %v184 = vld [vmem:[%s5 + $0x58] sm:$0xff]
    %186 = vset.pattern.permute.xlu0 0
    %187 = vperm.xlu0 %186, %v173
    %v188 = vpop.permute.xlu0 %187
    %191 = vset.pattern.permute.xlu0 0
    %192 = vperm.xlu0 %191, %v174
    %v193 = vpop.permute.xlu0 %192
    %196 = vset.pattern.permute.xlu0 0
    %197 = vperm.xlu0 %196, %v175
    %v198 = vpop.permute.xlu0 %197
    %201 = vset.pattern.permute.xlu0 0
    %202 = vperm.xlu0 %201, %v176
    %v203 = vpop.permute.xlu0 %202
    %206 = vset.pattern.permute.xlu0 0
    %207 = vperm.xlu0 %206, %v177
    %v208 = vpop.permute.xlu0 %207
    %211 = vset.pattern.permute.xlu0 0
    %212 = vperm.xlu0 %211, %v178
    %v213 = vpop.permute.xlu0 %212
    %216 = vset.pattern.permute.xlu0 0
    %217 = vperm.xlu0 %216, %v179
    %v218 = vpop.permute.xlu0 %217
    %221 = vset.pattern.permute.xlu0 0
    %222 = vperm.xlu0 %221, %v180
    %v223 = vpop.permute.xlu0 %222
    %226 = vset.pattern.permute.xlu0 0
    %227 = vperm.xlu0 %226, %v181
    %v228 = vpop.permute.xlu0 %227
    %231 = vset.pattern.permute.xlu0 0
    %232 = vperm.xlu0 %231, %v182
    %v233 = vpop.permute.xlu0 %232
    %236 = vset.pattern.permute.xlu0 0
    %237 = vperm.xlu0 %236, %v183
    %v238 = vpop.permute.xlu0 %237
    %241 = vset.pattern.permute.xlu0 0
    %242 = vperm.xlu0 %241, %v184
    %v243 = vpop.permute.xlu0 %242
    %vm245 = vcmask 261120
    %v247 = vsel %vm245, %v161, 0
    %v250 = vsel %vm245, %v162, 0
    %v253 = vsel %vm245, %v163, 0
    %v256 = vsel %vm245, %v164, 0
    %v259 = vsel %vm245, %v165, 0
    %v262 = vsel %vm245, %v166, 0
    %v265 = vsel %vm245, %v167, 0
    %v268 = vsel %vm245, %v168, 0
    %v271 = vsel %vm245, %v169, 0
    %v274 = vsel %vm245, %v170, 0
    %v277 = vsel %vm245, %v171, 0
    %v280 = vsel %vm245, %v172, 0
    %v283 = vsel %vm245, %v151, 0
    %v286 = vsel %vm245, %v156, 0
    %288 = vmatprep.subr.mxu0 0.0
    %289 = vmatpush1.xpose.msra.mxu0 %v283
    %290 = vmatprep.subr.mxu0 0.0
    %291 = vmatpush1.xpose.msra.mxu0 %v286
    %292 = vmatprep.subr.mxu0 0.0
    %293 = vmatpush1.xpose.msra.mxu0 0.0
    %294 = vmatprep.subr.mxu0 0.0
    %295 = vmatpush1.xpose.msra.mxu0 0.0
    %296 = vmatprep.subr.mxu0 0.0
    %297 = vmatpush1.xpose.msra.mxu0 0.0
    %298 = vmatprep.subr.mxu0 0.0
    %299 = vmatpush1.xpose.msra.mxu0 0.0
    %300 = vmatprep.subr.mxu0 0.0
    %301 = vmatpush1.xpose.msra.mxu0 0.0
    %302 = vmatprep.subr.mxu0 0.0
    %303 = vmatpush1.xpose.msra.mxu0 0.0
    %304 = vmatprep.subr.mxu0 0.0
    %305 = vmatpush1.xpose.msra.mxu0 0.0
    %306 = vmatprep.subr.mxu0 0.0
    %307 = vmatpush1.xpose.msra.mxu0 0.0
    %308 = vmatprep.subr.mxu0 0.0
    %309 = vmatpush1.xpose.msra.mxu0 0.0
    %310 = vmatprep.subr.mxu0 0.0
    %311 = vmatpush1.xpose.msra.mxu0 0.0
    %312 = vmatprep.subr.mxu0 0.0
    %313 = vmatpush1.xpose.msra.mxu0 0.0
    %314 = vmatprep.subr.mxu0 0.0
    %315 = vmatpush1.xpose.msra.mxu0 0.0
    %316 = vmatprep.subr.mxu0 0.0
    %317 = vmatpush1.xpose.msra.mxu0 0.0
    %318 = vmatprep.subr.mxu0 0.0
    %319 = vmatpush1.xpose.msra.mxu0 0.0
    %320 = vmatprep.subr.mxu0 0.0
    %321 = vmatpush1.xpose.msra.mxu0 0.0
    %322 = vmatprep.subr.mxu0 0.0
    %323 = vmatpush1.xpose.msra.mxu0 0.0
    %324 = vmatprep.subr.mxu0 0.0
    %325 = vmatpush1.xpose.msra.mxu0 0.0
    %326 = vmatprep.subr.mxu0 0.0
    %327 = vmatpush1.xpose.msra.mxu0 0.0
    %328 = vmatprep.subr.mxu0 0.0
    %329 = vmatpush1.xpose.msra.mxu0 0.0
    %330 = vmatprep.subr.mxu0 0.0
    %331 = vmatpush1.xpose.msra.mxu0 0.0
    %332 = vmatprep.subr.mxu0 0.0
    %333 = vmatpush1.xpose.msra.mxu0 0.0
    %334 = vmatprep.subr.mxu0 0.0
    %335 = vmatpush1.xpose.msra.mxu0 0.0
    %336 = vmatprep.subr.mxu0 0.0
    %337 = vmatpush1.xpose.msra.mxu0 0.0
    %338 = vmatprep.subr.mxu0 0.0
    %339 = vmatpush1.xpose.msra.mxu0 0.0
    %340 = vmatprep.subr.mxu0 0.0
    %341 = vmatpush1.xpose.msra.mxu0 0.0
    %342 = vmatprep.subr.mxu0 0.0
    %343 = vmatpush1.xpose.msra.mxu0 0.0
    %344 = vmatprep.subr.mxu0 0.0
    %345 = vmatpush1.xpose.msra.mxu0 0.0
    %346 = vmatprep.subr.mxu0 0.0
    %347 = vmatpush1.xpose.msra.mxu0 0.0
    %348 = vmatprep.subr.mxu0 0.0
    %349 = vmatpush1.xpose.msra.mxu0 0.0
    %350 = vmatprep.subr.mxu0 0.0
    %351 = vmatpush1.xpose.msra.mxu0 0.0
    %352 = vmatprep.mubr.f32.mxu0 0.0
    %353 = vmatmul.mubr.f32.gmra.mrb[0].mxu0 %v247
    %v354 = vpop.f32.mrb[0].mxu0
    %v355 = vadd.f32 %v188, %v354
    %v356 = vpop.f32.mrb[0].mxu0
    %357 = vmatprep.mubr.f32.mxu0 0.0
    %358 = vmatmul.mubr.f32.gmra.mrb[0].mxu0 %v250
    %v359 = vpop.f32.mrb[0].mxu0
    %v360 = vadd.f32 %v193, %v359
    %v361 = vpop.f32.mrb[0].mxu0
    %362 = vmatprep.mubr.f32.mxu0 0.0
    %363 = vmatmul.mubr.f32.gmra.mrb[0].mxu0 %v253
    %v364 = vpop.f32.mrb[0].mxu0
    %v365 = vadd.f32 %v198, %v364
    %v366 = vpop.f32.mrb[0].mxu0
    %367 = vmatprep.mubr.f32.mxu0 0.0
    %368 = vmatmul.mubr.f32.gmra.mrb[0].mxu0 %v256
    %v369 = vpop.f32.mrb[0].mxu0
    %v370 = vadd.f32 %v203, %v369
    %v371 = vpop.f32.mrb[0].mxu0
    %372 = vmatprep.mubr.f32.mxu0 0.0
    %373 = vmatmul.mubr.f32.gmra.mrb[0].mxu0 %v259
    %v374 = vpop.f32.mrb[0].mxu0
    %v375 = vadd.f32 %v208, %v374
    %v376 = vpop.f32.mrb[0].mxu0
    %377 = vmatprep.mubr.f32.mxu0 0.0
    %378 = vmatmul.mubr.f32.gmra.mrb[0].mxu0 %v262
    %v379 = vpop.f32.mrb[0].mxu0
    %v380 = vadd.f32 %v213, %v379
    %v381 = vpop.f32.mrb[0].mxu0
    %382 = vmatprep.mubr.f32.mxu0 0.0
    %383 = vmatmul.mubr.f32.gmra.mrb[0].mxu0 %v265
    %v384 = vpop.f32.mrb[0].mxu0
    %v385 = vadd.f32 %v218, %v384
    %v386 = vpop.f32.mrb[0].mxu0
    %387 = vmatprep.mubr.f32.mxu0 0.0
    %388 = vmatmul.mubr.f32.gmra.mrb[0].mxu0 %v268
    %v389 = vpop.f32.mrb[0].mxu0
    %v390 = vadd.f32 %v223, %v389
    %v391 = vpop.f32.mrb[0].mxu0
    %392 = vmatprep.mubr.f32.mxu0 0.0
    %393 = vmatmul.mubr.f32.gmra.mrb[0].mxu0 %v271
    %v394 = vpop.f32.mrb[0].mxu0
    %v395 = vadd.f32 %v228, %v394
    %v396 = vpop.f32.mrb[0].mxu0
    %397 = vmatprep.mubr.f32.mxu0 0.0
    %398 = vmatmul.mubr.f32.gmra.mrb[0].mxu0 %v274
    %v399 = vpop.f32.mrb[0].mxu0
    %v400 = vadd.f32 %v233, %v399
    %v401 = vpop.f32.mrb[0].mxu0
    %402 = vmatprep.mubr.f32.mxu0 0.0
    %403 = vmatmul.mubr.f32.gmra.mrb[0].mxu0 %v277
    %v404 = vpop.f32.mrb[0].mxu0
    %v405 = vadd.f32 %v238, %v404
    %v406 = vpop.f32.mrb[0].mxu0
    %407 = vmatprep.mubr.f32.mxu0 0.0
    %408 = vmatmul.mubr.f32.gmra.mrb[0].mxu0 %v280
    %v409 = vpop.f32.mrb[0].mxu0
    %v410 = vadd.f32 %v243, %v409
    %v411 = vpop.f32.mrb[0].mxu0
    %412 = vdwg.mxu0
    %413 = vxpose.xlu0.b32.start [1/16] %v355, 128
    %414 = vxpose.xlu0.b32.cont [2/16] 0.0, 128
    %415 = vxpose.xlu0.b32.cont [3/16] 0.0, 128
    %416 = vxpose.xlu0.b32.cont [4/16] 0.0, 128
    %417 = vxpose.xlu0.b32.cont [5/16] 0.0, 128
    %418 = vxpose.xlu0.b32.cont [6/16] 0.0, 128
    %419 = vxpose.xlu0.b32.cont [7/16] 0.0, 128
    %420 = vxpose.xlu0.b32.cont [8/16] 0.0, 128
    %421 = vxpose.xlu0.b32.cont [9/16] 0.0, 128
    %422 = vxpose.xlu0.b32.cont [10/16] 0.0, 128
    %423 = vxpose.xlu0.b32.cont [11/16] 0.0, 128
    %424 = vxpose.xlu0.b32.cont [12/16] 0.0, 128
    %425 = vxpose.xlu0.b32.cont [13/16] 0.0, 128
    %426 = vxpose.xlu0.b32.cont [14/16] 0.0, 128
    %427 = vxpose.xlu0.b32.cont [15/16] 0.0, 128
    %428 = vxpose.xlu0.b32.end [16/16] 0.0, 128
    %v429 = vpop.trf.xlu0
    %v430 = vpop.trf.xlu0
    %v431 = vpop.trf.xlu0
    %v432 = vpop.trf.xlu0
    %v433 = vpop.trf.xlu0
    %v434 = vpop.trf.xlu0
    %v435 = vpop.trf.xlu0
    %v436 = vpop.trf.xlu0
    %v437 = vpop.trf.xlu0
    %v438 = vpop.trf.xlu0
    %v439 = vpop.trf.xlu0
    %v440 = vpop.trf.xlu0
    %v441 = vpop.trf.xlu0
    %v442 = vpop.trf.xlu0
    %v443 = vpop.trf.xlu0
    %v444 = vpop.trf.xlu0
    %445 = vxpose.xlu0.b32.start [1/16] %v360, 128
    %446 = vxpose.xlu0.b32.cont [2/16] 0.0, 128
    %447 = vxpose.xlu0.b32.cont [3/16] 0.0, 128
    %448 = vxpose.xlu0.b32.cont [4/16] 0.0, 128
    %449 = vxpose.xlu0.b32.cont [5/16] 0.0, 128
    %450 = vxpose.xlu0.b32.cont [6/16] 0.0, 128
    %451 = vxpose.xlu0.b32.cont [7/16] 0.0, 128
    %452 = vxpose.xlu0.b32.cont [8/16] 0.0, 128
    %453 = vxpose.xlu0.b32.cont [9/16] 0.0, 128
    %454 = vxpose.xlu0.b32.cont [10/16] 0.0, 128
    %455 = vxpose.xlu0.b32.cont [11/16] 0.0, 128
    %456 = vxpose.xlu0.b32.cont [12/16] 0.0, 128
    %457 = vxpose.xlu0.b32.cont [13/16] 0.0, 128
    %458 = vxpose.xlu0.b32.cont [14/16] 0.0, 128
    %459 = vxpose.xlu0.b32.cont [15/16] 0.0, 128
    %460 = vxpose.xlu0.b32.end [16/16] 0.0, 128
    %v461 = vpop.trf.xlu0
    %v462 = vpop.trf.xlu0
    %v463 = vpop.trf.xlu0
    %v464 = vpop.trf.xlu0
    %v465 = vpop.trf.xlu0
    %v466 = vpop.trf.xlu0
    %v467 = vpop.trf.xlu0
    %v468 = vpop.trf.xlu0
    %v469 = vpop.trf.xlu0
    %v470 = vpop.trf.xlu0
    %v471 = vpop.trf.xlu0
    %v472 = vpop.trf.xlu0
    %v473 = vpop.trf.xlu0
    %v474 = vpop.trf.xlu0
    %v475 = vpop.trf.xlu0
    %v476 = vpop.trf.xlu0
    %477 = vxpose.xlu0.b32.start [1/16] %v365, 128
    %478 = vxpose.xlu0.b32.cont [2/16] 0.0, 128
    %479 = vxpose.xlu0.b32.cont [3/16] 0.0, 128
    %480 = vxpose.xlu0.b32.cont [4/16] 0.0, 128
    %481 = vxpose.xlu0.b32.cont [5/16] 0.0, 128
    %482 = vxpose.xlu0.b32.cont [6/16] 0.0, 128
    %483 = vxpose.xlu0.b32.cont [7/16] 0.0, 128
    %484 = vxpose.xlu0.b32.cont [8/16] 0.0, 128
    %485 = vxpose.xlu0.b32.cont [9/16] 0.0, 128
    %486 = vxpose.xlu0.b32.cont [10/16] 0.0, 128
    %487 = vxpose.xlu0.b32.cont [11/16] 0.0, 128
    %488 = vxpose.xlu0.b32.cont [12/16] 0.0, 128
    %489 = vxpose.xlu0.b32.cont [13/16] 0.0, 128
    %490 = vxpose.xlu0.b32.cont [14/16] 0.0, 128
    %491 = vxpose.xlu0.b32.cont [15/16] 0.0, 128
    %492 = vxpose.xlu0.b32.end [16/16] 0.0, 128
    %v493 = vpop.trf.xlu0
    %v494 = vpop.trf.xlu0
    %v495 = vpop.trf.xlu0
    %v496 = vpop.trf.xlu0
    %v497 = vpop.trf.xlu0
    %v498 = vpop.trf.xlu0
    %v499 = vpop.trf.xlu0
    %v500 = vpop.trf.xlu0
    %v501 = vpop.trf.xlu0
    %v502 = vpop.trf.xlu0
    %v503 = vpop.trf.xlu0
    %v504 = vpop.trf.xlu0
    %v505 = vpop.trf.xlu0
    %v506 = vpop.trf.xlu0
    %v507 = vpop.trf.xlu0
    %v508 = vpop.trf.xlu0
    %509 = vxpose.xlu0.b32.start [1/16] %v370, 128
    %510 = vxpose.xlu0.b32.cont [2/16] 0.0, 128
    %511 = vxpose.xlu0.b32.cont [3/16] 0.0, 128
    %512 = vxpose.xlu0.b32.cont [4/16] 0.0, 128
    %513 = vxpose.xlu0.b32.cont [5/16] 0.0, 128
    %514 = vxpose.xlu0.b32.cont [6/16] 0.0, 128
    %515 = vxpose.xlu0.b32.cont [7/16] 0.0, 128
    %516 = vxpose.xlu0.b32.cont [8/16] 0.0, 128
    %517 = vxpose.xlu0.b32.cont [9/16] 0.0, 128
    %518 = vxpose.xlu0.b32.cont [10/16] 0.0, 128
    %519 = vxpose.xlu0.b32.cont [11/16] 0.0, 128
    %520 = vxpose.xlu0.b32.cont [12/16] 0.0, 128
    %521 = vxpose.xlu0.b32.cont [13/16] 0.0, 128
    %522 = vxpose.xlu0.b32.cont [14/16] 0.0, 128
    %523 = vxpose.xlu0.b32.cont [15/16] 0.0, 128
    %524 = vxpose.xlu0.b32.end [16/16] 0.0, 128
    %v525 = vpop.trf.xlu0
    %v526 = vpop.trf.xlu0
    %v527 = vpop.trf.xlu0
    %v528 = vpop.trf.xlu0
    %v529 = vpop.trf.xlu0
    %v530 = vpop.trf.xlu0
    %v531 = vpop.trf.xlu0
    %v532 = vpop.trf.xlu0
    %v533 = vpop.trf.xlu0
    %v534 = vpop.trf.xlu0
    %v535 = vpop.trf.xlu0
    %v536 = vpop.trf.xlu0
    %v537 = vpop.trf.xlu0
    %v538 = vpop.trf.xlu0
    %v539 = vpop.trf.xlu0
    %v540 = vpop.trf.xlu0
    %vm541 = vcmask 64512
    %v543 = vsel %vm541, %v429, 0
    %v546 = vsel %vm541, %v430, 0
    %548 = vmatprep.subr.mxu0 0.0
    %549 = vmatpush1.msra.mxu0 %v375
    %550 = vmatprep.subr.mxu0 0.0
    %551 = vmatpush1.msra.mxu0 0.0
    %552 = vmatprep.subr.mxu0 0.0
    %553 = vmatpush1.msra.mxu0 0.0
    %554 = vmatprep.subr.mxu0 0.0
    %555 = vmatpush1.msra.mxu0 0.0
    %556 = vmatprep.subr.mxu0 0.0
    %557 = vmatpush1.msra.mxu0 0.0
    %558 = vmatprep.subr.mxu0 0.0
    %559 = vmatpush1.msra.mxu0 0.0
    %560 = vmatprep.subr.mxu0 0.0
    %561 = vmatpush1.msra.mxu0 0.0
    %562 = vmatprep.subr.mxu0 0.0
    %563 = vmatpush1.msra.mxu0 0.0
    %564 = vmatprep.subr.mxu0 0.0
    %565 = vmatpush1.msra.mxu0 0.0
    %566 = vmatprep.subr.mxu0 0.0
    %567 = vmatpush1.msra.mxu0 0.0
    %568 = vmatprep.subr.mxu0 0.0
    %569 = vmatpush1.msra.mxu0 0.0
    %570 = vmatprep.subr.mxu0 0.0
    %571 = vmatpush1.msra.mxu0 0.0
    %572 = vmatprep.subr.mxu0 0.0
    %573 = vmatpush1.msra.mxu0 0.0
    %574 = vmatprep.subr.mxu0 0.0
    %575 = vmatpush1.msra.mxu0 0.0
    %576 = vmatprep.subr.mxu0 0.0
    %577 = vmatpush1.msra.mxu0 0.0
    %578 = vmatprep.subr.mxu0 0.0
    %579 = vmatpush1.msra.mxu0 0.0
    %580 = vmatprep.subr.mxu0 0.0
    %581 = vmatpush1.msra.mxu0 0.0
    %582 = vmatprep.subr.mxu0 0.0
    %583 = vmatpush1.msra.mxu0 0.0
    %584 = vmatprep.subr.mxu0 0.0
    %585 = vmatpush1.msra.mxu0 0.0
    %586 = vmatprep.subr.mxu0 0.0
    %587 = vmatpush1.msra.mxu0 0.0
    %588 = vmatprep.subr.mxu0 0.0
    %589 = vmatpush1.msra.mxu0 0.0
    %590 = vmatprep.subr.mxu0 0.0
    %591 = vmatpush1.msra.mxu0 0.0
    %592 = vmatprep.subr.mxu0 0.0
    %593 = vmatpush1.msra.mxu0 0.0
    %594 = vmatprep.subr.mxu0 0.0
    %595 = vmatpush1.msra.mxu0 0.0
    %596 = vmatprep.subr.mxu0 0.0
    %597 = vmatpush1.msra.mxu0 0.0
    %598 = vmatprep.subr.mxu0 0.0
    %599 = vmatpush1.msra.mxu0 0.0
    %600 = vmatprep.subr.mxu0 0.0
    %601 = vmatpush1.msra.mxu0 0.0
    %602 = vmatprep.subr.mxu0 0.0
    %603 = vmatpush1.msra.mxu0 0.0
    %604 = vmatprep.subr.mxu0 0.0
    %605 = vmatpush1.msra.mxu0 0.0
    %606 = vmatprep.subr.mxu0 0.0
    %607 = vmatpush1.msra.mxu0 0.0
    %608 = vmatprep.subr.mxu0 0.0
    %609 = vmatpush1.msra.mxu0 0.0
    %610 = vmatprep.subr.mxu0 0.0
    %611 = vmatpush1.msra.mxu0 0.0
    %612 = vmatprep.mubr.f32.mxu0 0.0
    %613 = vmatmul.mubr.f32.gmra.mrb[0].mxu0 %v543
    %v614 = vpop.f32.mrb[0].mxu0
    %v615 = vadd.f32 %v159, %v614
    %v616 = vpop.f32.mrb[0].mxu0
    %617 = vmatprep.mubr.f32.mxu0 0.0
    %618 = vmatmul.mubr.f32.gmra.mrb[0].mxu0 %v546
    %v619 = vpop.f32.mrb[0].mxu0
    %v620 = vadd.f32 %v160, %v619
    %v621 = vpop.f32.mrb[0].mxu0
    %622 = vdwg.mxu0
    %v624 = vsel %vm541, %v461, 0
    %v627 = vsel %vm541, %v462, 0
    %629 = vmatprep.subr.mxu0 0.0
    %630 = vmatpush1.msra.mxu0 %v380
    %631 = vmatprep.subr.mxu0 0.0
    %632 = vmatpush1.msra.mxu0 0.0
    %633 = vmatprep.subr.mxu0 0.0
    %634 = vmatpush1.msra.mxu0 0.0
    %635 = vmatprep.subr.mxu0 0.0
    %636 = vmatpush1.msra.mxu0 0.0
    %637 = vmatprep.subr.mxu0 0.0
    %638 = vmatpush1.msra.mxu0 0.0
    %639 = vmatprep.subr.mxu0 0.0
    %640 = vmatpush1.msra.mxu0 0.0
    %641 = vmatprep.subr.mxu0 0.0
    %642 = vmatpush1.msra.mxu0 0.0
    %643 = vmatprep.subr.mxu0 0.0
    %644 = vmatpush1.msra.mxu0 0.0
    %645 = vmatprep.subr.mxu0 0.0
    %646 = vmatpush1.msra.mxu0 0.0
    %647 = vmatprep.subr.mxu0 0.0
    %648 = vmatpush1.msra.mxu0 0.0
    %649 = vmatprep.subr.mxu0 0.0
    %650 = vmatpush1.msra.mxu0 0.0
    %651 = vmatprep.subr.mxu0 0.0
    %652 = vmatpush1.msra.mxu0 0.0
    %653 = vmatprep.subr.mxu0 0.0
    %654 = vmatpush1.msra.mxu0 0.0
    %655 = vmatprep.subr.mxu0 0.0
    %656 = vmatpush1.msra.mxu0 0.0
    %657 = vmatprep.subr.mxu0 0.0
    %658 = vmatpush1.msra.mxu0 0.0
    %659 = vmatprep.subr.mxu0 0.0
    %660 = vmatpush1.msra.mxu0 0.0
    %661 = vmatprep.subr.mxu0 0.0
    %662 = vmatpush1.msra.mxu0 0.0
    %663 = vmatprep.subr.mxu0 0.0
    %664 = vmatpush1.msra.mxu0 0.0
    %665 = vmatprep.subr.mxu0 0.0
    %666 = vmatpush1.msra.mxu0 0.0
    %667 = vmatprep.subr.mxu0 0.0
    %668 = vmatpush1.msra.mxu0 0.0
    %669 = vmatprep.subr.mxu0 0.0
    %670 = vmatpush1.msra.mxu0 0.0
    %671 = vmatprep.subr.mxu0 0.0
    %672 = vmatpush1.msra.mxu0 0.0
    %673 = vmatprep.subr.mxu0 0.0
    %674 = vmatpush1.msra.mxu0 0.0
    %675 = vmatprep.subr.mxu0 0.0
    %676 = vmatpush1.msra.mxu0 0.0
    %677 = vmatprep.subr.mxu0 0.0
    %678 = vmatpush1.msra.mxu0 0.0
    %679 = vmatprep.subr.mxu0 0.0
    %680 = vmatpush1.msra.mxu0 0.0
    %681 = vmatprep.subr.mxu0 0.0
    %682 = vmatpush1.msra.mxu0 0.0
    %683 = vmatprep.subr.mxu0 0.0
    %684 = vmatpush1.msra.mxu0 0.0
    %685 = vmatprep.subr.mxu0 0.0
    %686 = vmatpush1.msra.mxu0 0.0
    %687 = vmatprep.subr.mxu0 0.0
    %688 = vmatpush1.msra.mxu0 0.0
    %689 = vmatprep.subr.mxu0 0.0
    %690 = vmatpush1.msra.mxu0 0.0
    %691 = vmatprep.subr.mxu0 0.0
    %692 = vmatpush1.msra.mxu0 0.0
    %693 = vmatprep.mubr.f32.mxu0 0.0
    %694 = vmatmul.mubr.f32.gmra.mrb[0].mxu0 %v624
    %v695 = vpop.f32.mrb[0].mxu0
    %v696 = vadd.f32 %v159, %v695
    %v697 = vpop.f32.mrb[0].mxu0
    %698 = vmatprep.mubr.f32.mxu0 0.0
    %699 = vmatmul.mubr.f32.gmra.mrb[0].mxu0 %v627
    %v700 = vpop.f32.mrb[0].mxu0
    %v701 = vadd.f32 %v160, %v700
    %v702 = vpop.f32.mrb[0].mxu0
    %703 = vdwg.mxu0
    %v705 = vsel %vm541, %v493, 0
    %v708 = vsel %vm541, %v494, 0
    %710 = vmatprep.subr.mxu0 0.0
    %711 = vmatpush1.msra.mxu0 %v385
    %712 = vmatprep.subr.mxu0 0.0
    %713 = vmatpush1.msra.mxu0 0.0
    %714 = vmatprep.subr.mxu0 0.0
    %715 = vmatpush1.msra.mxu0 0.0
    %716 = vmatprep.subr.mxu0 0.0
    %717 = vmatpush1.msra.mxu0 0.0
    %718 = vmatprep.subr.mxu0 0.0
    %719 = vmatpush1.msra.mxu0 0.0
    %720 = vmatprep.subr.mxu0 0.0
    %721 = vmatpush1.msra.mxu0 0.0
    %722 = vmatprep.subr.mxu0 0.0
    %723 = vmatpush1.msra.mxu0 0.0
    %724 = vmatprep.subr.mxu0 0.0
    %725 = vmatpush1.msra.mxu0 0.0
    %726 = vmatprep.subr.mxu0 0.0
    %727 = vmatpush1.msra.mxu0 0.0
    %728 = vmatprep.subr.mxu0 0.0
    %729 = vmatpush1.msra.mxu0 0.0
    %730 = vmatprep.subr.mxu0 0.0
    %731 = vmatpush1.msra.mxu0 0.0
    %732 = vmatprep.subr.mxu0 0.0
    %733 = vmatpush1.msra.mxu0 0.0
    %734 = vmatprep.subr.mxu0 0.0
    %735 = vmatpush1.msra.mxu0 0.0
    %736 = vmatprep.subr.mxu0 0.0
    %737 = vmatpush1.msra.mxu0 0.0
    %738 = vmatprep.subr.mxu0 0.0
    %739 = vmatpush1.msra.mxu0 0.0
    %740 = vmatprep.subr.mxu0 0.0
    %741 = vmatpush1.msra.mxu0 0.0
    %742 = vmatprep.subr.mxu0 0.0
    %743 = vmatpush1.msra.mxu0 0.0
    %744 = vmatprep.subr.mxu0 0.0
    %745 = vmatpush1.msra.mxu0 0.0
    %746 = vmatprep.subr.mxu0 0.0
    %747 = vmatpush1.msra.mxu0 0.0
    %748 = vmatprep.subr.mxu0 0.0
    %749 = vmatpush1.msra.mxu0 0.0
    %750 = vmatprep.subr.mxu0 0.0
    %751 = vmatpush1.msra.mxu0 0.0
    %752 = vmatprep.subr.mxu0 0.0
    %753 = vmatpush1.msra.mxu0 0.0
    %754 = vmatprep.subr.mxu0 0.0
    %755 = vmatpush1.msra.mxu0 0.0
    %756 = vmatprep.subr.mxu0 0.0
    %757 = vmatpush1.msra.mxu0 0.0
    %758 = vmatprep.subr.mxu0 0.0
    %759 = vmatpush1.msra.mxu0 0.0
    %760 = vmatprep.subr.mxu0 0.0
    %761 = vmatpush1.msra.mxu0 0.0
    %762 = vmatprep.subr.mxu0 0.0
    %763 = vmatpush1.msra.mxu0 0.0
    %764 = vmatprep.subr.mxu0 0.0
    %765 = vmatpush1.msra.mxu0 0.0
    %766 = vmatprep.subr.mxu0 0.0
    %767 = vmatpush1.msra.mxu0 0.0
    %768 = vmatprep.subr.mxu0 0.0
    %769 = vmatpush1.msra.mxu0 0.0
    %770 = vmatprep.subr.mxu0 0.0
    %771 = vmatpush1.msra.mxu0 0.0
    %772 = vmatprep.subr.mxu0 0.0
    %773 = vmatpush1.msra.mxu0 0.0
    %774 = vmatprep.mubr.f32.mxu0 0.0
    %775 = vmatmul.mubr.f32.gmra.mrb[0].mxu0 %v705
    %v776 = vpop.f32.mrb[0].mxu0
    %v777 = vadd.f32 %v159, %v776
    %v778 = vpop.f32.mrb[0].mxu0
    %779 = vmatprep.mubr.f32.mxu0 0.0
    %780 = vmatmul.mubr.f32.gmra.mrb[0].mxu0 %v708
    %v781 = vpop.f32.mrb[0].mxu0
    %v782 = vadd.f32 %v160, %v781
    %v783 = vpop.f32.mrb[0].mxu0
    %784 = vdwg.mxu0
    %v786 = vsel %vm541, %v525, 0
    %v789 = vsel %vm541, %v526, 0
    %791 = vmatprep.subr.mxu0 0.0
    %792 = vmatpush1.msra.mxu0 %v390
    %793 = vmatprep.subr.mxu0 0.0
    %794 = vmatpush1.msra.mxu0 0.0
    %795 = vmatprep.subr.mxu0 0.0
    %796 = vmatpush1.msra.mxu0 0.0
    %797 = vmatprep.subr.mxu0 0.0
    %798 = vmatpush1.msra.mxu0 0.0
    %799 = vmatprep.subr.mxu0 0.0
    %800 = vmatpush1.msra.mxu0 0.0
    %801 = vmatprep.subr.mxu0 0.0
    %802 = vmatpush1.msra.mxu0 0.0
    %803 = vmatprep.subr.mxu0 0.0
    %804 = vmatpush1.msra.mxu0 0.0
    %805 = vmatprep.subr.mxu0 0.0
    %806 = vmatpush1.msra.mxu0 0.0
    %807 = vmatprep.subr.mxu0 0.0
    %808 = vmatpush1.msra.mxu0 0.0
    %809 = vmatprep.subr.mxu0 0.0
    %810 = vmatpush1.msra.mxu0 0.0
    %811 = vmatprep.subr.mxu0 0.0
    %812 = vmatpush1.msra.mxu0 0.0
    %813 = vmatprep.subr.mxu0 0.0
    %814 = vmatpush1.msra.mxu0 0.0
    %815 = vmatprep.subr.mxu0 0.0
    %816 = vmatpush1.msra.mxu0 0.0
    %817 = vmatprep.subr.mxu0 0.0
    %818 = vmatpush1.msra.mxu0 0.0
    %819 = vmatprep.subr.mxu0 0.0
    %820 = vmatpush1.msra.mxu0 0.0
    %821 = vmatprep.subr.mxu0 0.0
    %822 = vmatpush1.msra.mxu0 0.0
    %823 = vmatprep.subr.mxu0 0.0
    %824 = vmatpush1.msra.mxu0 0.0
    %825 = vmatprep.subr.mxu0 0.0
    %826 = vmatpush1.msra.mxu0 0.0
    %827 = vmatprep.subr.mxu0 0.0
    %828 = vmatpush1.msra.mxu0 0.0
    %829 = vmatprep.subr.mxu0 0.0
    %830 = vmatpush1.msra.mxu0 0.0
    %831 = vmatprep.subr.mxu0 0.0
    %832 = vmatpush1.msra.mxu0 0.0
    %833 = vmatprep.subr.mxu0 0.0
    %834 = vmatpush1.msra.mxu0 0.0
    %835 = vmatprep.subr.mxu0 0.0
    %836 = vmatpush1.msra.mxu0 0.0
    %837 = vmatprep.subr.mxu0 0.0
    %838 = vmatpush1.msra.mxu0 0.0
    %839 = vmatprep.subr.mxu0 0.0
    %840 = vmatpush1.msra.mxu0 0.0
    %841 = vmatprep.subr.mxu0 0.0
    %842 = vmatpush1.msra.mxu0 0.0
    %843 = vmatprep.subr.mxu0 0.0
    %844 = vmatpush1.msra.mxu0 0.0
    %845 = vmatprep.subr.mxu0 0.0
    %846 = vmatpush1.msra.mxu0 0.0
    %847 = vmatprep.subr.mxu0 0.0
    %848 = vmatpush1.msra.mxu0 0.0
    %849 = vmatprep.subr.mxu0 0.0
    %850 = vmatpush1.msra.mxu0 0.0
    %851 = vmatprep.subr.mxu0 0.0
    %852 = vmatpush1.msra.mxu0 0.0
    %853 = vmatprep.subr.mxu0 0.0
    %854 = vmatpush1.msra.mxu0 0.0
    %855 = vmatprep.mubr.f32.mxu0 0.0
    %856 = vmatmul.mubr.f32.gmra.mrb[0].mxu0 %v786
    %v857 = vpop.f32.mrb[0].mxu0
    %v858 = vadd.f32 %v159, %v857
    %v859 = vpop.f32.mrb[0].mxu0
    %860 = vmatprep.mubr.f32.mxu0 0.0
    %861 = vmatmul.mubr.f32.gmra.mrb[0].mxu0 %v789
    %v862 = vpop.f32.mrb[0].mxu0
    %v863 = vadd.f32 %v160, %v862
    %v864 = vpop.f32.mrb[0].mxu0
    %865 = vdwg.mxu0
    %vm866 = vcmask 130048
    %v867 = vsel %vm866, %v615, -inf
    %868 = vmax.xlane.f32.xlu0 %v867
    %v869 = vpop.xlane.xlu0 %868
    %v870 = vsel %vm866, %v620, -inf
    %871 = vmax.xlane.f32.xlu0 %v870
    %v872 = vpop.xlane.xlu0 %871
    %v873 = vsel %vm866, %v696, -inf
    %874 = vmax.xlane.f32.xlu0 %v873
    %v875 = vpop.xlane.xlu0 %874
    %v876 = vsel %vm866, %v701, -inf
    %877 = vmax.xlane.f32.xlu0 %v876
    %v878 = vpop.xlane.xlu0 %877
    %v879 = vsel %vm866, %v777, -inf
    %880 = vmax.xlane.f32.xlu0 %v879
    %v881 = vpop.xlane.xlu0 %880
    %v882 = vsel %vm866, %v782, -inf
    %883 = vmax.xlane.f32.xlu0 %v882
    %v884 = vpop.xlane.xlu0 %883
    %v885 = vsel %vm866, %v858, -inf
    %886 = vmax.xlane.f32.xlu0 %v885
    %v887 = vpop.xlane.xlu0 %886
    %v888 = vsel %vm866, %v863, -inf
    %889 = vmax.xlane.f32.xlu0 %v888
    %v890 = vpop.xlane.xlu0 %889
    %v891 = vsub.f32 %v615, %v869
    %v892 = vsub.f32 %v620, %v872
    %v893 = vsub.f32 %v696, %v875
    %v894 = vsub.f32 %v701, %v878
    %v895 = vsub.f32 %v777, %v881
    %v896 = vsub.f32 %v782, %v884
    %v897 = vsub.f32 %v858, %v887
    %v898 = vsub.f32 %v863, %v890
    %v899 = vmul.f32 %v891, 1.442695
    %v900 = vpow.pop %v899
    %v901 = vmul.f32 %v892, 1.442695
    %v902 = vpow.pop %v901
    %v903 = vmul.f32 %v893, 1.442695
    %v904 = vpow.pop %v903
    %v905 = vmul.f32 %v894, 1.442695
    %v906 = vpow.pop %v905
    %v907 = vmul.f32 %v895, 1.442695
    %v908 = vpow.pop %v907
    %v909 = vmul.f32 %v896, 1.442695
    %v910 = vpow.pop %v909
    %v911 = vmul.f32 %v897, 1.442695
    %v912 = vpow.pop %v911
    %v913 = vmul.f32 %v898, 1.442695
    %v914 = vpow.pop %v913
    %v915 = vsel %vm866, %v900, 0.0
    %916 = vadd.xlane.f32.xlu0 %v915
    %v917 = vpop.xlane.xlu0 %916
    %v918 = vsel %vm866, %v902, 0.0
    %919 = vadd.xlane.f32.xlu0 %v918
    %v920 = vpop.xlane.xlu0 %919
    %v921 = vsel %vm866, %v904, 0.0
    %922 = vadd.xlane.f32.xlu0 %v921
    %v923 = vpop.xlane.xlu0 %922
    %v924 = vsel %vm866, %v906, 0.0
    %925 = vadd.xlane.f32.xlu0 %v924
    %v926 = vpop.xlane.xlu0 %925
    %v927 = vsel %vm866, %v908, 0.0
    %928 = vadd.xlane.f32.xlu0 %v927
    %v929 = vpop.xlane.xlu0 %928
    %v930 = vsel %vm866, %v910, 0.0
    %931 = vadd.xlane.f32.xlu0 %v930
    %v932 = vpop.xlane.xlu0 %931
    %v933 = vsel %vm866, %v912, 0.0
    %934 = vadd.xlane.f32.xlu0 %v933
    %v935 = vpop.xlane.xlu0 %934
    %v936 = vsel %vm866, %v914, 0.0
    %937 = vadd.xlane.f32.xlu0 %v936
    %v938 = vpop.xlane.xlu0 %937
    %v939 = vrcp.pop %v917
    %v940 = vrcp.pop %v920
    %v941 = vrcp.pop %v923
    %v942 = vrcp.pop %v926
    %v943 = vrcp.pop %v929
    %v944 = vrcp.pop %v932
    %v945 = vrcp.pop %v935
    %v946 = vrcp.pop %v938
    %v947 = vmul.f32 %v900, %v939
    %v948 = vmul.f32 %v902, %v940
    %v949 = vmul.f32 %v904, %v941
    %v950 = vmul.f32 %v906, %v942
    %v951 = vmul.f32 %v908, %v943
    %v952 = vmul.f32 %v910, %v944
    %v953 = vmul.f32 %v912, %v945
    %v954 = vmul.f32 %v914, %v946
    %v956 = vsel %vm866, %v947, 0
    %v959 = vsel %vm866, %v948, 0
    %v962 = vsel %vm866, %v395, 0
    %964 = vmatprep.subr.mxu0 0.0
    %965 = vmatpush1.xpose.msra.mxu0 %v962
    %966 = vmatprep.subr.mxu0 0.0
    %967 = vmatpush1.xpose.msra.mxu0 0.0
    %968 = vmatprep.subr.mxu0 0.0
    %969 = vmatpush1.xpose.msra.mxu0 0.0
    %970 = vmatprep.subr.mxu0 0.0
    %971 = vmatpush1.xpose.msra.mxu0 0.0
    %972 = vmatprep.subr.mxu0 0.0
    %973 = vmatpush1.xpose.msra.mxu0 0.0
    %974 = vmatprep.subr.mxu0 0.0
    %975 = vmatpush1.xpose.msra.mxu0 0.0
    %976 = vmatprep.subr.mxu0 0.0
    %977 = vmatpush1.xpose.msra.mxu0 0.0
    %978 = vmatprep.subr.mxu0 0.0
    %979 = vmatpush1.xpose.msra.mxu0 0.0
    %980 = vmatprep.subr.mxu0 0.0
    %981 = vmatpush1.xpose.msra.mxu0 0.0
    %982 = vmatprep.subr.mxu0 0.0
    %983 = vmatpush1.xpose.msra.mxu0 0.0
    %984 = vmatprep.subr.mxu0 0.0
    %985 = vmatpush1.xpose.msra.mxu0 0.0
    %986 = vmatprep.subr.mxu0 0.0
    %987 = vmatpush1.xpose.msra.mxu0 0.0
    %988 = vmatprep.subr.mxu0 0.0
    %989 = vmatpush1.xpose.msra.mxu0 0.0
    %990 = vmatprep.subr.mxu0 0.0
    %991 = vmatpush1.xpose.msra.mxu0 0.0
    %992 = vmatprep.subr.mxu0 0.0
    %993 = vmatpush1.xpose.msra.mxu0 0.0
    %994 = vmatprep.subr.mxu0 0.0
    %995 = vmatpush1.xpose.msra.mxu0 0.0
    %996 = vmatprep.subr.mxu0 0.0
    %997 = vmatpush1.xpose.msra.mxu0 0.0
    %998 = vmatprep.subr.mxu0 0.0
    %999 = vmatpush1.xpose.msra.mxu0 0.0
    %1000 = vmatprep.subr.mxu0 0.0
    %1001 = vmatpush1.xpose.msra.mxu0 0.0
    %1002 = vmatprep.subr.mxu0 0.0
    %1003 = vmatpush1.xpose.msra.mxu0 0.0
    %1004 = vmatprep.subr.mxu0 0.0
    %1005 = vmatpush1.xpose.msra.mxu0 0.0
    %1006 = vmatprep.subr.mxu0 0.0
    %1007 = vmatpush1.xpose.msra.mxu0 0.0
    %1008 = vmatprep.subr.mxu0 0.0
    %1009 = vmatpush1.xpose.msra.mxu0 0.0
    %1010 = vmatprep.subr.mxu0 0.0
    %1011 = vmatpush1.xpose.msra.mxu0 0.0
    %1012 = vmatprep.subr.mxu0 0.0
    %1013 = vmatpush1.xpose.msra.mxu0 0.0
    %1014 = vmatprep.subr.mxu0 0.0
    %1015 = vmatpush1.xpose.msra.mxu0 0.0
    %1016 = vmatprep.subr.mxu0 0.0
    %1017 = vmatpush1.xpose.msra.mxu0 0.0
    %1018 = vmatprep.subr.mxu0 0.0
    %1019 = vmatpush1.xpose.msra.mxu0 0.0
    %1020 = vmatprep.subr.mxu0 0.0
    %1021 = vmatpush1.xpose.msra.mxu0 0.0
    %1022 = vmatprep.subr.mxu0 0.0
    %1023 = vmatpush1.xpose.msra.mxu0 0.0
    %1024 = vmatprep.subr.mxu0 0.0
    %1025 = vmatpush1.xpose.msra.mxu0 0.0
    %1026 = vmatprep.subr.mxu0 0.0
    %1027 = vmatpush1.xpose.msra.mxu0 0.0
    %1028 = vmatprep.mubr.f32.mxu0 0.0
    %1029 = vmatmul.mubr.f32.gmra.mrb[0].mxu0 %v956
    %v1030 = vpop.f32.mrb[0].mxu0
    %v1031 = vadd.f32 0.0, %v1030
    %v1032 = vpop.f32.mrb[0].mxu0
    %1033 = vmatprep.mubr.f32.mxu0 0.0
    %1034 = vmatmul.mubr.f32.gmra.mrb[0].mxu0 %v959
    %v1035 = vpop.f32.mrb[0].mxu0
    %v1036 = vadd.f32 0.0, %v1035
    %v1037 = vpop.f32.mrb[0].mxu0
    %1038 = vdwg.mxu0
    %v1040 = vsel %vm866, %v949, 0
    %v1043 = vsel %vm866, %v950, 0
    %v1046 = vsel %vm866, %v400, 0
    %1048 = vmatprep.subr.mxu0 0.0
    %1049 = vmatpush1.xpose.msra.mxu0 %v1046
    %1050 = vmatprep.subr.mxu0 0.0
    %1051 = vmatpush1.xpose.msra.mxu0 0.0
    %1052 = vmatprep.subr.mxu0 0.0
    %1053 = vmatpush1.xpose.msra.mxu0 0.0
    %1054 = vmatprep.subr.mxu0 0.0
    %1055 = vmatpush1.xpose.msra.mxu0 0.0
    %1056 = vmatprep.subr.mxu0 0.0
    %1057 = vmatpush1.xpose.msra.mxu0 0.0
    %1058 = vmatprep.subr.mxu0 0.0
    %1059 = vmatpush1.xpose.msra.mxu0 0.0
    %1060 = vmatprep.subr.mxu0 0.0
    %1061 = vmatpush1.xpose.msra.mxu0 0.0
    %1062 = vmatprep.subr.mxu0 0.0
    %1063 = vmatpush1.xpose.msra.mxu0 0.0
    %1064 = vmatprep.subr.mxu0 0.0
    %1065 = vmatpush1.xpose.msra.mxu0 0.0
    %1066 = vmatprep.subr.mxu0 0.0
    %1067 = vmatpush1.xpose.msra.mxu0 0.0
    %1068 = vmatprep.subr.mxu0 0.0
    %1069 = vmatpush1.xpose.msra.mxu0 0.0
    %1070 = vmatprep.subr.mxu0 0.0
    %1071 = vmatpush1.xpose.msra.mxu0 0.0
    %1072 = vmatprep.subr.mxu0 0.0
    %1073 = vmatpush1.xpose.msra.mxu0 0.0
    %1074 = vmatprep.subr.mxu0 0.0
    %1075 = vmatpush1.xpose.msra.mxu0 0.0
    %1076 = vmatprep.subr.mxu0 0.0
    %1077 = vmatpush1.xpose.msra.mxu0 0.0
    %1078 = vmatprep.subr.mxu0 0.0
    %1079 = vmatpush1.xpose.msra.mxu0 0.0
    %1080 = vmatprep.subr.mxu0 0.0
    %1081 = vmatpush1.xpose.msra.mxu0 0.0
    %1082 = vmatprep.subr.mxu0 0.0
    %1083 = vmatpush1.xpose.msra.mxu0 0.0
    %1084 = vmatprep.subr.mxu0 0.0
    %1085 = vmatpush1.xpose.msra.mxu0 0.0
    %1086 = vmatprep.subr.mxu0 0.0
    %1087 = vmatpush1.xpose.msra.mxu0 0.0
    %1088 = vmatprep.subr.mxu0 0.0
    %1089 = vmatpush1.xpose.msra.mxu0 0.0
    %1090 = vmatprep.subr.mxu0 0.0
    %1091 = vmatpush1.xpose.msra.mxu0 0.0
    %1092 = vmatprep.subr.mxu0 0.0
    %1093 = vmatpush1.xpose.msra.mxu0 0.0
    %1094 = vmatprep.subr.mxu0 0.0
    %1095 = vmatpush1.xpose.msra.mxu0 0.0
    %1096 = vmatprep.subr.mxu0 0.0
    %1097 = vmatpush1.xpose.msra.mxu0 0.0
    %1098 = vmatprep.subr.mxu0 0.0
    %1099 = vmatpush1.xpose.msra.mxu0 0.0
    %1100 = vmatprep.subr.mxu0 0.0
    %1101 = vmatpush1.xpose.msra.mxu0 0.0
    %1102 = vmatprep.subr.mxu0 0.0
    %1103 = vmatpush1.xpose.msra.mxu0 0.0
    %1104 = vmatprep.subr.mxu0 0.0
    %1105 = vmatpush1.xpose.msra.mxu0 0.0
    %1106 = vmatprep.subr.mxu0 0.0
    %1107 = vmatpush1.xpose.msra.mxu0 0.0
    %1108 = vmatprep.subr.mxu0 0.0
    %1109 = vmatpush1.xpose.msra.mxu0 0.0
    %1110 = vmatprep.subr.mxu0 0.0
    %1111 = vmatpush1.xpose.msra.mxu0 0.0
    %1112 = vmatprep.mubr.f32.mxu0 0.0
    %1113 = vmatmul.mubr.f32.gmra.mrb[0].mxu0 %v1040
    %v1114 = vpop.f32.mrb[0].mxu0
    %v1115 = vadd.f32 0.0, %v1114
    %v1116 = vpop.f32.mrb[0].mxu0
    %1117 = vmatprep.mubr.f32.mxu0 0.0
    %1118 = vmatmul.mubr.f32.gmra.mrb[0].mxu0 %v1043
    %v1119 = vpop.f32.mrb[0].mxu0
    %v1120 = vadd.f32 0.0, %v1119
    %v1121 = vpop.f32.mrb[0].mxu0
    %1122 = vdwg.mxu0
    %v1124 = vsel %vm866, %v951, 0
    %v1127 = vsel %vm866, %v952, 0
    %v1130 = vsel %vm866, %v405, 0
    %1132 = vmatprep.subr.mxu0 0.0
    %1133 = vmatpush1.xpose.msra.mxu0 %v1130
    %1134 = vmatprep.subr.mxu0 0.0
    %1135 = vmatpush1.xpose.msra.mxu0 0.0
    %1136 = vmatprep.subr.mxu0 0.0
    %1137 = vmatpush1.xpose.msra.mxu0 0.0
    %1138 = vmatprep.subr.mxu0 0.0
    %1139 = vmatpush1.xpose.msra.mxu0 0.0
    %1140 = vmatprep.subr.mxu0 0.0
    %1141 = vmatpush1.xpose.msra.mxu0 0.0
    %1142 = vmatprep.subr.mxu0 0.0
    %1143 = vmatpush1.xpose.msra.mxu0 0.0
    %1144 = vmatprep.subr.mxu0 0.0
    %1145 = vmatpush1.xpose.msra.mxu0 0.0
    %1146 = vmatprep.subr.mxu0 0.0
    %1147 = vmatpush1.xpose.msra.mxu0 0.0
    %1148 = vmatprep.subr.mxu0 0.0
    %1149 = vmatpush1.xpose.msra.mxu0 0.0
    %1150 = vmatprep.subr.mxu0 0.0
    %1151 = vmatpush1.xpose.msra.mxu0 0.0
    %1152 = vmatprep.subr.mxu0 0.0
    %1153 = vmatpush1.xpose.msra.mxu0 0.0
    %1154 = vmatprep.subr.mxu0 0.0
    %1155 = vmatpush1.xpose.msra.mxu0 0.0
    %1156 = vmatprep.subr.mxu0 0.0
    %1157 = vmatpush1.xpose.msra.mxu0 0.0
    %1158 = vmatprep.subr.mxu0 0.0
    %1159 = vmatpush1.xpose.msra.mxu0 0.0
    %1160 = vmatprep.subr.mxu0 0.0
    %1161 = vmatpush1.xpose.msra.mxu0 0.0
    %1162 = vmatprep.subr.mxu0 0.0
    %1163 = vmatpush1.xpose.msra.mxu0 0.0
    %1164 = vmatprep.subr.mxu0 0.0
    %1165 = vmatpush1.xpose.msra.mxu0 0.0
    %1166 = vmatprep.subr.mxu0 0.0
    %1167 = vmatpush1.xpose.msra.mxu0 0.0
    %1168 = vmatprep.subr.mxu0 0.0
    %1169 = vmatpush1.xpose.msra.mxu0 0.0
    %1170 = vmatprep.subr.mxu0 0.0
    %1171 = vmatpush1.xpose.msra.mxu0 0.0
    %1172 = vmatprep.subr.mxu0 0.0
    %1173 = vmatpush1.xpose.msra.mxu0 0.0
    %1174 = vmatprep.subr.mxu0 0.0
    %1175 = vmatpush1.xpose.msra.mxu0 0.0
    %1176 = vmatprep.subr.mxu0 0.0
    %1177 = vmatpush1.xpose.msra.mxu0 0.0
    %1178 = vmatprep.subr.mxu0 0.0
    %1179 = vmatpush1.xpose.msra.mxu0 0.0
    %1180 = vmatprep.subr.mxu0 0.0
    %1181 = vmatpush1.xpose.msra.mxu0 0.0
    %1182 = vmatprep.subr.mxu0 0.0
    %1183 = vmatpush1.xpose.msra.mxu0 0.0
    %1184 = vmatprep.subr.mxu0 0.0
    %1185 = vmatpush1.xpose.msra.mxu0 0.0
    %1186 = vmatprep.subr.mxu0 0.0
    %1187 = vmatpush1.xpose.msra.mxu0 0.0
    %1188 = vmatprep.subr.mxu0 0.0
    %1189 = vmatpush1.xpose.msra.mxu0 0.0
    %1190 = vmatprep.subr.mxu0 0.0
    %1191 = vmatpush1.xpose.msra.mxu0 0.0
    %1192 = vmatprep.subr.mxu0 0.0
    %1193 = vmatpush1.xpose.msra.mxu0 0.0
    %1194 = vmatprep.subr.mxu0 0.0
    %1195 = vmatpush1.xpose.msra.mxu0 0.0
    %1196 = vmatprep.mubr.f32.mxu0 0.0
    %1197 = vmatmul.mubr.f32.gmra.mrb[0].mxu0 %v1124
    %v1198 = vpop.f32.mrb[0].mxu0
    %v1199 = vadd.f32 0.0, %v1198
    %v1200 = vpop.f32.mrb[0].mxu0
    %1201 = vmatprep.mubr.f32.mxu0 0.0
    %1202 = vmatmul.mubr.f32.gmra.mrb[0].mxu0 %v1127
    %v1203 = vpop.f32.mrb[0].mxu0
    %v1204 = vadd.f32 0.0, %v1203
    %v1205 = vpop.f32.mrb[0].mxu0
    %1206 = vdwg.mxu0
    %v1208 = vsel %vm866, %v953, 0
    %v1211 = vsel %vm866, %v954, 0
    %v1214 = vsel %vm866, %v410, 0
    %1216 = vmatprep.subr.mxu0 0.0
    %1217 = vmatpush1.xpose.msra.mxu0 %v1214
    %1218 = vmatprep.subr.mxu0 0.0
    %1219 = vmatpush1.xpose.msra.mxu0 0.0
    %1220 = vmatprep.subr.mxu0 0.0
    %1221 = vmatpush1.xpose.msra.mxu0 0.0
    %1222 = vmatprep.subr.mxu0 0.0
    %1223 = vmatpush1.xpose.msra.mxu0 0.0
    %1224 = vmatprep.subr.mxu0 0.0
    %1225 = vmatpush1.xpose.msra.mxu0 0.0
    %1226 = vmatprep.subr.mxu0 0.0
    %1227 = vmatpush1.xpose.msra.mxu0 0.0
    %1228 = vmatprep.subr.mxu0 0.0
    %1229 = vmatpush1.xpose.msra.mxu0 0.0
    %1230 = vmatprep.subr.mxu0 0.0
    %1231 = vmatpush1.xpose.msra.mxu0 0.0
    %1232 = vmatprep.subr.mxu0 0.0
    %1233 = vmatpush1.xpose.msra.mxu0 0.0
    %1234 = vmatprep.subr.mxu0 0.0
    %1235 = vmatpush1.xpose.msra.mxu0 0.0
    %1236 = vmatprep.subr.mxu0 0.0
    %1237 = vmatpush1.xpose.msra.mxu0 0.0
    %1238 = vmatprep.subr.mxu0 0.0
    %1239 = vmatpush1.xpose.msra.mxu0 0.0
    %1240 = vmatprep.subr.mxu0 0.0
    %1241 = vmatpush1.xpose.msra.mxu0 0.0
    %1242 = vmatprep.subr.mxu0 0.0
    %1243 = vmatpush1.xpose.msra.mxu0 0.0
    %1244 = vmatprep.subr.mxu0 0.0
    %1245 = vmatpush1.xpose.msra.mxu0 0.0
    %1246 = vmatprep.subr.mxu0 0.0
    %1247 = vmatpush1.xpose.msra.mxu0 0.0
    %1248 = vmatprep.subr.mxu0 0.0
    %1249 = vmatpush1.xpose.msra.mxu0 0.0
    %1250 = vmatprep.subr.mxu0 0.0
    %1251 = vmatpush1.xpose.msra.mxu0 0.0
    %1252 = vmatprep.subr.mxu0 0.0
    %1253 = vmatpush1.xpose.msra.mxu0 0.0
    %1254 = vmatprep.subr.mxu0 0.0
    %1255 = vmatpush1.xpose.msra.mxu0 0.0
    %1256 = vmatprep.subr.mxu0 0.0
    %1257 = vmatpush1.xpose.msra.mxu0 0.0
    %1258 = vmatprep.subr.mxu0 0.0
    %1259 = vmatpush1.xpose.msra.mxu0 0.0
    %1260 = vmatprep.subr.mxu0 0.0
    %1261 = vmatpush1.xpose.msra.mxu0 0.0
    %1262 = vmatprep.subr.mxu0 0.0
    %1263 = vmatpush1.xpose.msra.mxu0 0.0
    %1264 = vmatprep.subr.mxu0 0.0
    %1265 = vmatpush1.xpose.msra.mxu0 0.0
    %1266 = vmatprep.subr.mxu0 0.0
    %1267 = vmatpush1.xpose.msra.mxu0 0.0
    %1268 = vmatprep.subr.mxu0 0.0
    %1269 = vmatpush1.xpose.msra.mxu0 0.0
    %1270 = vmatprep.subr.mxu0 0.0
    %1271 = vmatpush1.xpose.msra.mxu0 0.0
    %1272 = vmatprep.subr.mxu0 0.0
    %1273 = vmatpush1.xpose.msra.mxu0 0.0
    %1274 = vmatprep.subr.mxu0 0.0
    %1275 = vmatpush1.xpose.msra.mxu0 0.0
    %1276 = vmatprep.subr.mxu0 0.0
    %1277 = vmatpush1.xpose.msra.mxu0 0.0
    %1278 = vmatprep.subr.mxu0 0.0
    %1279 = vmatpush1.xpose.msra.mxu0 0.0
    %1280 = vmatprep.mubr.f32.mxu0 0.0
    %1281 = vmatmul.mubr.f32.gmra.mrb[0].mxu0 %v1208
    %v1282 = vpop.f32.mrb[0].mxu0
    %v1283 = vadd.f32 0.0, %v1282
    %v1284 = vpop.f32.mrb[0].mxu0
    %1285 = vmatprep.mubr.f32.mxu0 0.0
    %1286 = vmatmul.mubr.f32.gmra.mrb[0].mxu0 %v1211
    %v1287 = vpop.f32.mrb[0].mxu0
    %v1288 = vadd.f32 0.0, %v1287
    %v1289 = vpop.f32.mrb[0].mxu0
    %1290 = vdwg.mxu0
    %v1291 = vld [vmem:[%s6] sm:$0xff]
    %v1292 = vld [vmem:[%s6 + $0x8] sm:$0xff]
    %v1293 = vld [vmem:[%s6 + $0x10] sm:$0xff]
    %v1294 = vld [vmem:[%s6 + $0x18] sm:$0xff]
    %v1296 = vsel %vm541, %v1031, 0
    %v1299 = vsel %vm541, %v1036, 0
    %1301 = vmatprep.subr.mxu0 0.0
    %1302 = vmatpush1.msra.mxu0 %v1291
    %1303 = vmatprep.subr.mxu0 0.0
    %1304 = vmatpush1.msra.mxu0 0.0
    %1305 = vmatprep.subr.mxu0 0.0
    %1306 = vmatpush1.msra.mxu0 0.0
    %1307 = vmatprep.subr.mxu0 0.0
    %1308 = vmatpush1.msra.mxu0 0.0
    %1309 = vmatprep.subr.mxu0 0.0
    %1310 = vmatpush1.msra.mxu0 0.0
    %1311 = vmatprep.subr.mxu0 0.0
    %1312 = vmatpush1.msra.mxu0 0.0
    %1313 = vmatprep.subr.mxu0 0.0
    %1314 = vmatpush1.msra.mxu0 0.0
    %1315 = vmatprep.subr.mxu0 0.0
    %1316 = vmatpush1.msra.mxu0 0.0
    %1317 = vmatprep.subr.mxu0 0.0
    %1318 = vmatpush1.msra.mxu0 0.0
    %1319 = vmatprep.subr.mxu0 0.0
    %1320 = vmatpush1.msra.mxu0 0.0
    %1321 = vmatprep.subr.mxu0 0.0
    %1322 = vmatpush1.msra.mxu0 0.0
    %1323 = vmatprep.subr.mxu0 0.0
    %1324 = vmatpush1.msra.mxu0 0.0
    %1325 = vmatprep.subr.mxu0 0.0
    %1326 = vmatpush1.msra.mxu0 0.0
    %1327 = vmatprep.subr.mxu0 0.0
    %1328 = vmatpush1.msra.mxu0 0.0
    %1329 = vmatprep.subr.mxu0 0.0
    %1330 = vmatpush1.msra.mxu0 0.0
    %1331 = vmatprep.subr.mxu0 0.0
    %1332 = vmatpush1.msra.mxu0 0.0
    %1333 = vmatprep.subr.mxu0 0.0
    %1334 = vmatpush1.msra.mxu0 0.0
    %1335 = vmatprep.subr.mxu0 0.0
    %1336 = vmatpush1.msra.mxu0 0.0
    %1337 = vmatprep.subr.mxu0 0.0
    %1338 = vmatpush1.msra.mxu0 0.0
    %1339 = vmatprep.subr.mxu0 0.0
    %1340 = vmatpush1.msra.mxu0 0.0
    %1341 = vmatprep.subr.mxu0 0.0
    %1342 = vmatpush1.msra.mxu0 0.0
    %1343 = vmatprep.subr.mxu0 0.0
    %1344 = vmatpush1.msra.mxu0 0.0
    %1345 = vmatprep.subr.mxu0 0.0
    %1346 = vmatpush1.msra.mxu0 0.0
    %1347 = vmatprep.subr.mxu0 0.0
    %1348 = vmatpush1.msra.mxu0 0.0
    %1349 = vmatprep.subr.mxu0 0.0
    %1350 = vmatpush1.msra.mxu0 0.0
    %1351 = vmatprep.subr.mxu0 0.0
    %1352 = vmatpush1.msra.mxu0 0.0
    %1353 = vmatprep.subr.mxu0 0.0
    %1354 = vmatpush1.msra.mxu0 0.0
    %1355 = vmatprep.subr.mxu0 0.0
    %1356 = vmatpush1.msra.mxu0 0.0
    %1357 = vmatprep.subr.mxu0 0.0
    %1358 = vmatpush1.msra.mxu0 0.0
    %1359 = vmatprep.subr.mxu0 0.0
    %1360 = vmatpush1.msra.mxu0 0.0
    %1361 = vmatprep.subr.mxu0 0.0
    %1362 = vmatpush1.msra.mxu0 0.0
    %1363 = vmatprep.subr.mxu0 0.0
    %1364 = vmatpush1.msra.mxu0 0.0
    %1365 = vmatprep.mubr.f32.mxu0 0.0
    %1366 = vmatmul.mubr.f32.gmra.mrb[0].mxu0 %v1296
    %v1367 = vpop.f32.mrb[0].mxu0
    %v1368 = vadd.f32 0.0, %v1367
    %v1369 = vpop.f32.mrb[0].mxu0
    %1370 = vmatprep.mubr.f32.mxu0 0.0
    %1371 = vmatmul.mubr.f32.gmra.mrb[0].mxu0 %v1299
    %v1372 = vpop.f32.mrb[0].mxu0
    %v1373 = vadd.f32 0.0, %v1372
    %v1374 = vpop.f32.mrb[0].mxu0
    %1375 = vdwg.mxu0
    %v1377 = vsel %vm541, %v1115, 0
    %v1380 = vsel %vm541, %v1120, 0
    %1382 = vmatprep.subr.mxu0 0.0
    %1383 = vmatpush1.msra.mxu0 %v1292
    %1384 = vmatprep.subr.mxu0 0.0
    %1385 = vmatpush1.msra.mxu0 0.0
    %1386 = vmatprep.subr.mxu0 0.0
    %1387 = vmatpush1.msra.mxu0 0.0
    %1388 = vmatprep.subr.mxu0 0.0
    %1389 = vmatpush1.msra.mxu0 0.0
    %1390 = vmatprep.subr.mxu0 0.0
    %1391 = vmatpush1.msra.mxu0 0.0
    %1392 = vmatprep.subr.mxu0 0.0
    %1393 = vmatpush1.msra.mxu0 0.0
    %1394 = vmatprep.subr.mxu0 0.0
    %1395 = vmatpush1.msra.mxu0 0.0
    %1396 = vmatprep.subr.mxu0 0.0
    %1397 = vmatpush1.msra.mxu0 0.0
    %1398 = vmatprep.subr.mxu0 0.0
    %1399 = vmatpush1.msra.mxu0 0.0
    %1400 = vmatprep.subr.mxu0 0.0
    %1401 = vmatpush1.msra.mxu0 0.0
    %1402 = vmatprep.subr.mxu0 0.0
    %1403 = vmatpush1.msra.mxu0 0.0
    %1404 = vmatprep.subr.mxu0 0.0
    %1405 = vmatpush1.msra.mxu0 0.0
    %1406 = vmatprep.subr.mxu0 0.0
    %1407 = vmatpush1.msra.mxu0 0.0
    %1408 = vmatprep.subr.mxu0 0.0
    %1409 = vmatpush1.msra.mxu0 0.0
    %1410 = vmatprep.subr.mxu0 0.0
    %1411 = vmatpush1.msra.mxu0 0.0
    %1412 = vmatprep.subr.mxu0 0.0
    %1413 = vmatpush1.msra.mxu0 0.0
    %1414 = vmatprep.subr.mxu0 0.0
    %1415 = vmatpush1.msra.mxu0 0.0
    %1416 = vmatprep.subr.mxu0 0.0
    %1417 = vmatpush1.msra.mxu0 0.0
    %1418 = vmatprep.subr.mxu0 0.0
    %1419 = vmatpush1.msra.mxu0 0.0
    %1420 = vmatprep.subr.mxu0 0.0
    %1421 = vmatpush1.msra.mxu0 0.0
    %1422 = vmatprep.subr.mxu0 0.0
    %1423 = vmatpush1.msra.mxu0 0.0
    %1424 = vmatprep.subr.mxu0 0.0
    %1425 = vmatpush1.msra.mxu0 0.0
    %1426 = vmatprep.subr.mxu0 0.0
    %1427 = vmatpush1.msra.mxu0 0.0
    %1428 = vmatprep.subr.mxu0 0.0
    %1429 = vmatpush1.msra.mxu0 0.0
    %1430 = vmatprep.subr.mxu0 0.0
    %1431 = vmatpush1.msra.mxu0 0.0
    %1432 = vmatprep.subr.mxu0 0.0
    %1433 = vmatpush1.msra.mxu0 0.0
    %1434 = vmatprep.subr.mxu0 0.0
    %1435 = vmatpush1.msra.mxu0 0.0
    %1436 = vmatprep.subr.mxu0 0.0
    %1437 = vmatpush1.msra.mxu0 0.0
    %1438 = vmatprep.subr.mxu0 0.0
    %1439 = vmatpush1.msra.mxu0 0.0
    %1440 = vmatprep.subr.mxu0 0.0
    %1441 = vmatpush1.msra.mxu0 0.0
    %1442 = vmatprep.subr.mxu0 0.0
    %1443 = vmatpush1.msra.mxu0 0.0
    %1444 = vmatprep.subr.mxu0 0.0
    %1445 = vmatpush1.msra.mxu0 0.0
    %1446 = vmatprep.mubr.f32.mxu0 0.0
    %1447 = vmatmul.mubr.f32.gmra.mrb[0].mxu0 %v1377
    %v1448 = vpop.f32.mrb[0].mxu0
    %v1449 = vadd.f32 0.0, %v1448
    %v1450 = vpop.f32.mrb[0].mxu0
    %1451 = vmatprep.mubr.f32.mxu0 0.0
    %1452 = vmatmul.mubr.f32.gmra.mrb[0].mxu0 %v1380
    %v1453 = vpop.f32.mrb[0].mxu0
    %v1454 = vadd.f32 0.0, %v1453
    %v1455 = vpop.f32.mrb[0].mxu0
    %1456 = vdwg.mxu0
    %v1458 = vsel %vm541, %v1199, 0
    %v1461 = vsel %vm541, %v1204, 0
    %1463 = vmatprep.subr.mxu0 0.0
    %1464 = vmatpush1.msra.mxu0 %v1293
    %1465 = vmatprep.subr.mxu0 0.0
    %1466 = vmatpush1.msra.mxu0 0.0
    %1467 = vmatprep.subr.mxu0 0.0
    %1468 = vmatpush1.msra.mxu0 0.0
    %1469 = vmatprep.subr.mxu0 0.0
    %1470 = vmatpush1.msra.mxu0 0.0
    %1471 = vmatprep.subr.mxu0 0.0
    %1472 = vmatpush1.msra.mxu0 0.0
    %1473 = vmatprep.subr.mxu0 0.0
    %1474 = vmatpush1.msra.mxu0 0.0
    %1475 = vmatprep.subr.mxu0 0.0
    %1476 = vmatpush1.msra.mxu0 0.0
    %1477 = vmatprep.subr.mxu0 0.0
    %1478 = vmatpush1.msra.mxu0 0.0
    %1479 = vmatprep.subr.mxu0 0.0
    %1480 = vmatpush1.msra.mxu0 0.0
    %1481 = vmatprep.subr.mxu0 0.0
    %1482 = vmatpush1.msra.mxu0 0.0
    %1483 = vmatprep.subr.mxu0 0.0
    %1484 = vmatpush1.msra.mxu0 0.0
    %1485 = vmatprep.subr.mxu0 0.0
    %1486 = vmatpush1.msra.mxu0 0.0
    %1487 = vmatprep.subr.mxu0 0.0
    %1488 = vmatpush1.msra.mxu0 0.0
    %1489 = vmatprep.subr.mxu0 0.0
    %1490 = vmatpush1.msra.mxu0 0.0
    %1491 = vmatprep.subr.mxu0 0.0
    %1492 = vmatpush1.msra.mxu0 0.0
    %1493 = vmatprep.subr.mxu0 0.0
    %1494 = vmatpush1.msra.mxu0 0.0
    %1495 = vmatprep.subr.mxu0 0.0
    %1496 = vmatpush1.msra.mxu0 0.0
    %1497 = vmatprep.subr.mxu0 0.0
    %1498 = vmatpush1.msra.mxu0 0.0
    %1499 = vmatprep.subr.mxu0 0.0
    %1500 = vmatpush1.msra.mxu0 0.0
    %1501 = vmatprep.subr.mxu0 0.0
    %1502 = vmatpush1.msra.mxu0 0.0
    %1503 = vmatprep.subr.mxu0 0.0
    %1504 = vmatpush1.msra.mxu0 0.0
    %1505 = vmatprep.subr.mxu0 0.0
    %1506 = vmatpush1.msra.mxu0 0.0
    %1507 = vmatprep.subr.mxu0 0.0
    %1508 = vmatpush1.msra.mxu0 0.0
    %1509 = vmatprep.subr.mxu0 0.0
    %1510 = vmatpush1.msra.mxu0 0.0
    %1511 = vmatprep.subr.mxu0 0.0
    %1512 = vmatpush1.msra.mxu0 0.0
    %1513 = vmatprep.subr.mxu0 0.0
    %1514 = vmatpush1.msra.mxu0 0.0
    %1515 = vmatprep.subr.mxu0 0.0
    %1516 = vmatpush1.msra.mxu0 0.0
    %1517 = vmatprep.subr.mxu0 0.0
    %1518 = vmatpush1.msra.mxu0 0.0
    %1519 = vmatprep.subr.mxu0 0.0
    %1520 = vmatpush1.msra.mxu0 0.0
    %1521 = vmatprep.subr.mxu0 0.0
    %1522 = vmatpush1.msra.mxu0 0.0
    %1523 = vmatprep.subr.mxu0 0.0
    %1524 = vmatpush1.msra.mxu0 0.0
    %1525 = vmatprep.subr.mxu0 0.0
    %1526 = vmatpush1.msra.mxu0 0.0
    %1527 = vmatprep.mubr.f32.mxu0 0.0
    %1528 = vmatmul.mubr.f32.gmra.mrb[0].mxu0 %v1458
    %v1529 = vpop.f32.mrb[0].mxu0
    %v1530 = vadd.f32 0.0, %v1529
    %v1531 = vpop.f32.mrb[0].mxu0
    %1532 = vmatprep.mubr.f32.mxu0 0.0
    %1533 = vmatmul.mubr.f32.gmra.mrb[0].mxu0 %v1461
    %v1534 = vpop.f32.mrb[0].mxu0
    %v1535 = vadd.f32 0.0, %v1534
    %v1536 = vpop.f32.mrb[0].mxu0
    %1537 = vdwg.mxu0
    %v1539 = vsel %vm541, %v1283, 0
    %v1542 = vsel %vm541, %v1288, 0
    %1544 = vmatprep.subr.mxu0 0.0
    %1545 = vmatpush1.msra.mxu0 %v1294
    %1546 = vmatprep.subr.mxu0 0.0
    %1547 = vmatpush1.msra.mxu0 0.0
    %1548 = vmatprep.subr.mxu0 0.0
    %1549 = vmatpush1.msra.mxu0 0.0
    %1550 = vmatprep.subr.mxu0 0.0
    %1551 = vmatpush1.msra.mxu0 0.0
    %1552 = vmatprep.subr.mxu0 0.0
    %1553 = vmatpush1.msra.mxu0 0.0
    %1554 = vmatprep.subr.mxu0 0.0
    %1555 = vmatpush1.msra.mxu0 0.0
    %1556 = vmatprep.subr.mxu0 0.0
    %1557 = vmatpush1.msra.mxu0 0.0
    %1558 = vmatprep.subr.mxu0 0.0
    %1559 = vmatpush1.msra.mxu0 0.0
    %1560 = vmatprep.subr.mxu0 0.0
    %1561 = vmatpush1.msra.mxu0 0.0
    %1562 = vmatprep.subr.mxu0 0.0
    %1563 = vmatpush1.msra.mxu0 0.0
    %1564 = vmatprep.subr.mxu0 0.0
    %1565 = vmatpush1.msra.mxu0 0.0
    %1566 = vmatprep.subr.mxu0 0.0
    %1567 = vmatpush1.msra.mxu0 0.0
    %1568 = vmatprep.subr.mxu0 0.0
    %1569 = vmatpush1.msra.mxu0 0.0
    %1570 = vmatprep.subr.mxu0 0.0
    %1571 = vmatpush1.msra.mxu0 0.0
    %1572 = vmatprep.subr.mxu0 0.0
    %1573 = vmatpush1.msra.mxu0 0.0
    %1574 = vmatprep.subr.mxu0 0.0
    %1575 = vmatpush1.msra.mxu0 0.0
    %1576 = vmatprep.subr.mxu0 0.0
    %1577 = vmatpush1.msra.mxu0 0.0
    %1578 = vmatprep.subr.mxu0 0.0
    %1579 = vmatpush1.msra.mxu0 0.0
    %1580 = vmatprep.subr.mxu0 0.0
    %1581 = vmatpush1.msra.mxu0 0.0
    %1582 = vmatprep.subr.mxu0 0.0
    %1583 = vmatpush1.msra.mxu0 0.0
    %1584 = vmatprep.subr.mxu0 0.0
    %1585 = vmatpush1.msra.mxu0 0.0
    %1586 = vmatprep.subr.mxu0 0.0
    %1587 = vmatpush1.msra.mxu0 0.0
    %1588 = vmatprep.subr.mxu0 0.0
    %1589 = vmatpush1.msra.mxu0 0.0
    %1590 = vmatprep.subr.mxu0 0.0
    %1591 = vmatpush1.msra.mxu0 0.0
    %1592 = vmatprep.subr.mxu0 0.0
    %1593 = vmatpush1.msra.mxu0 0.0
    %1594 = vmatprep.subr.mxu0 0.0
    %1595 = vmatpush1.msra.mxu0 0.0
    %1596 = vmatprep.subr.mxu0 0.0
    %1597 = vmatpush1.msra.mxu0 0.0
    %1598 = vmatprep.subr.mxu0 0.0
    %1599 = vmatpush1.msra.mxu0 0.0
    %1600 = vmatprep.subr.mxu0 0.0
    %1601 = vmatpush1.msra.mxu0 0.0
    %1602 = vmatprep.subr.mxu0 0.0
    %1603 = vmatpush1.msra.mxu0 0.0
    %1604 = vmatprep.subr.mxu0 0.0
    %1605 = vmatpush1.msra.mxu0 0.0
    %1606 = vmatprep.subr.mxu0 0.0
    %1607 = vmatpush1.msra.mxu0 0.0
    %1608 = vmatprep.mubr.f32.mxu0 0.0
    %1609 = vmatmul.mubr.f32.gmra.mrb[0].mxu0 %v1539
    %v1610 = vpop.f32.mrb[0].mxu0
    %v1611 = vadd.f32 0.0, %v1610
    %v1612 = vpop.f32.mrb[0].mxu0
    %1613 = vmatprep.mubr.f32.mxu0 0.0
    %1614 = vmatmul.mubr.f32.gmra.mrb[0].mxu0 %v1542
    %v1615 = vpop.f32.mrb[0].mxu0
    %v1616 = vadd.f32 0.0, %v1615
    %v1617 = vpop.f32.mrb[0].mxu0
    %1618 = vdwg.mxu0
    %v1619 = vsel %vm245, %v1368, 0.0
    %v1620 = vsel %vm245, %v1449, 0.0
    %v1621 = vadd.f32 %v1619, %v1620
    %v1622 = vsel %vm245, %v1530, 0.0
    %v1623 = vadd.f32 %v1621, %v1622
    %v1624 = vsel %vm245, %v1611, 0.0
    %v1625 = vadd.f32 %v1623, %v1624
    %v1626 = vsel %vm245, %v1373, 0.0
    %v1627 = vsel %vm245, %v1454, 0.0
    %v1628 = vadd.f32 %v1626, %v1627
    %v1629 = vsel %vm245, %v1535, 0.0
    %v1630 = vadd.f32 %v1628, %v1629
    %v1631 = vsel %vm245, %v1616, 0.0
    %v1632 = vadd.f32 %v1630, %v1631
    %v1633 = vld [vmem:[%s7] sm:$0x1]
    %v1635 = vlaneseq
    %v1636 = vshrl.u32 %v1635, 7
    %v1637 = vsub.s32 0, %v1636
    %v1638 = vrot.slane %v1633, %v1637
    %v1640 = vadd.f32 %v1625, %v1638
    %v1641 = vadd.f32 %v1632, %v1638
    %v1642 = vadd.f32 %v151, %v1640
    %v1643 = vadd.f32 %v156, %v1641
    %v1644 = vld [vmem:[%s8] sm:$0x1]
    %v1645 = vld [vmem:[%s9] sm:$0x1]
    %v1646 = vsel %vm245, %v1642, 0.0
    %1647 = vadd.xlane.f32.xlu0 %v1646
    %v1648 = vpop.xlane.xlu0 %1647
    %v1649 = vsel %vm245, %v1643, 0.0
    %1650 = vadd.xlane.f32.xlu0 %v1649
    %v1651 = vpop.xlane.xlu0 %1650
    %v1652 = vrcp.pop 32.0
    %v1653 = vmul.f32 %v1648, %v1652
    %v1654 = vmul.f32 %v1651, %v1652
    %v1655 = vsub.f32 %v1642, %v1653
    %v1656 = vsub.f32 %v1643, %v1654
    %v1657 = vmul.f32 %v1655, %v1655
    %v1658 = vmul.f32 %v1656, %v1656
    %v1659 = vsel %vm245, %v1657, 0.0
    %1660 = vadd.xlane.f32.xlu0 %v1659
    %v1661 = vpop.xlane.xlu0 %1660
    %v1662 = vsel %vm245, %v1658, 0.0
    %1663 = vadd.xlane.f32.xlu0 %v1662
    %v1664 = vpop.xlane.xlu0 %1663
    %v1665 = vmul.f32 %v1661, %v1652
    %v1666 = vmul.f32 %v1664, %v1652
    %v1667 = vadd.f32 %v1665, 1e-05
    %v1668 = vadd.f32 %v1666, 1e-05
    %v1669 = vrsqrt.pop %v1667
    %v1670 = vrsqrt.pop %v1668
    %v1671 = vmul.f32 %v1655, %v1669
    %v1672 = vmul.f32 %v1656, %v1670
    %v1674 = vlaneseq
    %v1675 = vshrl.u32 %v1674, 7
    %v1676 = vsub.s32 0, %v1675
    %v1677 = vrot.slane %v1644, %v1676
    %v1679 = vmul.f32 %v1671, %v1677
    %v1680 = vmul.f32 %v1672, %v1677
    %v1682 = vlaneseq
    %v1683 = vshrl.u32 %v1682, 7
    %v1684 = vsub.s32 0, %v1683
    %v1685 = vrot.slane %v1645, %v1684
    %v1687 = vadd.f32 %v1679, %v1685
    %v1688 = vadd.f32 %v1680, %v1685
    %v1689 = vld [vmem:[%s12] sm:$0xff]
    %v1690 = vld [vmem:[%s12 + $0x8] sm:$0xff]
    %v1691 = vld [vmem:[%s12 + $0x10] sm:$0xff]
    %v1692 = vld [vmem:[%s12 + $0x18] sm:$0xff]
    %v1693 = vld [vmem:[%s13] sm:$0x1]
    %v1695 = vlaneseq
    %v1696 = vshrl.u32 %v1695, 7
    %v1697 = vsub.s32 0, %v1696
    %v1698 = vrot.slane %v1693, %v1697
    %v1701 = vsel %vm245, %v1687, 0
    %v1704 = vsel %vm245, %v1688, 0
    %1706 = vmatprep.subr.mxu0 0.0
    %1707 = vmatpush1.msra.mxu0 %v1689
    %1708 = vmatprep.subr.mxu0 0.0
    %1709 = vmatpush1.msra.mxu0 %v1690
    %1710 = vmatprep.subr.mxu0 0.0
    %1711 = vmatpush1.msra.mxu0 %v1691
    %1712 = vmatprep.subr.mxu0 0.0
    %1713 = vmatpush1.msra.mxu0 %v1692
    %1714 = vmatprep.subr.mxu0 0.0
    %1715 = vmatpush1.msra.mxu0 0.0
    %1716 = vmatprep.subr.mxu0 0.0
    %1717 = vmatpush1.msra.mxu0 0.0
    %1718 = vmatprep.subr.mxu0 0.0
    %1719 = vmatpush1.msra.mxu0 0.0
    %1720 = vmatprep.subr.mxu0 0.0
    %1721 = vmatpush1.msra.mxu0 0.0
    %1722 = vmatprep.subr.mxu0 0.0
    %1723 = vmatpush1.msra.mxu0 0.0
    %1724 = vmatprep.subr.mxu0 0.0
    %1725 = vmatpush1.msra.mxu0 0.0
    %1726 = vmatprep.subr.mxu0 0.0
    %1727 = vmatpush1.msra.mxu0 0.0
    %1728 = vmatprep.subr.mxu0 0.0
    %1729 = vmatpush1.msra.mxu0 0.0
    %1730 = vmatprep.subr.mxu0 0.0
    %1731 = vmatpush1.msra.mxu0 0.0
    %1732 = vmatprep.subr.mxu0 0.0
    %1733 = vmatpush1.msra.mxu0 0.0
    %1734 = vmatprep.subr.mxu0 0.0
    %1735 = vmatpush1.msra.mxu0 0.0
    %1736 = vmatprep.subr.mxu0 0.0
    %1737 = vmatpush1.msra.mxu0 0.0
    %1738 = vmatprep.subr.mxu0 0.0
    %1739 = vmatpush1.msra.mxu0 0.0
    %1740 = vmatprep.subr.mxu0 0.0
    %1741 = vmatpush1.msra.mxu0 0.0
    %1742 = vmatprep.subr.mxu0 0.0
    %1743 = vmatpush1.msra.mxu0 0.0
    %1744 = vmatprep.subr.mxu0 0.0
    %1745 = vmatpush1.msra.mxu0 0.0
    %1746 = vmatprep.subr.mxu0 0.0
    %1747 = vmatpush1.msra.mxu0 0.0
    %1748 = vmatprep.subr.mxu0 0.0
    %1749 = vmatpush1.msra.mxu0 0.0
    %1750 = vmatprep.subr.mxu0 0.0
    %1751 = vmatpush1.msra.mxu0 0.0
    %1752 = vmatprep.subr.mxu0 0.0
    %1753 = vmatpush1.msra.mxu0 0.0
    %1754 = vmatprep.subr.mxu0 0.0
    %1755 = vmatpush1.msra.mxu0 0.0
    %1756 = vmatprep.subr.mxu0 0.0
    %1757 = vmatpush1.msra.mxu0 0.0
    %1758 = vmatprep.subr.mxu0 0.0
    %1759 = vmatpush1.msra.mxu0 0.0
    %1760 = vmatprep.subr.mxu0 0.0
    %1761 = vmatpush1.msra.mxu0 0.0
    %1762 = vmatprep.subr.mxu0 0.0
    %1763 = vmatpush1.msra.mxu0 0.0
    %1764 = vmatprep.subr.mxu0 0.0
    %1765 = vmatpush1.msra.mxu0 0.0
    %1766 = vmatprep.subr.mxu0 0.0
    %1767 = vmatpush1.msra.mxu0 0.0
    %1768 = vmatprep.subr.mxu0 0.0
    %1769 = vmatpush1.msra.mxu0 0.0
    %1770 = vmatprep.mubr.f32.mxu0 0.0
    %1771 = vmatmul.mubr.f32.gmra.mrb[0].mxu0 %v1701
    %v1772 = vpop.f32.mrb[0].mxu0
    %v1773 = vadd.f32 %v1698, %v1772
    %v1774 = vpop.f32.mrb[0].mxu0
    %1775 = vmatprep.mubr.f32.mxu0 0.0
    %1776 = vmatmul.mubr.f32.gmra.mrb[0].mxu0 %v1704
    %v1777 = vpop.f32.mrb[0].mxu0
    %v1778 = vadd.f32 %v1698, %v1777
    %v1779 = vpop.f32.mrb[0].mxu0
    %1780 = vdwg.mxu0
    %v1781 = vmax.f32 %v1773, 0.0
    %v1782 = vmax.f32 %v1778, 0.0
    %v1783 = vld [vmem:[%s14] sm:$0xff]
    %v1784 = vld [vmem:[%s14 + $0x8] sm:$0xff]
    %v1785 = vld [vmem:[%s14 + $0x10] sm:$0xff]
    %v1786 = vld [vmem:[%s14 + $0x18] sm:$0xff]
    %v1787 = vld [vmem:[%s14 + $0x20] sm:$0xff]
    %v1788 = vld [vmem:[%s14 + $0x28] sm:$0xff]
    %v1789 = vld [vmem:[%s14 + $0x30] sm:$0xff]
    %v1790 = vld [vmem:[%s14 + $0x38] sm:$0xff]
    %v1791 = vld [vmem:[%s15] sm:$0x1]
    %v1793 = vlaneseq
    %v1794 = vshrl.u32 %v1793, 7
    %v1795 = vsub.s32 0, %v1794
    %v1796 = vrot.slane %v1791, %v1795
    %vm1798 = vcmask 523264
    %v1800 = vsel %vm1798, %v1781, 0
    %v1803 = vsel %vm1798, %v1782, 0
    %1805 = vmatprep.subr.mxu0 0.0
    %1806 = vmatpush1.msra.mxu0 %v1783
    %1807 = vmatprep.subr.mxu0 0.0
    %1808 = vmatpush1.msra.mxu0 %v1784
    %1809 = vmatprep.subr.mxu0 0.0
    %1810 = vmatpush1.msra.mxu0 %v1785
    %1811 = vmatprep.subr.mxu0 0.0
    %1812 = vmatpush1.msra.mxu0 %v1786
    %1813 = vmatprep.subr.mxu0 0.0
    %1814 = vmatpush1.msra.mxu0 %v1787
    %1815 = vmatprep.subr.mxu0 0.0
    %1816 = vmatpush1.msra.mxu0 %v1788
    %1817 = vmatprep.subr.mxu0 0.0
    %1818 = vmatpush1.msra.mxu0 %v1789
    %1819 = vmatprep.subr.mxu0 0.0
    %1820 = vmatpush1.msra.mxu0 %v1790
    %1821 = vmatprep.subr.mxu0 0.0
    %1822 = vmatpush1.msra.mxu0 0.0
    %1823 = vmatprep.subr.mxu0 0.0
    %1824 = vmatpush1.msra.mxu0 0.0
    %1825 = vmatprep.subr.mxu0 0.0
    %1826 = vmatpush1.msra.mxu0 0.0
    %1827 = vmatprep.subr.mxu0 0.0
    %1828 = vmatpush1.msra.mxu0 0.0
    %1829 = vmatprep.subr.mxu0 0.0
    %1830 = vmatpush1.msra.mxu0 0.0
    %1831 = vmatprep.subr.mxu0 0.0
    %1832 = vmatpush1.msra.mxu0 0.0
    %1833 = vmatprep.subr.mxu0 0.0
    %1834 = vmatpush1.msra.mxu0 0.0
    %1835 = vmatprep.subr.mxu0 0.0
    %1836 = vmatpush1.msra.mxu0 0.0
    %1837 = vmatprep.subr.mxu0 0.0
    %1838 = vmatpush1.msra.mxu0 0.0
    %1839 = vmatprep.subr.mxu0 0.0
    %1840 = vmatpush1.msra.mxu0 0.0
    %1841 = vmatprep.subr.mxu0 0.0
    %1842 = vmatpush1.msra.mxu0 0.0
    %1843 = vmatprep.subr.mxu0 0.0
    %1844 = vmatpush1.msra.mxu0 0.0
    %1845 = vmatprep.subr.mxu0 0.0
    %1846 = vmatpush1.msra.mxu0 0.0
    %1847 = vmatprep.subr.mxu0 0.0
    %1848 = vmatpush1.msra.mxu0 0.0
    %1849 = vmatprep.subr.mxu0 0.0
    %1850 = vmatpush1.msra.mxu0 0.0
    %1851 = vmatprep.subr.mxu0 0.0
    %1852 = vmatpush1.msra.mxu0 0.0
    %1853 = vmatprep.subr.mxu0 0.0
    %1854 = vmatpush1.msra.mxu0 0.0
    %1855 = vmatprep.subr.mxu0 0.0
    %1856 = vmatpush1.msra.mxu0 0.0
    %1857 = vmatprep.subr.mxu0 0.0
    %1858 = vmatpush1.msra.mxu0 0.0
    %1859 = vmatprep.subr.mxu0 0.0
    %1860 = vmatpush1.msra.mxu0 0.0
    %1861 = vmatprep.subr.mxu0 0.0
    %1862 = vmatpush1.msra.mxu0 0.0
    %1863 = vmatprep.subr.mxu0 0.0
    %1864 = vmatpush1.msra.mxu0 0.0
    %1865 = vmatprep.subr.mxu0 0.0
    %1866 = vmatpush1.msra.mxu0 0.0
    %1867 = vmatprep.subr.mxu0 0.0
    %1868 = vmatpush1.msra.mxu0 0.0
    %1869 = vmatprep.mubr.f32.mxu0 0.0
    %1870 = vmatmul.mubr.f32.gmra.mrb[0].mxu0 %v1800
    %v1871 = vpop.f32.mrb[0].mxu0
    %v1872 = vadd.f32 %v1796, %v1871
    %v1873 = vpop.f32.mrb[0].mxu0
    %1874 = vmatprep.mubr.f32.mxu0 0.0
    %1875 = vmatmul.mubr.f32.gmra.mrb[0].mxu0 %v1803
    %v1876 = vpop.f32.mrb[0].mxu0
    %v1877 = vadd.f32 %v1796, %v1876
    %v1878 = vpop.f32.mrb[0].mxu0
    %1879 = vdwg.mxu0
    %v1880 = vadd.f32 %v1687, %v1872
    %v1881 = vadd.f32 %v1688, %v1877
    %v1882 = vld [vmem:[%s10] sm:$0x1]
    %v1883 = vld [vmem:[%s11] sm:$0x1]
    %v1884 = vsel %vm245, %v1880, 0.0
    %1885 = vadd.xlane.f32.xlu0 %v1884
    %v1886 = vpop.xlane.xlu0 %1885
    %v1887 = vsel %vm245, %v1881, 0.0
    %1888 = vadd.xlane.f32.xlu0 %v1887
    %v1889 = vpop.xlane.xlu0 %1888
    %v1890 = vmul.f32 %v1886, %v1652
    %v1891 = vmul.f32 %v1889, %v1652
    %v1892 = vsub.f32 %v1880, %v1890
    %v1893 = vsub.f32 %v1881, %v1891
    %v1894 = vmul.f32 %v1892, %v1892
    %v1895 = vmul.f32 %v1893, %v1893
    %v1896 = vsel %vm245, %v1894, 0.0
    %1897 = vadd.xlane.f32.xlu0 %v1896
    %v1898 = vpop.xlane.xlu0 %1897
    %v1899 = vsel %vm245, %v1895, 0.0
    %1900 = vadd.xlane.f32.xlu0 %v1899
    %v1901 = vpop.xlane.xlu0 %1900
    %v1902 = vmul.f32 %v1898, %v1652
    %v1903 = vmul.f32 %v1901, %v1652
    %v1904 = vadd.f32 %v1902, 1e-05
    %v1905 = vadd.f32 %v1903, 1e-05
    %v1906 = vrsqrt.pop %v1904
    %v1907 = vrsqrt.pop %v1905
    %v1908 = vmul.f32 %v1892, %v1906
    %v1909 = vmul.f32 %v1893, %v1907
    %v1911 = vlaneseq
    %v1912 = vshrl.u32 %v1911, 7
    %v1913 = vsub.s32 0, %v1912
    %v1914 = vrot.slane %v1882, %v1913
    %v1916 = vmul.f32 %v1908, %v1914
    %v1917 = vmul.f32 %v1909, %v1914
    %v1919 = vlaneseq
    %v1920 = vshrl.u32 %v1919, 7
    %v1921 = vsub.s32 0, %v1920
    %v1922 = vrot.slane %v1883, %v1921
    %v1924 = vadd.f32 %v1916, %v1922
    %v1925 = vadd.f32 %v1917, %v1922
    %s1926 = scalar_lea.vmem %s4, 96
    %v1927 = vld [vmem:[%s1926] sm:$0xff]
    %v1928 = vld [vmem:[%s1926 + $0x8] sm:$0xff]
    %v1929 = vld [vmem:[%s1926 + $0x10] sm:$0xff]
    %v1930 = vld [vmem:[%s1926 + $0x18] sm:$0xff]
    %v1931 = vld [vmem:[%s1926 + $0x20] sm:$0xff]
    %v1932 = vld [vmem:[%s1926 + $0x28] sm:$0xff]
    %v1933 = vld [vmem:[%s1926 + $0x30] sm:$0xff]
    %v1934 = vld [vmem:[%s1926 + $0x38] sm:$0xff]
    %v1935 = vld [vmem:[%s1926 + $0x40] sm:$0xff]
    %v1936 = vld [vmem:[%s1926 + $0x48] sm:$0xff]
    %v1937 = vld [vmem:[%s1926 + $0x50] sm:$0xff]
    %v1938 = vld [vmem:[%s1926 + $0x58] sm:$0xff]
    %s1939 = scalar_lea.vmem %s5, 96
    %v1940 = vld [vmem:[%s1939] sm:$0xff]
    %v1941 = vld [vmem:[%s1939 + $0x8] sm:$0xff]
    %v1942 = vld [vmem:[%s1939 + $0x10] sm:$0xff]
    %v1943 = vld [vmem:[%s1939 + $0x18] sm:$0xff]
    %v1944 = vld [vmem:[%s1939 + $0x20] sm:$0xff]
    %v1945 = vld [vmem:[%s1939 + $0x28] sm:$0xff]
    %v1946 = vld [vmem:[%s1939 + $0x30] sm:$0xff]
    %v1947 = vld [vmem:[%s1939 + $0x38] sm:$0xff]
    %v1948 = vld [vmem:[%s1939 + $0x40] sm:$0xff]
    %v1949 = vld [vmem:[%s1939 + $0x48] sm:$0xff]
    %v1950 = vld [vmem:[%s1939 + $0x50] sm:$0xff]
    %v1951 = vld [vmem:[%s1939 + $0x58] sm:$0xff]
    %1953 = vset.pattern.permute.xlu0 0
    %1954 = vperm.xlu0 %1953, %v1940
    %v1955 = vpop.permute.xlu0 %1954
    %1958 = vset.pattern.permute.xlu0 0
    %1959 = vperm.xlu0 %1958, %v1941
    %v1960 = vpop.permute.xlu0 %1959
    %1963 = vset.pattern.permute.xlu0 0
    %1964 = vperm.xlu0 %1963, %v1942
    %v1965 = vpop.permute.xlu0 %1964
    %1968 = vset.pattern.permute.xlu0 0
    %1969 = vperm.xlu0 %1968, %v1943
    %v1970 = vpop.permute.xlu0 %1969
    %1973 = vset.pattern.permute.xlu0 0
    %1974 = vperm.xlu0 %1973, %v1944
    %v1975 = vpop.permute.xlu0 %1974
    %1978 = vset.pattern.permute.xlu0 0
    %1979 = vperm.xlu0 %1978, %v1945
    %v1980 = vpop.permute.xlu0 %1979
    %1983 = vset.pattern.permute.xlu0 0
    %1984 = vperm.xlu0 %1983, %v1946
    %v1985 = vpop.permute.xlu0 %1984
    %1988 = vset.pattern.permute.xlu0 0
    %1989 = vperm.xlu0 %1988, %v1947
    %v1990 = vpop.permute.xlu0 %1989
    %1993 = vset.pattern.permute.xlu0 0
    %1994 = vperm.xlu0 %1993, %v1948
    %v1995 = vpop.permute.xlu0 %1994
    %1998 = vset.pattern.permute.xlu0 0
    %1999 = vperm.xlu0 %1998, %v1949
    %v2000 = vpop.permute.xlu0 %1999
    %2003 = vset.pattern.permute.xlu0 0
    %2004 = vperm.xlu0 %2003, %v1950
    %v2005 = vpop.permute.xlu0 %2004
    %2008 = vset.pattern.permute.xlu0 0
    %2009 = vperm.xlu0 %2008, %v1951
    %v2010 = vpop.permute.xlu0 %2009
    %v2013 = vsel %vm245, %v1927, 0
    %v2016 = vsel %vm245, %v1928, 0
    %v2019 = vsel %vm245, %v1929, 0
    %v2022 = vsel %vm245, %v1930, 0
    %v2025 = vsel %vm245, %v1931, 0
    %v2028 = vsel %vm245, %v1932, 0
    %v2031 = vsel %vm245, %v1933, 0
    %v2034 = vsel %vm245, %v1934, 0
    %v2037 = vsel %vm245, %v1935, 0
    %v2040 = vsel %vm245, %v1936, 0
    %v2043 = vsel %vm245, %v1937, 0
    %v2046 = vsel %vm245, %v1938, 0
    %v2049 = vsel %vm245, %v1924, 0
    %v2052 = vsel %vm245, %v1925, 0
    %2054 = vmatprep.subr.mxu0 0.0
    %2055 = vmatpush1.xpose.msra.mxu0 %v2049
    %2056 = vmatprep.subr.mxu0 0.0
    %2057 = vmatpush1.xpose.msra.mxu0 %v2052
    %2058 = vmatprep.subr.mxu0 0.0
    %2059 = vmatpush1.xpose.msra.mxu0 0.0
    %2060 = vmatprep.subr.mxu0 0.0
    %2061 = vmatpush1.xpose.msra.mxu0 0.0
    %2062 = vmatprep.subr.mxu0 0.0
    %2063 = vmatpush1.xpose.msra.mxu0 0.0
    %2064 = vmatprep.subr.mxu0 0.0
    %2065 = vmatpush1.xpose.msra.mxu0 0.0
    %2066 = vmatprep.subr.mxu0 0.0
    %2067 = vmatpush1.xpose.msra.mxu0 0.0
    %2068 = vmatprep.subr.mxu0 0.0
    %2069 = vmatpush1.xpose.msra.mxu0 0.0
    %2070 = vmatprep.subr.mxu0 0.0
    %2071 = vmatpush1.xpose.msra.mxu0 0.0
    %2072 = vmatprep.subr.mxu0 0.0
    %2073 = vmatpush1.xpose.msra.mxu0 0.0
    %2074 = vmatprep.subr.mxu0 0.0
    %2075 = vmatpush1.xpose.msra.mxu0 0.0
    %2076 = vmatprep.subr.mxu0 0.0
    %2077 = vmatpush1.xpose.msra.mxu0 0.0
    %2078 = vmatprep.subr.mxu0 0.0
    %2079 = vmatpush1.xpose.msra.mxu0 0.0
    %2080 = vmatprep.subr.mxu0 0.0
    %2081 = vmatpush1.xpose.msra.mxu0 0.0
    %2082 = vmatprep.subr.mxu0 0.0
    %2083 = vmatpush1.xpose.msra.mxu0 0.0
    %2084 = vmatprep.subr.mxu0 0.0
    %2085 = vmatpush1.xpose.msra.mxu0 0.0
    %2086 = vmatprep.subr.mxu0 0.0
    %2087 = vmatpush1.xpose.msra.mxu0 0.0
    %2088 = vmatprep.subr.mxu0 0.0
    %2089 = vmatpush1.xpose.msra.mxu0 0.0
    %2090 = vmatprep.subr.mxu0 0.0
    %2091 = vmatpush1.xpose.msra.mxu0 0.0
    %2092 = vmatprep.subr.mxu0 0.0
    %2093 = vmatpush1.xpose.msra.mxu0 0.0
    %2094 = vmatprep.subr.mxu0 0.0
    %2095 = vmatpush1.xpose.msra.mxu0 0.0
    %2096 = vmatprep.subr.mxu0 0.0
    %2097 = vmatpush1.xpose.msra.mxu0 0.0
    %2098 = vmatprep.subr.mxu0 0.0
    %2099 = vmatpush1.xpose.msra.mxu0 0.0
    %2100 = vmatprep.subr.mxu0 0.0
    %2101 = vmatpush1.xpose.msra.mxu0 0.0
    %2102 = vmatprep.subr.mxu0 0.0
    %2103 = vmatpush1.xpose.msra.mxu0 0.0
    %2104 = vmatprep.subr.mxu0 0.0
    %2105 = vmatpush1.xpose.msra.mxu0 0.0
    %2106 = vmatprep.subr.mxu0 0.0
    %2107 = vmatpush1.xpose.msra.mxu0 0.0
    %2108 = vmatprep.subr.mxu0 0.0
    %2109 = vmatpush1.xpose.msra.mxu0 0.0
    %2110 = vmatprep.subr.mxu0 0.0
    %2111 = vmatpush1.xpose.msra.mxu0 0.0
    %2112 = vmatprep.subr.mxu0 0.0
    %2113 = vmatpush1.xpose.msra.mxu0 0.0
    %2114 = vmatprep.subr.mxu0 0.0
    %2115 = vmatpush1.xpose.msra.mxu0 0.0
    %2116 = vmatprep.subr.mxu0 0.0
    %2117 = vmatpush1.xpose.msra.mxu0 0.0
    %2118 = vmatprep.mubr.f32.mxu0 0.0
    %2119 = vmatmul.mubr.f32.gmra.mrb[0].mxu0 %v2013
    %v2120 = vpop.f32.mrb[0].mxu0
    %v2121 = vadd.f32 %v1955, %v2120
    %v2122 = vpop.f32.mrb[0].mxu0
    %2123 = vmatprep.mubr.f32.mxu0 0.0
    %2124 = vmatmul.mubr.f32.gmra.mrb[0].mxu0 %v2016
    %v2125 = vpop.f32.mrb[0].mxu0
    %v2126 = vadd.f32 %v1960, %v2125
    %v2127 = vpop.f32.mrb[0].mxu0
    %2128 = vmatprep.mubr.f32.mxu0 0.0
    %2129 = vmatmul.mubr.f32.gmra.mrb[0].mxu0 %v2019
    %v2130 = vpop.f32.mrb[0].mxu0
    %v2131 = vadd.f32 %v1965, %v2130
    %v2132 = vpop.f32.mrb[0].mxu0
    %2133 = vmatprep.mubr.f32.mxu0 0.0
    %2134 = vmatmul.mubr.f32.gmra.mrb[0].mxu0 %v2022
    %v2135 = vpop.f32.mrb[0].mxu0
    %v2136 = vadd.f32 %v1970, %v2135
    %v2137 = vpop.f32.mrb[0].mxu0
    %2138 = vmatprep.mubr.f32.mxu0 0.0
    %2139 = vmatmul.mubr.f32.gmra.mrb[0].mxu0 %v2025
    %v2140 = vpop.f32.mrb[0].mxu0
    %v2141 = vadd.f32 %v1975, %v2140
    %v2142 = vpop.f32.mrb[0].mxu0
    %2143 = vmatprep.mubr.f32.mxu0 0.0
    %2144 = vmatmul.mubr.f32.gmra.mrb[0].mxu0 %v2028
    %v2145 = vpop.f32.mrb[0].mxu0
    %v2146 = vadd.f32 %v1980, %v2145
    %v2147 = vpop.f32.mrb[0].mxu0
    %2148 = vmatprep.mubr.f32.mxu0 0.0
    %2149 = vmatmul.mubr.f32.gmra.mrb[0].mxu0 %v2031
    %v2150 = vpop.f32.mrb[0].mxu0
    %v2151 = vadd.f32 %v1985, %v2150
    %v2152 = vpop.f32.mrb[0].mxu0
    %2153 = vmatprep.mubr.f32.mxu0 0.0
    %2154 = vmatmul.mubr.f32.gmra.mrb[0].mxu0 %v2034
    %v2155 = vpop.f32.mrb[0].mxu0
    %v2156 = vadd.f32 %v1990, %v2155
    %v2157 = vpop.f32.mrb[0].mxu0
    %2158 = vmatprep.mubr.f32.mxu0 0.0
    %2159 = vmatmul.mubr.f32.gmra.mrb[0].mxu0 %v2037
    %v2160 = vpop.f32.mrb[0].mxu0
    %v2161 = vadd.f32 %v1995, %v2160
    %v2162 = vpop.f32.mrb[0].mxu0
    %2163 = vmatprep.mubr.f32.mxu0 0.0
    %2164 = vmatmul.mubr.f32.gmra.mrb[0].mxu0 %v2040
    %v2165 = vpop.f32.mrb[0].mxu0
    %v2166 = vadd.f32 %v2000, %v2165
    %v2167 = vpop.f32.mrb[0].mxu0
    %2168 = vmatprep.mubr.f32.mxu0 0.0
    %2169 = vmatmul.mubr.f32.gmra.mrb[0].mxu0 %v2043
    %v2170 = vpop.f32.mrb[0].mxu0
    %v2171 = vadd.f32 %v2005, %v2170
    %v2172 = vpop.f32.mrb[0].mxu0
    %2173 = vmatprep.mubr.f32.mxu0 0.0
    %2174 = vmatmul.mubr.f32.gmra.mrb[0].mxu0 %v2046
    %v2175 = vpop.f32.mrb[0].mxu0
    %v2176 = vadd.f32 %v2010, %v2175
    %v2177 = vpop.f32.mrb[0].mxu0
    %2178 = vdwg.mxu0
    %2179 = vxpose.xlu0.b32.start [1/16] %v2121, 128
    %2180 = vxpose.xlu0.b32.cont [2/16] 0.0, 128
    %2181 = vxpose.xlu0.b32.cont [3/16] 0.0, 128
    %2182 = vxpose.xlu0.b32.cont [4/16] 0.0, 128
    %2183 = vxpose.xlu0.b32.cont [5/16] 0.0, 128
    %2184 = vxpose.xlu0.b32.cont [6/16] 0.0, 128
    %2185 = vxpose.xlu0.b32.cont [7/16] 0.0, 128
    %2186 = vxpose.xlu0.b32.cont [8/16] 0.0, 128
    %2187 = vxpose.xlu0.b32.cont [9/16] 0.0, 128
    %2188 = vxpose.xlu0.b32.cont [10/16] 0.0, 128
    %2189 = vxpose.xlu0.b32.cont [11/16] 0.0, 128
    %2190 = vxpose.xlu0.b32.cont [12/16] 0.0, 128
    %2191 = vxpose.xlu0.b32.cont [13/16] 0.0, 128
    %2192 = vxpose.xlu0.b32.cont [14/16] 0.0, 128
    %2193 = vxpose.xlu0.b32.cont [15/16] 0.0, 128
    %2194 = vxpose.xlu0.b32.end [16/16] 0.0, 128
    %v2195 = vpop.trf.xlu0
    %v2196 = vpop.trf.xlu0
    %v2197 = vpop.trf.xlu0
    %v2198 = vpop.trf.xlu0
    %v2199 = vpop.trf.xlu0
    %v2200 = vpop.trf.xlu0
    %v2201 = vpop.trf.xlu0
    %v2202 = vpop.trf.xlu0
    %v2203 = vpop.trf.xlu0
    %v2204 = vpop.trf.xlu0
    %v2205 = vpop.trf.xlu0
    %v2206 = vpop.trf.xlu0
    %v2207 = vpop.trf.xlu0
    %v2208 = vpop.trf.xlu0
    %v2209 = vpop.trf.xlu0
    %v2210 = vpop.trf.xlu0
    %2211 = vxpose.xlu0.b32.start [1/16] %v2126, 128
    %2212 = vxpose.xlu0.b32.cont [2/16] 0.0, 128
    %2213 = vxpose.xlu0.b32.cont [3/16] 0.0, 128
    %2214 = vxpose.xlu0.b32.cont [4/16] 0.0, 128
    %2215 = vxpose.xlu0.b32.cont [5/16] 0.0, 128
    %2216 = vxpose.xlu0.b32.cont [6/16] 0.0, 128
    %2217 = vxpose.xlu0.b32.cont [7/16] 0.0, 128
    %2218 = vxpose.xlu0.b32.cont [8/16] 0.0, 128
    %2219 = vxpose.xlu0.b32.cont [9/16] 0.0, 128
    %2220 = vxpose.xlu0.b32.cont [10/16] 0.0, 128
    %2221 = vxpose.xlu0.b32.cont [11/16] 0.0, 128
    %2222 = vxpose.xlu0.b32.cont [12/16] 0.0, 128
    %2223 = vxpose.xlu0.b32.cont [13/16] 0.0, 128
    %2224 = vxpose.xlu0.b32.cont [14/16] 0.0, 128
    %2225 = vxpose.xlu0.b32.cont [15/16] 0.0, 128
    %2226 = vxpose.xlu0.b32.end [16/16] 0.0, 128
    %v2227 = vpop.trf.xlu0
    %v2228 = vpop.trf.xlu0
    %v2229 = vpop.trf.xlu0
    %v2230 = vpop.trf.xlu0
    %v2231 = vpop.trf.xlu0
    %v2232 = vpop.trf.xlu0
    %v2233 = vpop.trf.xlu0
    %v2234 = vpop.trf.xlu0
    %v2235 = vpop.trf.xlu0
    %v2236 = vpop.trf.xlu0
    %v2237 = vpop.trf.xlu0
    %v2238 = vpop.trf.xlu0
    %v2239 = vpop.trf.xlu0
    %v2240 = vpop.trf.xlu0
    %v2241 = vpop.trf.xlu0
    %v2242 = vpop.trf.xlu0
    %2243 = vxpose.xlu0.b32.start [1/16] %v2131, 128
    %2244 = vxpose.xlu0.b32.cont [2/16] 0.0, 128
    %2245 = vxpose.xlu0.b32.cont [3/16] 0.0, 128
    %2246 = vxpose.xlu0.b32.cont [4/16] 0.0, 128
    %2247 = vxpose.xlu0.b32.cont [5/16] 0.0, 128
    %2248 = vxpose.xlu0.b32.cont [6/16] 0.0, 128
    %2249 = vxpose.xlu0.b32.cont [7/16] 0.0, 128
    %2250 = vxpose.xlu0.b32.cont [8/16] 0.0, 128
    %2251 = vxpose.xlu0.b32.cont [9/16] 0.0, 128
    %2252 = vxpose.xlu0.b32.cont [10/16] 0.0, 128
    %2253 = vxpose.xlu0.b32.cont [11/16] 0.0, 128
    %2254 = vxpose.xlu0.b32.cont [12/16] 0.0, 128
    %2255 = vxpose.xlu0.b32.cont [13/16] 0.0, 128
    %2256 = vxpose.xlu0.b32.cont [14/16] 0.0, 128
    %2257 = vxpose.xlu0.b32.cont [15/16] 0.0, 128
    %2258 = vxpose.xlu0.b32.end [16/16] 0.0, 128
    %v2259 = vpop.trf.xlu0
    %v2260 = vpop.trf.xlu0
    %v2261 = vpop.trf.xlu0
    %v2262 = vpop.trf.xlu0
    %v2263 = vpop.trf.xlu0
    %v2264 = vpop.trf.xlu0
    %v2265 = vpop.trf.xlu0
    %v2266 = vpop.trf.xlu0
    %v2267 = vpop.trf.xlu0
    %v2268 = vpop.trf.xlu0
    %v2269 = vpop.trf.xlu0
    %v2270 = vpop.trf.xlu0
    %v2271 = vpop.trf.xlu0
    %v2272 = vpop.trf.xlu0
    %v2273 = vpop.trf.xlu0
    %v2274 = vpop.trf.xlu0
    %2275 = vxpose.xlu0.b32.start [1/16] %v2136, 128
    %2276 = vxpose.xlu0.b32.cont [2/16] 0.0, 128
    %2277 = vxpose.xlu0.b32.cont [3/16] 0.0, 128
    %2278 = vxpose.xlu0.b32.cont [4/16] 0.0, 128
    %2279 = vxpose.xlu0.b32.cont [5/16] 0.0, 128
    %2280 = vxpose.xlu0.b32.cont [6/16] 0.0, 128
    %2281 = vxpose.xlu0.b32.cont [7/16] 0.0, 128
    %2282 = vxpose.xlu0.b32.cont [8/16] 0.0, 128
    %2283 = vxpose.xlu0.b32.cont [9/16] 0.0, 128
    %2284 = vxpose.xlu0.b32.cont [10/16] 0.0, 128
    %2285 = vxpose.xlu0.b32.cont [11/16] 0.0, 128
    %2286 = vxpose.xlu0.b32.cont [12/16] 0.0, 128
    %2287 = vxpose.xlu0.b32.cont [13/16] 0.0, 128
    %2288 = vxpose.xlu0.b32.cont [14/16] 0.0, 128
    %2289 = vxpose.xlu0.b32.cont [15/16] 0.0, 128
    %2290 = vxpose.xlu0.b32.end [16/16] 0.0, 128
    %v2291 = vpop.trf.xlu0
    %v2292 = vpop.trf.xlu0
    %v2293 = vpop.trf.xlu0
    %v2294 = vpop.trf.xlu0
    %v2295 = vpop.trf.xlu0
    %v2296 = vpop.trf.xlu0
    %v2297 = vpop.trf.xlu0
    %v2298 = vpop.trf.xlu0
    %v2299 = vpop.trf.xlu0
    %v2300 = vpop.trf.xlu0
    %v2301 = vpop.trf.xlu0
    %v2302 = vpop.trf.xlu0
    %v2303 = vpop.trf.xlu0
    %v2304 = vpop.trf.xlu0
    %v2305 = vpop.trf.xlu0
    %v2306 = vpop.trf.xlu0
    %v2308 = vsel %vm541, %v2195, 0
    %v2311 = vsel %vm541, %v2196, 0
    %2313 = vmatprep.subr.mxu0 0.0
    %2314 = vmatpush1.msra.mxu0 %v2141
    %2315 = vmatprep.subr.mxu0 0.0
    %2316 = vmatpush1.msra.mxu0 0.0
    %2317 = vmatprep.subr.mxu0 0.0
    %2318 = vmatpush1.msra.mxu0 0.0
    %2319 = vmatprep.subr.mxu0 0.0
    %2320 = vmatpush1.msra.mxu0 0.0
    %2321 = vmatprep.subr.mxu0 0.0
    %2322 = vmatpush1.msra.mxu0 0.0
    %2323 = vmatprep.subr.mxu0 0.0
    %2324 = vmatpush1.msra.mxu0 0.0
    %2325 = vmatprep.subr.mxu0 0.0
    %2326 = vmatpush1.msra.mxu0 0.0
    %2327 = vmatprep.subr.mxu0 0.0
    %2328 = vmatpush1.msra.mxu0 0.0
    %2329 = vmatprep.subr.mxu0 0.0
    %2330 = vmatpush1.msra.mxu0 0.0
    %2331 = vmatprep.subr.mxu0 0.0
    %2332 = vmatpush1.msra.mxu0 0.0
    %2333 = vmatprep.subr.mxu0 0.0
    %2334 = vmatpush1.msra.mxu0 0.0
    %2335 = vmatprep.subr.mxu0 0.0
    %2336 = vmatpush1.msra.mxu0 0.0
    %2337 = vmatprep.subr.mxu0 0.0
    %2338 = vmatpush1.msra.mxu0 0.0
    %2339 = vmatprep.subr.mxu0 0.0
    %2340 = vmatpush1.msra.mxu0 0.0
    %2341 = vmatprep.subr.mxu0 0.0
    %2342 = vmatpush1.msra.mxu0 0.0
    %2343 = vmatprep.subr.mxu0 0.0
    %2344 = vmatpush1.msra.mxu0 0.0
    %2345 = vmatprep.subr.mxu0 0.0
    %2346 = vmatpush1.msra.mxu0 0.0
    %2347 = vmatprep.subr.mxu0 0.0
    %2348 = vmatpush1.msra.mxu0 0.0
    %2349 = vmatprep.subr.mxu0 0.0
    %2350 = vmatpush1.msra.mxu0 0.0
    %2351 = vmatprep.subr.mxu0 0.0
    %2352 = vmatpush1.msra.mxu0 0.0
    %2353 = vmatprep.subr.mxu0 0.0
    %2354 = vmatpush1.msra.mxu0 0.0
    %2355 = vmatprep.subr.mxu0 0.0
    %2356 = vmatpush1.msra.mxu0 0.0
    %2357 = vmatprep.subr.mxu0 0.0
    %2358 = vmatpush1.msra.mxu0 0.0
    %2359 = vmatprep.subr.mxu0 0.0
    %2360 = vmatpush1.msra.mxu0 0.0
    %2361 = vmatprep.subr.mxu0 0.0
    %2362 = vmatpush1.msra.mxu0 0.0
    %2363 = vmatprep.subr.mxu0 0.0
    %2364 = vmatpush1.msra.mxu0 0.0
    %2365 = vmatprep.subr.mxu0 0.0
    %2366 = vmatpush1.msra.mxu0 0.0
    %2367 = vmatprep.subr.mxu0 0.0
    %2368 = vmatpush1.msra.mxu0 0.0
    %2369 = vmatprep.subr.mxu0 0.0
    %2370 = vmatpush1.msra.mxu0 0.0
    %2371 = vmatprep.subr.mxu0 0.0
    %2372 = vmatpush1.msra.mxu0 0.0
    %2373 = vmatprep.subr.mxu0 0.0
    %2374 = vmatpush1.msra.mxu0 0.0
    %2375 = vmatprep.subr.mxu0 0.0
    %2376 = vmatpush1.msra.mxu0 0.0
    %2377 = vmatprep.mubr.f32.mxu0 0.0
    %2378 = vmatmul.mubr.f32.gmra.mrb[0].mxu0 %v2308
    %v2379 = vpop.f32.mrb[0].mxu0
    %v2380 = vadd.f32 %v159, %v2379
    %v2381 = vpop.f32.mrb[0].mxu0
    %2382 = vmatprep.mubr.f32.mxu0 0.0
    %2383 = vmatmul.mubr.f32.gmra.mrb[0].mxu0 %v2311
    %v2384 = vpop.f32.mrb[0].mxu0
    %v2385 = vadd.f32 %v160, %v2384
    %v2386 = vpop.f32.mrb[0].mxu0
    %2387 = vdwg.mxu0
    %v2389 = vsel %vm541, %v2227, 0
    %v2392 = vsel %vm541, %v2228, 0
    %2394 = vmatprep.subr.mxu0 0.0
    %2395 = vmatpush1.msra.mxu0 %v2146
    %2396 = vmatprep.subr.mxu0 0.0
    %2397 = vmatpush1.msra.mxu0 0.0
    %2398 = vmatprep.subr.mxu0 0.0
    %2399 = vmatpush1.msra.mxu0 0.0
    %2400 = vmatprep.subr.mxu0 0.0
    %2401 = vmatpush1.msra.mxu0 0.0
    %2402 = vmatprep.subr.mxu0 0.0
    %2403 = vmatpush1.msra.mxu0 0.0
    %2404 = vmatprep.subr.mxu0 0.0
    %2405 = vmatpush1.msra.mxu0 0.0
    %2406 = vmatprep.subr.mxu0 0.0
    %2407 = vmatpush1.msra.mxu0 0.0
    %2408 = vmatprep.subr.mxu0 0.0
    %2409 = vmatpush1.msra.mxu0 0.0
    %2410 = vmatprep.subr.mxu0 0.0
    %2411 = vmatpush1.msra.mxu0 0.0
    %2412 = vmatprep.subr.mxu0 0.0
    %2413 = vmatpush1.msra.mxu0 0.0
    %2414 = vmatprep.subr.mxu0 0.0
    %2415 = vmatpush1.msra.mxu0 0.0
    %2416 = vmatprep.subr.mxu0 0.0
    %2417 = vmatpush1.msra.mxu0 0.0
    %2418 = vmatprep.subr.mxu0 0.0
    %2419 = vmatpush1.msra.mxu0 0.0
    %2420 = vmatprep.subr.mxu0 0.0
    %2421 = vmatpush1.msra.mxu0 0.0
    %2422 = vmatprep.subr.mxu0 0.0
    %2423 = vmatpush1.msra.mxu0 0.0
    %2424 = vmatprep.subr.mxu0 0.0
    %2425 = vmatpush1.msra.mxu0 0.0
    %2426 = vmatprep.subr.mxu0 0.0
    %2427 = vmatpush1.msra.mxu0 0.0
    %2428 = vmatprep.subr.mxu0 0.0
    %2429 = vmatpush1.msra.mxu0 0.0
    %2430 = vmatprep.subr.mxu0 0.0
    %2431 = vmatpush1.msra.mxu0 0.0
    %2432 = vmatprep.subr.mxu0 0.0
    %2433 = vmatpush1.msra.mxu0 0.0
    %2434 = vmatprep.subr.mxu0 0.0
    %2435 = vmatpush1.msra.mxu0 0.0
    %2436 = vmatprep.subr.mxu0 0.0
    %2437 = vmatpush1.msra.mxu0 0.0
    %2438 = vmatprep.subr.mxu0 0.0
    %2439 = vmatpush1.msra.mxu0 0.0
    %2440 = vmatprep.subr.mxu0 0.0
    %2441 = vmatpush1.msra.mxu0 0.0
    %2442 = vmatprep.subr.mxu0 0.0
    %2443 = vmatpush1.msra.mxu0 0.0
    %2444 = vmatprep.subr.mxu0 0.0
    %2445 = vmatpush1.msra.mxu0 0.0
    %2446 = vmatprep.subr.mxu0 0.0
    %2447 = vmatpush1.msra.mxu0 0.0
    %2448 = vmatprep.subr.mxu0 0.0
    %2449 = vmatpush1.msra.mxu0 0.0
    %2450 = vmatprep.subr.mxu0 0.0
    %2451 = vmatpush1.msra.mxu0 0.0
    %2452 = vmatprep.subr.mxu0 0.0
    %2453 = vmatpush1.msra.mxu0 0.0
    %2454 = vmatprep.subr.mxu0 0.0
    %2455 = vmatpush1.msra.mxu0 0.0
    %2456 = vmatprep.subr.mxu0 0.0
    %2457 = vmatpush1.msra.mxu0 0.0
    %2458 = vmatprep.mubr.f32.mxu0 0.0
    %2459 = vmatmul.mubr.f32.gmra.mrb[0].mxu0 %v2389
    %v2460 = vpop.f32.mrb[0].mxu0
    %v2461 = vadd.f32 %v159, %v2460
    %v2462 = vpop.f32.mrb[0].mxu0
    %2463 = vmatprep.mubr.f32.mxu0 0.0
    %2464 = vmatmul.mubr.f32.gmra.mrb[0].mxu0 %v2392
    %v2465 = vpop.f32.mrb[0].mxu0
    %v2466 = vadd.f32 %v160, %v2465
    %v2467 = vpop.f32.mrb[0].mxu0
    %2468 = vdwg.mxu0
    %v2470 = vsel %vm541, %v2259, 0
    %v2473 = vsel %vm541, %v2260, 0
    %2475 = vmatprep.subr.mxu0 0.0
    %2476 = vmatpush1.msra.mxu0 %v2151
    %2477 = vmatprep.subr.mxu0 0.0
    %2478 = vmatpush1.msra.mxu0 0.0
    %2479 = vmatprep.subr.mxu0 0.0
    %2480 = vmatpush1.msra.mxu0 0.0
    %2481 = vmatprep.subr.mxu0 0.0
    %2482 = vmatpush1.msra.mxu0 0.0
    %2483 = vmatprep.subr.mxu0 0.0
    %2484 = vmatpush1.msra.mxu0 0.0
    %2485 = vmatprep.subr.mxu0 0.0
    %2486 = vmatpush1.msra.mxu0 0.0
    %2487 = vmatprep.subr.mxu0 0.0
    %2488 = vmatpush1.msra.mxu0 0.0
    %2489 = vmatprep.subr.mxu0 0.0
    %2490 = vmatpush1.msra.mxu0 0.0
    %2491 = vmatprep.subr.mxu0 0.0
    %2492 = vmatpush1.msra.mxu0 0.0
    %2493 = vmatprep.subr.mxu0 0.0
    %2494 = vmatpush1.msra.mxu0 0.0
    %2495 = vmatprep.subr.mxu0 0.0
    %2496 = vmatpush1.msra.mxu0 0.0
    %2497 = vmatprep.subr.mxu0 0.0
    %2498 = vmatpush1.msra.mxu0 0.0
    %2499 = vmatprep.subr.mxu0 0.0
    %2500 = vmatpush1.msra.mxu0 0.0
    %2501 = vmatprep.subr.mxu0 0.0
    %2502 = vmatpush1.msra.mxu0 0.0
    %2503 = vmatprep.subr.mxu0 0.0
    %2504 = vmatpush1.msra.mxu0 0.0
    %2505 = vmatprep.subr.mxu0 0.0
    %2506 = vmatpush1.msra.mxu0 0.0
    %2507 = vmatprep.subr.mxu0 0.0
    %2508 = vmatpush1.msra.mxu0 0.0
    %2509 = vmatprep.subr.mxu0 0.0
    %2510 = vmatpush1.msra.mxu0 0.0
    %2511 = vmatprep.subr.mxu0 0.0
    %2512 = vmatpush1.msra.mxu0 0.0
    %2513 = vmatprep.subr.mxu0 0.0
    %2514 = vmatpush1.msra.mxu0 0.0
    %2515 = vmatprep.subr.mxu0 0.0
    %2516 = vmatpush1.msra.mxu0 0.0
    %2517 = vmatprep.subr.mxu0 0.0
    %2518 = vmatpush1.msra.mxu0 0.0
    %2519 = vmatprep.subr.mxu0 0.0
    %2520 = vmatpush1.msra.mxu0 0.0
    %2521 = vmatprep.subr.mxu0 0.0
    %2522 = vmatpush1.msra.mxu0 0.0
    %2523 = vmatprep.subr.mxu0 0.0
    %2524 = vmatpush1.msra.mxu0 0.0
    %2525 = vmatprep.subr.mxu0 0.0
    %2526 = vmatpush1.msra.mxu0 0.0
    %2527 = vmatprep.subr.mxu0 0.0
    %2528 = vmatpush1.msra.mxu0 0.0
    %2529 = vmatprep.subr.mxu0 0.0
    %2530 = vmatpush1.msra.mxu0 0.0
    %2531 = vmatprep.subr.mxu0 0.0
    %2532 = vmatpush1.msra.mxu0 0.0
    %2533 = vmatprep.subr.mxu0 0.0
    %2534 = vmatpush1.msra.mxu0 0.0
    %2535 = vmatprep.subr.mxu0 0.0
    %2536 = vmatpush1.msra.mxu0 0.0
    %2537 = vmatprep.subr.mxu0 0.0
    %2538 = vmatpush1.msra.mxu0 0.0
    %2539 = vmatprep.mubr.f32.mxu0 0.0
    %2540 = vmatmul.mubr.f32.gmra.mrb[0].mxu0 %v2470
    %v2541 = vpop.f32.mrb[0].mxu0
    %v2542 = vadd.f32 %v159, %v2541
    %v2543 = vpop.f32.mrb[0].mxu0
    %2544 = vmatprep.mubr.f32.mxu0 0.0
    %2545 = vmatmul.mubr.f32.gmra.mrb[0].mxu0 %v2473
    %v2546 = vpop.f32.mrb[0].mxu0
    %v2547 = vadd.f32 %v160, %v2546
    %v2548 = vpop.f32.mrb[0].mxu0
    %2549 = vdwg.mxu0
    %v2551 = vsel %vm541, %v2291, 0
    %v2554 = vsel %vm541, %v2292, 0
    %2556 = vmatprep.subr.mxu0 0.0
    %2557 = vmatpush1.msra.mxu0 %v2156
    %2558 = vmatprep.subr.mxu0 0.0
    %2559 = vmatpush1.msra.mxu0 0.0
    %2560 = vmatprep.subr.mxu0 0.0
    %2561 = vmatpush1.msra.mxu0 0.0
    %2562 = vmatprep.subr.mxu0 0.0
    %2563 = vmatpush1.msra.mxu0 0.0
    %2564 = vmatprep.subr.mxu0 0.0
    %2565 = vmatpush1.msra.mxu0 0.0
    %2566 = vmatprep.subr.mxu0 0.0
    %2567 = vmatpush1.msra.mxu0 0.0
    %2568 = vmatprep.subr.mxu0 0.0
    %2569 = vmatpush1.msra.mxu0 0.0
    %2570 = vmatprep.subr.mxu0 0.0
    %2571 = vmatpush1.msra.mxu0 0.0
    %2572 = vmatprep.subr.mxu0 0.0
    %2573 = vmatpush1.msra.mxu0 0.0
    %2574 = vmatprep.subr.mxu0 0.0
    %2575 = vmatpush1.msra.mxu0 0.0
    %2576 = vmatprep.subr.mxu0 0.0
    %2577 = vmatpush1.msra.mxu0 0.0
    %2578 = vmatprep.subr.mxu0 0.0
    %2579 = vmatpush1.msra.mxu0 0.0
    %2580 = vmatprep.subr.mxu0 0.0
    %2581 = vmatpush1.msra.mxu0 0.0
    %2582 = vmatprep.subr.mxu0 0.0
    %2583 = vmatpush1.msra.mxu0 0.0
    %2584 = vmatprep.subr.mxu0 0.0
    %2585 = vmatpush1.msra.mxu0 0.0
    %2586 = vmatprep.subr.mxu0 0.0
    %2587 = vmatpush1.msra.mxu0 0.0
    %2588 = vmatprep.subr.mxu0 0.0
    %2589 = vmatpush1.msra.mxu0 0.0
    %2590 = vmatprep.subr.mxu0 0.0
    %2591 = vmatpush1.msra.mxu0 0.0
    %2592 = vmatprep.subr.mxu0 0.0
    %2593 = vmatpush1.msra.mxu0 0.0
    %2594 = vmatprep.subr.mxu0 0.0
    %2595 = vmatpush1.msra.mxu0 0.0
    %2596 = vmatprep.subr.mxu0 0.0
    %2597 = vmatpush1.msra.mxu0 0.0
    %2598 = vmatprep.subr.mxu0 0.0
    %2599 = vmatpush1.msra.mxu0 0.0
    %2600 = vmatprep.subr.mxu0 0.0
    %2601 = vmatpush1.msra.mxu0 0.0
    %2602 = vmatprep.subr.mxu0 0.0
    %2603 = vmatpush1.msra.mxu0 0.0
    %2604 = vmatprep.subr.mxu0 0.0
    %2605 = vmatpush1.msra.mxu0 0.0
    %2606 = vmatprep.subr.mxu0 0.0
    %2607 = vmatpush1.msra.mxu0 0.0
    %2608 = vmatprep.subr.mxu0 0.0
    %2609 = vmatpush1.msra.mxu0 0.0
    %2610 = vmatprep.subr.mxu0 0.0
    %2611 = vmatpush1.msra.mxu0 0.0
    %2612 = vmatprep.subr.mxu0 0.0
    %2613 = vmatpush1.msra.mxu0 0.0
    %2614 = vmatprep.subr.mxu0 0.0
    %2615 = vmatpush1.msra.mxu0 0.0
    %2616 = vmatprep.subr.mxu0 0.0
    %2617 = vmatpush1.msra.mxu0 0.0
    %2618 = vmatprep.subr.mxu0 0.0
    %2619 = vmatpush1.msra.mxu0 0.0
    %2620 = vmatprep.mubr.f32.mxu0 0.0
    %2621 = vmatmul.mubr.f32.gmra.mrb[0].mxu0 %v2551
    %v2622 = vpop.f32.mrb[0].mxu0
    %v2623 = vadd.f32 %v159, %v2622
    %v2624 = vpop.f32.mrb[0].mxu0
    %2625 = vmatprep.mubr.f32.mxu0 0.0
    %2626 = vmatmul.mubr.f32.gmra.mrb[0].mxu0 %v2554
    %v2627 = vpop.f32.mrb[0].mxu0
    %v2628 = vadd.f32 %v160, %v2627
    %v2629 = vpop.f32.mrb[0].mxu0
    %2630 = vdwg.mxu0
    %v2631 = vsel %vm866, %v2380, -inf
    %2632 = vmax.xlane.f32.xlu0 %v2631
    %v2633 = vpop.xlane.xlu0 %2632
    %v2634 = vsel %vm866, %v2385, -inf
    %2635 = vmax.xlane.f32.xlu0 %v2634
    %v2636 = vpop.xlane.xlu0 %2635
    %v2637 = vsel %vm866, %v2461, -inf
    %2638 = vmax.xlane.f32.xlu0 %v2637
    %v2639 = vpop.xlane.xlu0 %2638
    %v2640 = vsel %vm866, %v2466, -inf
    %2641 = vmax.xlane.f32.xlu0 %v2640
    %v2642 = vpop.xlane.xlu0 %2641
    %v2643 = vsel %vm866, %v2542, -inf
    %2644 = vmax.xlane.f32.xlu0 %v2643
    %v2645 = vpop.xlane.xlu0 %2644
    %v2646 = vsel %vm866, %v2547, -inf
    %2647 = vmax.xlane.f32.xlu0 %v2646
    %v2648 = vpop.xlane.xlu0 %2647
    %v2649 = vsel %vm866, %v2623, -inf
    %2650 = vmax.xlane.f32.xlu0 %v2649
    %v2651 = vpop.xlane.xlu0 %2650
    %v2652 = vsel %vm866, %v2628, -inf
    %2653 = vmax.xlane.f32.xlu0 %v2652
    %v2654 = vpop.xlane.xlu0 %2653
    %v2655 = vsub.f32 %v2380, %v2633
    %v2656 = vsub.f32 %v2385, %v2636
    %v2657 = vsub.f32 %v2461, %v2639
    %v2658 = vsub.f32 %v2466, %v2642
    %v2659 = vsub.f32 %v2542, %v2645
    %v2660 = vsub.f32 %v2547, %v2648
    %v2661 = vsub.f32 %v2623, %v2651
    %v2662 = vsub.f32 %v2628, %v2654
    %v2663 = vmul.f32 %v2655, 1.442695
    %v2664 = vpow.pop %v2663
    %v2665 = vmul.f32 %v2656, 1.442695
    %v2666 = vpow.pop %v2665
    %v2667 = vmul.f32 %v2657, 1.442695
    %v2668 = vpow.pop %v2667
    %v2669 = vmul.f32 %v2658, 1.442695
    %v2670 = vpow.pop %v2669
    %v2671 = vmul.f32 %v2659, 1.442695
    %v2672 = vpow.pop %v2671
    %v2673 = vmul.f32 %v2660, 1.442695
    %v2674 = vpow.pop %v2673
    %v2675 = vmul.f32 %v2661, 1.442695
    %v2676 = vpow.pop %v2675
    %v2677 = vmul.f32 %v2662, 1.442695
    %v2678 = vpow.pop %v2677
    %v2679 = vsel %vm866, %v2664, 0.0
    %2680 = vadd.xlane.f32.xlu0 %v2679
    %v2681 = vpop.xlane.xlu0 %2680
    %v2682 = vsel %vm866, %v2666, 0.0
    %2683 = vadd.xlane.f32.xlu0 %v2682
    %v2684 = vpop.xlane.xlu0 %2683
    %v2685 = vsel %vm866, %v2668, 0.0
    %2686 = vadd.xlane.f32.xlu0 %v2685
    %v2687 = vpop.xlane.xlu0 %2686
    %v2688 = vsel %vm866, %v2670, 0.0
    %2689 = vadd.xlane.f32.xlu0 %v2688
    %v2690 = vpop.xlane.xlu0 %2689
    %v2691 = vsel %vm866, %v2672, 0.0
    %2692 = vadd.xlane.f32.xlu0 %v2691
    %v2693 = vpop.xlane.xlu0 %2692
    %v2694 = vsel %vm866, %v2674, 0.0
    %2695 = vadd.xlane.f32.xlu0 %v2694
    %v2696 = vpop.xlane.xlu0 %2695
    %v2697 = vsel %vm866, %v2676, 0.0
    %2698 = vadd.xlane.f32.xlu0 %v2697
    %v2699 = vpop.xlane.xlu0 %2698
    %v2700 = vsel %vm866, %v2678, 0.0
    %2701 = vadd.xlane.f32.xlu0 %v2700
    %v2702 = vpop.xlane.xlu0 %2701
    %v2703 = vrcp.pop %v2681
    %v2704 = vrcp.pop %v2684
    %v2705 = vrcp.pop %v2687
    %v2706 = vrcp.pop %v2690
    %v2707 = vrcp.pop %v2693
    %v2708 = vrcp.pop %v2696
    %v2709 = vrcp.pop %v2699
    %v2710 = vrcp.pop %v2702
    %v2711 = vmul.f32 %v2664, %v2703
    %v2712 = vmul.f32 %v2666, %v2704
    %v2713 = vmul.f32 %v2668, %v2705
    %v2714 = vmul.f32 %v2670, %v2706
    %v2715 = vmul.f32 %v2672, %v2707
    %v2716 = vmul.f32 %v2674, %v2708
    %v2717 = vmul.f32 %v2676, %v2709
    %v2718 = vmul.f32 %v2678, %v2710
    %v2720 = vsel %vm866, %v2711, 0
    %v2723 = vsel %vm866, %v2712, 0
    %v2726 = vsel %vm866, %v2161, 0
    %2728 = vmatprep.subr.mxu0 0.0
    %2729 = vmatpush1.xpose.msra.mxu0 %v2726
    %2730 = vmatprep.subr.mxu0 0.0
    %2731 = vmatpush1.xpose.msra.mxu0 0.0
    %2732 = vmatprep.subr.mxu0 0.0
    %2733 = vmatpush1.xpose.msra.mxu0 0.0
    %2734 = vmatprep.subr.mxu0 0.0
    %2735 = vmatpush1.xpose.msra.mxu0 0.0
    %2736 = vmatprep.subr.mxu0 0.0
    %2737 = vmatpush1.xpose.msra.mxu0 0.0
    %2738 = vmatprep.subr.mxu0 0.0
    %2739 = vmatpush1.xpose.msra.mxu0 0.0
    %2740 = vmatprep.subr.mxu0 0.0
    %2741 = vmatpush1.xpose.msra.mxu0 0.0
    %2742 = vmatprep.subr.mxu0 0.0
    %2743 = vmatpush1.xpose.msra.mxu0 0.0
    %2744 = vmatprep.subr.mxu0 0.0
    %2745 = vmatpush1.xpose.msra.mxu0 0.0
    %2746 = vmatprep.subr.mxu0 0.0
    %2747 = vmatpush1.xpose.msra.mxu0 0.0
    %2748 = vmatprep.subr.mxu0 0.0
    %2749 = vmatpush1.xpose.msra.mxu0 0.0
    %2750 = vmatprep.subr.mxu0 0.0
    %2751 = vmatpush1.xpose.msra.mxu0 0.0
    %2752 = vmatprep.subr.mxu0 0.0
    %2753 = vmatpush1.xpose.msra.mxu0 0.0
    %2754 = vmatprep.subr.mxu0 0.0
    %2755 = vmatpush1.xpose.msra.mxu0 0.0
    %2756 = vmatprep.subr.mxu0 0.0
    %2757 = vmatpush1.xpose.msra.mxu0 0.0
    %2758 = vmatprep.subr.mxu0 0.0
    %2759 = vmatpush1.xpose.msra.mxu0 0.0
    %2760 = vmatprep.subr.mxu0 0.0
    %2761 = vmatpush1.xpose.msra.mxu0 0.0
    %2762 = vmatprep.subr.mxu0 0.0
    %2763 = vmatpush1.xpose.msra.mxu0 0.0
    %2764 = vmatprep.subr.mxu0 0.0
    %2765 = vmatpush1.xpose.msra.mxu0 0.0
    %2766 = vmatprep.subr.mxu0 0.0
    %2767 = vmatpush1.xpose.msra.mxu0 0.0
    %2768 = vmatprep.subr.mxu0 0.0
    %2769 = vmatpush1.xpose.msra.mxu0 0.0
    %2770 = vmatprep.subr.mxu0 0.0
    %2771 = vmatpush1.xpose.msra.mxu0 0.0
    %2772 = vmatprep.subr.mxu0 0.0
    %2773 = vmatpush1.xpose.msra.mxu0 0.0
    %2774 = vmatprep.subr.mxu0 0.0
    %2775 = vmatpush1.xpose.msra.mxu0 0.0
    %2776 = vmatprep.subr.mxu0 0.0
    %2777 = vmatpush1.xpose.msra.mxu0 0.0
    %2778 = vmatprep.subr.mxu0 0.0
    %2779 = vmatpush1.xpose.msra.mxu0 0.0
    %2780 = vmatprep.subr.mxu0 0.0
    %2781 = vmatpush1.xpose.msra.mxu0 0.0
    %2782 = vmatprep.subr.mxu0 0.0
    %2783 = vmatpush1.xpose.msra.mxu0 0.0
    %2784 = vmatprep.subr.mxu0 0.0
    %2785 = vmatpush1.xpose.msra.mxu0 0.0
    %2786 = vmatprep.subr.mxu0 0.0
    %2787 = vmatpush1.xpose.msra.mxu0 0.0
    %2788 = vmatprep.subr.mxu0 0.0
    %2789 = vmatpush1.xpose.msra.mxu0 0.0
    %2790 = vmatprep.subr.mxu0 0.0
    %2791 = vmatpush1.xpose.msra.mxu0 0.0
    %2792 = vmatprep.mubr.f32.mxu0 0.0
    %2793 = vmatmul.mubr.f32.gmra.mrb[0].mxu0 %v2720
    %v2794 = vpop.f32.mrb[0].mxu0
    %v2795 = vadd.f32 0.0, %v2794
    %v2796 = vpop.f32.mrb[0].mxu0
    %2797 = vmatprep.mubr.f32.mxu0 0.0
    %2798 = vmatmul.mubr.f32.gmra.mrb[0].mxu0 %v2723
    %v2799 = vpop.f32.mrb[0].mxu0
    %v2800 = vadd.f32 0.0, %v2799
    %v2801 = vpop.f32.mrb[0].mxu0
    %2802 = vdwg.mxu0
    %v2804 = vsel %vm866, %v2713, 0
    %v2807 = vsel %vm866, %v2714, 0
    %v2810 = vsel %vm866, %v2166, 0
    %2812 = vmatprep.subr.mxu0 0.0
    %2813 = vmatpush1.xpose.msra.mxu0 %v2810
    %2814 = vmatprep.subr.mxu0 0.0
    %2815 = vmatpush1.xpose.msra.mxu0 0.0
    %2816 = vmatprep.subr.mxu0 0.0
    %2817 = vmatpush1.xpose.msra.mxu0 0.0
    %2818 = vmatprep.subr.mxu0 0.0
    %2819 = vmatpush1.xpose.msra.mxu0 0.0
    %2820 = vmatprep.subr.mxu0 0.0
    %2821 = vmatpush1.xpose.msra.mxu0 0.0
    %2822 = vmatprep.subr.mxu0 0.0
    %2823 = vmatpush1.xpose.msra.mxu0 0.0
    %2824 = vmatprep.subr.mxu0 0.0
    %2825 = vmatpush1.xpose.msra.mxu0 0.0
    %2826 = vmatprep.subr.mxu0 0.0
    %2827 = vmatpush1.xpose.msra.mxu0 0.0
    %2828 = vmatprep.subr.mxu0 0.0
    %2829 = vmatpush1.xpose.msra.mxu0 0.0
    %2830 = vmatprep.subr.mxu0 0.0
    %2831 = vmatpush1.xpose.msra.mxu0 0.0
    %2832 = vmatprep.subr.mxu0 0.0
    %2833 = vmatpush1.xpose.msra.mxu0 0.0
    %2834 = vmatprep.subr.mxu0 0.0
    %2835 = vmatpush1.xpose.msra.mxu0 0.0
    %2836 = vmatprep.subr.mxu0 0.0
    %2837 = vmatpush1.xpose.msra.mxu0 0.0
    %2838 = vmatprep.subr.mxu0 0.0
    %2839 = vmatpush1.xpose.msra.mxu0 0.0
    %2840 = vmatprep.subr.mxu0 0.0
    %2841 = vmatpush1.xpose.msra.mxu0 0.0
    %2842 = vmatprep.subr.mxu0 0.0
    %2843 = vmatpush1.xpose.msra.mxu0 0.0
    %2844 = vmatprep.subr.mxu0 0.0
    %2845 = vmatpush1.xpose.msra.mxu0 0.0
    %2846 = vmatprep.subr.mxu0 0.0
    %2847 = vmatpush1.xpose.msra.mxu0 0.0
    %2848 = vmatprep.subr.mxu0 0.0
    %2849 = vmatpush1.xpose.msra.mxu0 0.0
    %2850 = vmatprep.subr.mxu0 0.0
    %2851 = vmatpush1.xpose.msra.mxu0 0.0
    %2852 = vmatprep.subr.mxu0 0.0
    %2853 = vmatpush1.xpose.msra.mxu0 0.0
    %2854 = vmatprep.subr.mxu0 0.0
    %2855 = vmatpush1.xpose.msra.mxu0 0.0
    %2856 = vmatprep.subr.mxu0 0.0
    %2857 = vmatpush1.xpose.msra.mxu0 0.0
    %2858 = vmatprep.subr.mxu0 0.0
    %2859 = vmatpush1.xpose.msra.mxu0 0.0
    %2860 = vmatprep.subr.mxu0 0.0
    %2861 = vmatpush1.xpose.msra.mxu0 0.0
    %2862 = vmatprep.subr.mxu0 0.0
    %2863 = vmatpush1.xpose.msra.mxu0 0.0
    %2864 = vmatprep.subr.mxu0 0.0
    %2865 = vmatpush1.xpose.msra.mxu0 0.0
    %2866 = vmatprep.subr.mxu0 0.0
    %2867 = vmatpush1.xpose.msra.mxu0 0.0
    %2868 = vmatprep.subr.mxu0 0.0
    %2869 = vmatpush1.xpose.msra.mxu0 0.0
    %2870 = vmatprep.subr.mxu0 0.0
    %2871 = vmatpush1.xpose.msra.mxu0 0.0
    %2872 = vmatprep.subr.mxu0 0.0
    %2873 = vmatpush1.xpose.msra.mxu0 0.0
    %2874 = vmatprep.subr.mxu0 0.0
    %2875 = vmatpush1.xpose.msra.mxu0 0.0
    %2876 = vmatprep.mubr.f32.mxu0 0.0
    %2877 = vmatmul.mubr.f32.gmra.mrb[0].mxu0 %v2804
    %v2878 = vpop.f32.mrb[0].mxu0
    %v2879 = vadd.f32 0.0, %v2878
    %v2880 = vpop.f32.mrb[0].mxu0
    %2881 = vmatprep.mubr.f32.mxu0 0.0
    %2882 = vmatmul.mubr.f32.gmra.mrb[0].mxu0 %v2807
    %v2883 = vpop.f32.mrb[0].mxu0
    %v2884 = vadd.f32 0.0, %v2883
    %v2885 = vpop.f32.mrb[0].mxu0
    %2886 = vdwg.mxu0
    %v2888 = vsel %vm866, %v2715, 0
    %v2891 = vsel %vm866, %v2716, 0
    %v2894 = vsel %vm866, %v2171, 0
    %2896 = vmatprep.subr.mxu0 0.0
    %2897 = vmatpush1.xpose.msra.mxu0 %v2894
    %2898 = vmatprep.subr.mxu0 0.0
    %2899 = vmatpush1.xpose.msra.mxu0 0.0
    %2900 = vmatprep.subr.mxu0 0.0
    %2901 = vmatpush1.xpose.msra.mxu0 0.0
    %2902 = vmatprep.subr.mxu0 0.0
    %2903 = vmatpush1.xpose.msra.mxu0 0.0
    %2904 = vmatprep.subr.mxu0 0.0
    %2905 = vmatpush1.xpose.msra.mxu0 0.0
    %2906 = vmatprep.subr.mxu0 0.0
    %2907 = vmatpush1.xpose.msra.mxu0 0.0
    %2908 = vmatprep.subr.mxu0 0.0
    %2909 = vmatpush1.xpose.msra.mxu0 0.0
    %2910 = vmatprep.subr.mxu0 0.0
    %2911 = vmatpush1.xpose.msra.mxu0 0.0
    %2912 = vmatprep.subr.mxu0 0.0
    %2913 = vmatpush1.xpose.msra.mxu0 0.0
    %2914 = vmatprep.subr.mxu0 0.0
    %2915 = vmatpush1.xpose.msra.mxu0 0.0
    %2916 = vmatprep.subr.mxu0 0.0
    %2917 = vmatpush1.xpose.msra.mxu0 0.0
    %2918 = vmatprep.subr.mxu0 0.0
    %2919 = vmatpush1.xpose.msra.mxu0 0.0
    %2920 = vmatprep.subr.mxu0 0.0
    %2921 = vmatpush1.xpose.msra.mxu0 0.0
    %2922 = vmatprep.subr.mxu0 0.0
    %2923 = vmatpush1.xpose.msra.mxu0 0.0
    %2924 = vmatprep.subr.mxu0 0.0
    %2925 = vmatpush1.xpose.msra.mxu0 0.0
    %2926 = vmatprep.subr.mxu0 0.0
    %2927 = vmatpush1.xpose.msra.mxu0 0.0
    %2928 = vmatprep.subr.mxu0 0.0
    %2929 = vmatpush1.xpose.msra.mxu0 0.0
    %2930 = vmatprep.subr.mxu0 0.0
    %2931 = vmatpush1.xpose.msra.mxu0 0.0
    %2932 = vmatprep.subr.mxu0 0.0
    %2933 = vmatpush1.xpose.msra.mxu0 0.0
    %2934 = vmatprep.subr.mxu0 0.0
    %2935 = vmatpush1.xpose.msra.mxu0 0.0
    %2936 = vmatprep.subr.mxu0 0.0
    %2937 = vmatpush1.xpose.msra.mxu0 0.0
    %2938 = vmatprep.subr.mxu0 0.0
    %2939 = vmatpush1.xpose.msra.mxu0 0.0
    %2940 = vmatprep.subr.mxu0 0.0
    %2941 = vmatpush1.xpose.msra.mxu0 0.0
    %2942 = vmatprep.subr.mxu0 0.0
    %2943 = vmatpush1.xpose.msra.mxu0 0.0
    %2944 = vmatprep.subr.mxu0 0.0
    %2945 = vmatpush1.xpose.msra.mxu0 0.0
    %2946 = vmatprep.subr.mxu0 0.0
    %2947 = vmatpush1.xpose.msra.mxu0 0.0
    %2948 = vmatprep.subr.mxu0 0.0
    %2949 = vmatpush1.xpose.msra.mxu0 0.0
    %2950 = vmatprep.subr.mxu0 0.0
    %2951 = vmatpush1.xpose.msra.mxu0 0.0
    %2952 = vmatprep.subr.mxu0 0.0
    %2953 = vmatpush1.xpose.msra.mxu0 0.0
    %2954 = vmatprep.subr.mxu0 0.0
    %2955 = vmatpush1.xpose.msra.mxu0 0.0
    %2956 = vmatprep.subr.mxu0 0.0
    %2957 = vmatpush1.xpose.msra.mxu0 0.0
    %2958 = vmatprep.subr.mxu0 0.0
    %2959 = vmatpush1.xpose.msra.mxu0 0.0
    %2960 = vmatprep.mubr.f32.mxu0 0.0
    %2961 = vmatmul.mubr.f32.gmra.mrb[0].mxu0 %v2888
    %v2962 = vpop.f32.mrb[0].mxu0
    %v2963 = vadd.f32 0.0, %v2962
    %v2964 = vpop.f32.mrb[0].mxu0
    %2965 = vmatprep.mubr.f32.mxu0 0.0
    %2966 = vmatmul.mubr.f32.gmra.mrb[0].mxu0 %v2891
    %v2967 = vpop.f32.mrb[0].mxu0
    %v2968 = vadd.f32 0.0, %v2967
    %v2969 = vpop.f32.mrb[0].mxu0
    %2970 = vdwg.mxu0
    %v2972 = vsel %vm866, %v2717, 0
    %v2975 = vsel %vm866, %v2718, 0
    %v2978 = vsel %vm866, %v2176, 0
    %2980 = vmatprep.subr.mxu0 0.0
    %2981 = vmatpush1.xpose.msra.mxu0 %v2978
    %2982 = vmatprep.subr.mxu0 0.0
    %2983 = vmatpush1.xpose.msra.mxu0 0.0
    %2984 = vmatprep.subr.mxu0 0.0
    %2985 = vmatpush1.xpose.msra.mxu0 0.0
    %2986 = vmatprep.subr.mxu0 0.0
    %2987 = vmatpush1.xpose.msra.mxu0 0.0
    %2988 = vmatprep.subr.mxu0 0.0
    %2989 = vmatpush1.xpose.msra.mxu0 0.0
    %2990 = vmatprep.subr.mxu0 0.0
    %2991 = vmatpush1.xpose.msra.mxu0 0.0
    %2992 = vmatprep.subr.mxu0 0.0
    %2993 = vmatpush1.xpose.msra.mxu0 0.0
    %2994 = vmatprep.subr.mxu0 0.0
    %2995 = vmatpush1.xpose.msra.mxu0 0.0
    %2996 = vmatprep.subr.mxu0 0.0
    %2997 = vmatpush1.xpose.msra.mxu0 0.0
    %2998 = vmatprep.subr.mxu0 0.0
    %2999 = vmatpush1.xpose.msra.mxu0 0.0
    %3000 = vmatprep.subr.mxu0 0.0
    %3001 = vmatpush1.xpose.msra.mxu0 0.0
    %3002 = vmatprep.subr.mxu0 0.0
    %3003 = vmatpush1.xpose.msra.mxu0 0.0
    %3004 = vmatprep.subr.mxu0 0.0
    %3005 = vmatpush1.xpose.msra.mxu0 0.0
    %3006 = vmatprep.subr.mxu0 0.0
    %3007 = vmatpush1.xpose.msra.mxu0 0.0
    %3008 = vmatprep.subr.mxu0 0.0
    %3009 = vmatpush1.xpose.msra.mxu0 0.0
    %3010 = vmatprep.subr.mxu0 0.0
    %3011 = vmatpush1.xpose.msra.mxu0 0.0
    %3012 = vmatprep.subr.mxu0 0.0
    %3013 = vmatpush1.xpose.msra.mxu0 0.0
    %3014 = vmatprep.subr.mxu0 0.0
    %3015 = vmatpush1.xpose.msra.mxu0 0.0
    %3016 = vmatprep.subr.mxu0 0.0
    %3017 = vmatpush1.xpose.msra.mxu0 0.0
    %3018 = vmatprep.subr.mxu0 0.0
    %3019 = vmatpush1.xpose.msra.mxu0 0.0
    %3020 = vmatprep.subr.mxu0 0.0
    %3021 = vmatpush1.xpose.msra.mxu0 0.0
    %3022 = vmatprep.subr.mxu0 0.0
    %3023 = vmatpush1.xpose.msra.mxu0 0.0
    %3024 = vmatprep.subr.mxu0 0.0
    %3025 = vmatpush1.xpose.msra.mxu0 0.0
    %3026 = vmatprep.subr.mxu0 0.0
    %3027 = vmatpush1.xpose.msra.mxu0 0.0
    %3028 = vmatprep.subr.mxu0 0.0
    %3029 = vmatpush1.xpose.msra.mxu0 0.0
    %3030 = vmatprep.subr.mxu0 0.0
    %3031 = vmatpush1.xpose.msra.mxu0 0.0
    %3032 = vmatprep.subr.mxu0 0.0
    %3033 = vmatpush1.xpose.msra.mxu0 0.0
    %3034 = vmatprep.subr.mxu0 0.0
    %3035 = vmatpush1.xpose.msra.mxu0 0.0
    %3036 = vmatprep.subr.mxu0 0.0
    %3037 = vmatpush1.xpose.msra.mxu0 0.0
    %3038 = vmatprep.subr.mxu0 0.0
    %3039 = vmatpush1.xpose.msra.mxu0 0.0
    %3040 = vmatprep.subr.mxu0 0.0
    %3041 = vmatpush1.xpose.msra.mxu0 0.0
    %3042 = vmatprep.subr.mxu0 0.0
    %3043 = vmatpush1.xpose.msra.mxu0 0.0
    %3044 = vmatprep.mubr.f32.mxu0 0.0
    %3045 = vmatmul.mubr.f32.gmra.mrb[0].mxu0 %v2972
    %v3046 = vpop.f32.mrb[0].mxu0
    %v3047 = vadd.f32 0.0, %v3046
    %v3048 = vpop.f32.mrb[0].mxu0
    %3049 = vmatprep.mubr.f32.mxu0 0.0
    %3050 = vmatmul.mubr.f32.gmra.mrb[0].mxu0 %v2975
    %v3051 = vpop.f32.mrb[0].mxu0
    %v3052 = vadd.f32 0.0, %v3051
    %v3053 = vpop.f32.mrb[0].mxu0
    %3054 = vdwg.mxu0
    %s3055 = scalar_lea.vmem %s6, 32
    %v3056 = vld [vmem:[%s3055] sm:$0xff]
    %v3057 = vld [vmem:[%s3055 + $0x8] sm:$0xff]
    %v3058 = vld [vmem:[%s3055 + $0x10] sm:$0xff]
    %v3059 = vld [vmem:[%s3055 + $0x18] sm:$0xff]
    %v3061 = vsel %vm541, %v2795, 0
    %v3064 = vsel %vm541, %v2800, 0
    %3066 = vmatprep.subr.mxu0 0.0
    %3067 = vmatpush1.msra.mxu0 %v3056
    %3068 = vmatprep.subr.mxu0 0.0
    %3069 = vmatpush1.msra.mxu0 0.0
    %3070 = vmatprep.subr.mxu0 0.0
    %3071 = vmatpush1.msra.mxu0 0.0
    %3072 = vmatprep.subr.mxu0 0.0
    %3073 = vmatpush1.msra.mxu0 0.0
    %3074 = vmatprep.subr.mxu0 0.0
    %3075 = vmatpush1.msra.mxu0 0.0
    %3076 = vmatprep.subr.mxu0 0.0
    %3077 = vmatpush1.msra.mxu0 0.0
    %3078 = vmatprep.subr.mxu0 0.0
    %3079 = vmatpush1.msra.mxu0 0.0
    %3080 = vmatprep.subr.mxu0 0.0
    %3081 = vmatpush1.msra.mxu0 0.0
    %3082 = vmatprep.subr.mxu0 0.0
    %3083 = vmatpush1.msra.mxu0 0.0
    %3084 = vmatprep.subr.mxu0 0.0
    %3085 = vmatpush1.msra.mxu0 0.0
    %3086 = vmatprep.subr.mxu0 0.0
    %3087 = vmatpush1.msra.mxu0 0.0
    %3088 = vmatprep.subr.mxu0 0.0
    %3089 = vmatpush1.msra.mxu0 0.0
    %3090 = vmatprep.subr.mxu0 0.0
    %3091 = vmatpush1.msra.mxu0 0.0
    %3092 = vmatprep.subr.mxu0 0.0
    %3093 = vmatpush1.msra.mxu0 0.0
    %3094 = vmatprep.subr.mxu0 0.0
    %3095 = vmatpush1.msra.mxu0 0.0
    %3096 = vmatprep.subr.mxu0 0.0
    %3097 = vmatpush1.msra.mxu0 0.0
    %3098 = vmatprep.subr.mxu0 0.0
    %3099 = vmatpush1.msra.mxu0 0.0
    %3100 = vmatprep.subr.mxu0 0.0
    %3101 = vmatpush1.msra.mxu0 0.0
    %3102 = vmatprep.subr.mxu0 0.0
    %3103 = vmatpush1.msra.mxu0 0.0
    %3104 = vmatprep.subr.mxu0 0.0
    %3105 = vmatpush1.msra.mxu0 0.0
    %3106 = vmatprep.subr.mxu0 0.0
    %3107 = vmatpush1.msra.mxu0 0.0
    %3108 = vmatprep.subr.mxu0 0.0
    %3109 = vmatpush1.msra.mxu0 0.0
    %3110 = vmatprep.subr.mxu0 0.0
    %3111 = vmatpush1.msra.mxu0 0.0
    %3112 = vmatprep.subr.mxu0 0.0
    %3113 = vmatpush1.msra.mxu0 0.0
    %3114 = vmatprep.subr.mxu0 0.0
    %3115 = vmatpush1.msra.mxu0 0.0
    %3116 = vmatprep.subr.mxu0 0.0
    %3117 = vmatpush1.msra.mxu0 0.0
    %3118 = vmatprep.subr.mxu0 0.0
    %3119 = vmatpush1.msra.mxu0 0.0
    %3120 = vmatprep.subr.mxu0 0.0
    %3121 = vmatpush1.msra.mxu0 0.0
    %3122 = vmatprep.subr.mxu0 0.0
    %3123 = vmatpush1.msra.mxu0 0.0
    %3124 = vmatprep.subr.mxu0 0.0
    %3125 = vmatpush1.msra.mxu0 0.0
    %3126 = vmatprep.subr.mxu0 0.0
    %3127 = vmatpush1.msra.mxu0 0.0
    %3128 = vmatprep.subr.mxu0 0.0
    %3129 = vmatpush1.msra.mxu0 0.0
    %3130 = vmatprep.mubr.f32.mxu0 0.0
    %3131 = vmatmul.mubr.f32.gmra.mrb[0].mxu0 %v3061
    %v3132 = vpop.f32.mrb[0].mxu0
    %v3133 = vadd.f32 0.0, %v3132
    %v3134 = vpop.f32.mrb[0].mxu0
    %3135 = vmatprep.mubr.f32.mxu0 0.0
    %3136 = vmatmul.mubr.f32.gmra.mrb[0].mxu0 %v3064
    %v3137 = vpop.f32.mrb[0].mxu0
    %v3138 = vadd.f32 0.0, %v3137
    %v3139 = vpop.f32.mrb[0].mxu0
    %3140 = vdwg.mxu0
    %v3142 = vsel %vm541, %v2879, 0
    %v3145 = vsel %vm541, %v2884, 0
    %3147 = vmatprep.subr.mxu0 0.0
    %3148 = vmatpush1.msra.mxu0 %v3057
    %3149 = vmatprep.subr.mxu0 0.0
    %3150 = vmatpush1.msra.mxu0 0.0
    %3151 = vmatprep.subr.mxu0 0.0
    %3152 = vmatpush1.msra.mxu0 0.0
    %3153 = vmatprep.subr.mxu0 0.0
    %3154 = vmatpush1.msra.mxu0 0.0
    %3155 = vmatprep.subr.mxu0 0.0
    %3156 = vmatpush1.msra.mxu0 0.0
    %3157 = vmatprep.subr.mxu0 0.0
    %3158 = vmatpush1.msra.mxu0 0.0
    %3159 = vmatprep.subr.mxu0 0.0
    %3160 = vmatpush1.msra.mxu0 0.0
    %3161 = vmatprep.subr.mxu0 0.0
    %3162 = vmatpush1.msra.mxu0 0.0
    %3163 = vmatprep.subr.mxu0 0.0
    %3164 = vmatpush1.msra.mxu0 0.0
    %3165 = vmatprep.subr.mxu0 0.0
    %3166 = vmatpush1.msra.mxu0 0.0
    %3167 = vmatprep.subr.mxu0 0.0
    %3168 = vmatpush1.msra.mxu0 0.0
    %3169 = vmatprep.subr.mxu0 0.0
    %3170 = vmatpush1.msra.mxu0 0.0
    %3171 = vmatprep.subr.mxu0 0.0
    %3172 = vmatpush1.msra.mxu0 0.0
    %3173 = vmatprep.subr.mxu0 0.0
    %3174 = vmatpush1.msra.mxu0 0.0
    %3175 = vmatprep.subr.mxu0 0.0
    %3176 = vmatpush1.msra.mxu0 0.0
    %3177 = vmatprep.subr.mxu0 0.0
    %3178 = vmatpush1.msra.mxu0 0.0
    %3179 = vmatprep.subr.mxu0 0.0
    %3180 = vmatpush1.msra.mxu0 0.0
    %3181 = vmatprep.subr.mxu0 0.0
    %3182 = vmatpush1.msra.mxu0 0.0
    %3183 = vmatprep.subr.mxu0 0.0
    %3184 = vmatpush1.msra.mxu0 0.0
    %3185 = vmatprep.subr.mxu0 0.0
    %3186 = vmatpush1.msra.mxu0 0.0
    %3187 = vmatprep.subr.mxu0 0.0
    %3188 = vmatpush1.msra.mxu0 0.0
    %3189 = vmatprep.subr.mxu0 0.0
    %3190 = vmatpush1.msra.mxu0 0.0
    %3191 = vmatprep.subr.mxu0 0.0
    %3192 = vmatpush1.msra.mxu0 0.0
    %3193 = vmatprep.subr.mxu0 0.0
    %3194 = vmatpush1.msra.mxu0 0.0
    %3195 = vmatprep.subr.mxu0 0.0
    %3196 = vmatpush1.msra.mxu0 0.0
    %3197 = vmatprep.subr.mxu0 0.0
    %3198 = vmatpush1.msra.mxu0 0.0
    %3199 = vmatprep.subr.mxu0 0.0
    %3200 = vmatpush1.msra.mxu0 0.0
    %3201 = vmatprep.subr.mxu0 0.0
    %3202 = vmatpush1.msra.mxu0 0.0
    %3203 = vmatprep.subr.mxu0 0.0
    %3204 = vmatpush1.msra.mxu0 0.0
    %3205 = vmatprep.subr.mxu0 0.0
    %3206 = vmatpush1.msra.mxu0 0.0
    %3207 = vmatprep.subr.mxu0 0.0
    %3208 = vmatpush1.msra.mxu0 0.0
    %3209 = vmatprep.subr.mxu0 0.0
    %3210 = vmatpush1.msra.mxu0 0.0
    %3211 = vmatprep.mubr.f32.mxu0 0.0
    %3212 = vmatmul.mubr.f32.gmra.mrb[0].mxu0 %v3142
    %v3213 = vpop.f32.mrb[0].mxu0
    %v3214 = vadd.f32 0.0, %v3213
    %v3215 = vpop.f32.mrb[0].mxu0
    %3216 = vmatprep.mubr.f32.mxu0 0.0
    %3217 = vmatmul.mubr.f32.gmra.mrb[0].mxu0 %v3145
    %v3218 = vpop.f32.mrb[0].mxu0
    %v3219 = vadd.f32 0.0, %v3218
    %v3220 = vpop.f32.mrb[0].mxu0
    %3221 = vdwg.mxu0
    %v3223 = vsel %vm541, %v2963, 0
    %v3226 = vsel %vm541, %v2968, 0
    %3228 = vmatprep.subr.mxu0 0.0
    %3229 = vmatpush1.msra.mxu0 %v3058
    %3230 = vmatprep.subr.mxu0 0.0
    %3231 = vmatpush1.msra.mxu0 0.0
    %3232 = vmatprep.subr.mxu0 0.0
    %3233 = vmatpush1.msra.mxu0 0.0
    %3234 = vmatprep.subr.mxu0 0.0
    %3235 = vmatpush1.msra.mxu0 0.0
    %3236 = vmatprep.subr.mxu0 0.0
    %3237 = vmatpush1.msra.mxu0 0.0
    %3238 = vmatprep.subr.mxu0 0.0
    %3239 = vmatpush1.msra.mxu0 0.0
    %3240 = vmatprep.subr.mxu0 0.0
    %3241 = vmatpush1.msra.mxu0 0.0
    %3242 = vmatprep.subr.mxu0 0.0
    %3243 = vmatpush1.msra.mxu0 0.0
    %3244 = vmatprep.subr.mxu0 0.0
    %3245 = vmatpush1.msra.mxu0 0.0
    %3246 = vmatprep.subr.mxu0 0.0
    %3247 = vmatpush1.msra.mxu0 0.0
    %3248 = vmatprep.subr.mxu0 0.0
    %3249 = vmatpush1.msra.mxu0 0.0
    %3250 = vmatprep.subr.mxu0 0.0
    %3251 = vmatpush1.msra.mxu0 0.0
    %3252 = vmatprep.subr.mxu0 0.0
    %3253 = vmatpush1.msra.mxu0 0.0
    %3254 = vmatprep.subr.mxu0 0.0
    %3255 = vmatpush1.msra.mxu0 0.0
    %3256 = vmatprep.subr.mxu0 0.0
    %3257 = vmatpush1.msra.mxu0 0.0
    %3258 = vmatprep.subr.mxu0 0.0
    %3259 = vmatpush1.msra.mxu0 0.0
    %3260 = vmatprep.subr.mxu0 0.0
    %3261 = vmatpush1.msra.mxu0 0.0
    %3262 = vmatprep.subr.mxu0 0.0
    %3263 = vmatpush1.msra.mxu0 0.0
    %3264 = vmatprep.subr.mxu0 0.0
    %3265 = vmatpush1.msra.mxu0 0.0
    %3266 = vmatprep.subr.mxu0 0.0
    %3267 = vmatpush1.msra.mxu0 0.0
    %3268 = vmatprep.subr.mxu0 0.0
    %3269 = vmatpush1.msra.mxu0 0.0
    %3270 = vmatprep.subr.mxu0 0.0
    %3271 = vmatpush1.msra.mxu0 0.0
    %3272 = vmatprep.subr.mxu0 0.0
    %3273 = vmatpush1.msra.mxu0 0.0
    %3274 = vmatprep.subr.mxu0 0.0
    %3275 = vmatpush1.msra.mxu0 0.0
    %3276 = vmatprep.subr.mxu0 0.0
    %3277 = vmatpush1.msra.mxu0 0.0
    %3278 = vmatprep.subr.mxu0 0.0
    %3279 = vmatpush1.msra.mxu0 0.0
    %3280 = vmatprep.subr.mxu0 0.0
    %3281 = vmatpush1.msra.mxu0 0.0
    %3282 = vmatprep.subr.mxu0 0.0
    %3283 = vmatpush1.msra.mxu0 0.0
    %3284 = vmatprep.subr.mxu0 0.0
    %3285 = vmatpush1.msra.mxu0 0.0
    %3286 = vmatprep.subr.mxu0 0.0
    %3287 = vmatpush1.msra.mxu0 0.0
    %3288 = vmatprep.subr.mxu0 0.0
    %3289 = vmatpush1.msra.mxu0 0.0
    %3290 = vmatprep.subr.mxu0 0.0
    %3291 = vmatpush1.msra.mxu0 0.0
    %3292 = vmatprep.mubr.f32.mxu0 0.0
    %3293 = vmatmul.mubr.f32.gmra.mrb[0].mxu0 %v3223
    %v3294 = vpop.f32.mrb[0].mxu0
    %v3295 = vadd.f32 0.0, %v3294
    %v3296 = vpop.f32.mrb[0].mxu0
    %3297 = vmatprep.mubr.f32.mxu0 0.0
    %3298 = vmatmul.mubr.f32.gmra.mrb[0].mxu0 %v3226
    %v3299 = vpop.f32.mrb[0].mxu0
    %v3300 = vadd.f32 0.0, %v3299
    %v3301 = vpop.f32.mrb[0].mxu0
    %3302 = vdwg.mxu0
    %v3304 = vsel %vm541, %v3047, 0
    %v3307 = vsel %vm541, %v3052, 0
    %3309 = vmatprep.subr.mxu0 0.0
    %3310 = vmatpush1.msra.mxu0 %v3059
    %3311 = vmatprep.subr.mxu0 0.0
    %3312 = vmatpush1.msra.mxu0 0.0
    %3313 = vmatprep.subr.mxu0 0.0
    %3314 = vmatpush1.msra.mxu0 0.0
    %3315 = vmatprep.subr.mxu0 0.0
    %3316 = vmatpush1.msra.mxu0 0.0
    %3317 = vmatprep.subr.mxu0 0.0
    %3318 = vmatpush1.msra.mxu0 0.0
    %3319 = vmatprep.subr.mxu0 0.0
    %3320 = vmatpush1.msra.mxu0 0.0
    %3321 = vmatprep.subr.mxu0 0.0
    %3322 = vmatpush1.msra.mxu0 0.0
    %3323 = vmatprep.subr.mxu0 0.0
    %3324 = vmatpush1.msra.mxu0 0.0
    %3325 = vmatprep.subr.mxu0 0.0
    %3326 = vmatpush1.msra.mxu0 0.0
    %3327 = vmatprep.subr.mxu0 0.0
    %3328 = vmatpush1.msra.mxu0 0.0
    %3329 = vmatprep.subr.mxu0 0.0
    %3330 = vmatpush1.msra.mxu0 0.0
    %3331 = vmatprep.subr.mxu0 0.0
    %3332 = vmatpush1.msra.mxu0 0.0
    %3333 = vmatprep.subr.mxu0 0.0
    %3334 = vmatpush1.msra.mxu0 0.0
    %3335 = vmatprep.subr.mxu0 0.0
    %3336 = vmatpush1.msra.mxu0 0.0
    %3337 = vmatprep.subr.mxu0 0.0
    %3338 = vmatpush1.msra.mxu0 0.0
    %3339 = vmatprep.subr.mxu0 0.0
    %3340 = vmatpush1.msra.mxu0 0.0
    %3341 = vmatprep.subr.mxu0 0.0
    %3342 = vmatpush1.msra.mxu0 0.0
    %3343 = vmatprep.subr.mxu0 0.0
    %3344 = vmatpush1.msra.mxu0 0.0
    %3345 = vmatprep.subr.mxu0 0.0
    %3346 = vmatpush1.msra.mxu0 0.0
    %3347 = vmatprep.subr.mxu0 0.0
    %3348 = vmatpush1.msra.mxu0 0.0
    %3349 = vmatprep.subr.mxu0 0.0
    %3350 = vmatpush1.msra.mxu0 0.0
    %3351 = vmatprep.subr.mxu0 0.0
    %3352 = vmatpush1.msra.mxu0 0.0
    %3353 = vmatprep.subr.mxu0 0.0
    %3354 = vmatpush1.msra.mxu0 0.0
    %3355 = vmatprep.subr.mxu0 0.0
    %3356 = vmatpush1.msra.mxu0 0.0
    %3357 = vmatprep.subr.mxu0 0.0
    %3358 = vmatpush1.msra.mxu0 0.0
    %3359 = vmatprep.subr.mxu0 0.0
    %3360 = vmatpush1.msra.mxu0 0.0
    %3361 = vmatprep.subr.mxu0 0.0
    %3362 = vmatpush1.msra.mxu0 0.0
    %3363 = vmatprep.subr.mxu0 0.0
    %3364 = vmatpush1.msra.mxu0 0.0
    %3365 = vmatprep.subr.mxu0 0.0
    %3366 = vmatpush1.msra.mxu0 0.0
    %3367 = vmatprep.subr.mxu0 0.0
    %3368 = vmatpush1.msra.mxu0 0.0
    %3369 = vmatprep.subr.mxu0 0.0
    %3370 = vmatpush1.msra.mxu0 0.0
    %3371 = vmatprep.subr.mxu0 0.0
    %3372 = vmatpush1.msra.mxu0 0.0
    %3373 = vmatprep.mubr.f32.mxu0 0.0
    %3374 = vmatmul.mubr.f32.gmra.mrb[0].mxu0 %v3304
    %v3375 = vpop.f32.mrb[0].mxu0
    %v3376 = vadd.f32 0.0, %v3375
    %v3377 = vpop.f32.mrb[0].mxu0
    %3378 = vmatprep.mubr.f32.mxu0 0.0
    %3379 = vmatmul.mubr.f32.gmra.mrb[0].mxu0 %v3307
    %v3380 = vpop.f32.mrb[0].mxu0
    %v3381 = vadd.f32 0.0, %v3380
    %v3382 = vpop.f32.mrb[0].mxu0
    %3383 = vdwg.mxu0
    %v3384 = vsel %vm245, %v3133, 0.0
    %v3385 = vsel %vm245, %v3214, 0.0
    %v3386 = vadd.f32 %v3384, %v3385
    %v3387 = vsel %vm245, %v3295, 0.0
    %v3388 = vadd.f32 %v3386, %v3387
    %v3389 = vsel %vm245, %v3376, 0.0
    %v3390 = vadd.f32 %v3388, %v3389
    %v3391 = vsel %vm245, %v3138, 0.0
    %v3392 = vsel %vm245, %v3219, 0.0
    %v3393 = vadd.f32 %v3391, %v3392
    %v3394 = vsel %vm245, %v3300, 0.0
    %v3395 = vadd.f32 %v3393, %v3394
    %v3396 = vsel %vm245, %v3381, 0.0
    %v3397 = vadd.f32 %v3395, %v3396
    %s3398 = scalar_lea.vmem %s7, 1
    %v3399 = vld [vmem:[%s3398] sm:$0x1]
    %v3401 = vlaneseq
    %v3402 = vshrl.u32 %v3401, 7
    %v3403 = vsub.s32 0, %v3402
    %v3404 = vrot.slane %v3399, %v3403
    %v3406 = vadd.f32 %v3390, %v3404
    %v3407 = vadd.f32 %v3397, %v3404
    %v3408 = vadd.f32 %v1924, %v3406
    %v3409 = vadd.f32 %v1925, %v3407
    %s3410 = scalar_lea.vmem %s8, 1
    %v3411 = vld [vmem:[%s3410] sm:$0x1]
    %s3412 = scalar_lea.vmem %s9, 1
    %v3413 = vld [vmem:[%s3412] sm:$0x1]
    %v3414 = vsel %vm245, %v3408, 0.0
    %3415 = vadd.xlane.f32.xlu0 %v3414
    %v3416 = vpop.xlane.xlu0 %3415
    %v3417 = vsel %vm245, %v3409, 0.0
    %3418 = vadd.xlane.f32.xlu0 %v3417
    %v3419 = vpop.xlane.xlu0 %3418
    %v3420 = vmul.f32 %v3416, %v1652
    %v3421 = vmul.f32 %v3419, %v1652
    %v3422 = vsub.f32 %v3408, %v3420
    %v3423 = vsub.f32 %v3409, %v3421
    %v3424 = vmul.f32 %v3422, %v3422
    %v3425 = vmul.f32 %v3423, %v3423
    %v3426 = vsel %vm245, %v3424, 0.0
    %3427 = vadd.xlane.f32.xlu0 %v3426
    %v3428 = vpop.xlane.xlu0 %3427
    %v3429 = vsel %vm245, %v3425, 0.0
    %3430 = vadd.xlane.f32.xlu0 %v3429
    %v3431 = vpop.xlane.xlu0 %3430
    %v3432 = vmul.f32 %v3428, %v1652
    %v3433 = vmul.f32 %v3431, %v1652
    %v3434 = vadd.f32 %v3432, 1e-05
    %v3435 = vadd.f32 %v3433, 1e-05
    %v3436 = vrsqrt.pop %v3434
    %v3437 = vrsqrt.pop %v3435
    %v3438 = vmul.f32 %v3422, %v3436
    %v3439 = vmul.f32 %v3423, %v3437
    %v3441 = vlaneseq
    %v3442 = vshrl.u32 %v3441, 7
    %v3443 = vsub.s32 0, %v3442
    %v3444 = vrot.slane %v3411, %v3443
    %v3446 = vmul.f32 %v3438, %v3444
    %v3447 = vmul.f32 %v3439, %v3444
    %v3449 = vlaneseq
    %v3450 = vshrl.u32 %v3449, 7
    %v3451 = vsub.s32 0, %v3450
    %v3452 = vrot.slane %v3413, %v3451
    %v3454 = vadd.f32 %v3446, %v3452
    %v3455 = vadd.f32 %v3447, %v3452
    %s3456 = scalar_lea.vmem %s12, 32
    %v3457 = vld [vmem:[%s3456] sm:$0xff]
    %v3458 = vld [vmem:[%s3456 + $0x8] sm:$0xff]
    %v3459 = vld [vmem:[%s3456 + $0x10] sm:$0xff]
    %v3460 = vld [vmem:[%s3456 + $0x18] sm:$0xff]
    %s3461 = scalar_lea.vmem %s13, 1
    %v3462 = vld [vmem:[%s3461] sm:$0x1]
    %v3464 = vlaneseq
    %v3465 = vshrl.u32 %v3464, 7
    %v3466 = vsub.s32 0, %v3465
    %v3467 = vrot.slane %v3462, %v3466
    %v3470 = vsel %vm245, %v3454, 0
    %v3473 = vsel %vm245, %v3455, 0
    %3475 = vmatprep.subr.mxu0 0.0
    %3476 = vmatpush1.msra.mxu0 %v3457
    %3477 = vmatprep.subr.mxu0 0.0
    %3478 = vmatpush1.msra.mxu0 %v3458
    %3479 = vmatprep.subr.mxu0 0.0
    %3480 = vmatpush1.msra.mxu0 %v3459
    %3481 = vmatprep.subr.mxu0 0.0
    %3482 = vmatpush1.msra.mxu0 %v3460
    %3483 = vmatprep.subr.mxu0 0.0
    %3484 = vmatpush1.msra.mxu0 0.0
    %3485 = vmatprep.subr.mxu0 0.0
    %3486 = vmatpush1.msra.mxu0 0.0
    %3487 = vmatprep.subr.mxu0 0.0
    %3488 = vmatpush1.msra.mxu0 0.0
    %3489 = vmatprep.subr.mxu0 0.0
    %3490 = vmatpush1.msra.mxu0 0.0
    %3491 = vmatprep.subr.mxu0 0.0
    %3492 = vmatpush1.msra.mxu0 0.0
    %3493 = vmatprep.subr.mxu0 0.0
    %3494 = vmatpush1.msra.mxu0 0.0
    %3495 = vmatprep.subr.mxu0 0.0
    %3496 = vmatpush1.msra.mxu0 0.0
    %3497 = vmatprep.subr.mxu0 0.0
    %3498 = vmatpush1.msra.mxu0 0.0
    %3499 = vmatprep.subr.mxu0 0.0
    %3500 = vmatpush1.msra.mxu0 0.0
    %3501 = vmatprep.subr.mxu0 0.0
    %3502 = vmatpush1.msra.mxu0 0.0
    %3503 = vmatprep.subr.mxu0 0.0
    %3504 = vmatpush1.msra.mxu0 0.0
    %3505 = vmatprep.subr.mxu0 0.0
    %3506 = vmatpush1.msra.mxu0 0.0
    %3507 = vmatprep.subr.mxu0 0.0
    %3508 = vmatpush1.msra.mxu0 0.0
    %3509 = vmatprep.subr.mxu0 0.0
    %3510 = vmatpush1.msra.mxu0 0.0
    %3511 = vmatprep.subr.mxu0 0.0
    %3512 = vmatpush1.msra.mxu0 0.0
    %3513 = vmatprep.subr.mxu0 0.0
    %3514 = vmatpush1.msra.mxu0 0.0
    %3515 = vmatprep.subr.mxu0 0.0
    %3516 = vmatpush1.msra.mxu0 0.0
    %3517 = vmatprep.subr.mxu0 0.0
    %3518 = vmatpush1.msra.mxu0 0.0
    %3519 = vmatprep.subr.mxu0 0.0
    %3520 = vmatpush1.msra.mxu0 0.0
    %3521 = vmatprep.subr.mxu0 0.0
    %3522 = vmatpush1.msra.mxu0 0.0
    %3523 = vmatprep.subr.mxu0 0.0
    %3524 = vmatpush1.msra.mxu0 0.0
    %3525 = vmatprep.subr.mxu0 0.0
    %3526 = vmatpush1.msra.mxu0 0.0
    %3527 = vmatprep.subr.mxu0 0.0
    %3528 = vmatpush1.msra.mxu0 0.0
    %3529 = vmatprep.subr.mxu0 0.0
    %3530 = vmatpush1.msra.mxu0 0.0
    %3531 = vmatprep.subr.mxu0 0.0
    %3532 = vmatpush1.msra.mxu0 0.0
    %3533 = vmatprep.subr.mxu0 0.0
    %3534 = vmatpush1.msra.mxu0 0.0
    %3535 = vmatprep.subr.mxu0 0.0
    %3536 = vmatpush1.msra.mxu0 0.0
    %3537 = vmatprep.subr.mxu0 0.0
    %3538 = vmatpush1.msra.mxu0 0.0
    %3539 = vmatprep.mubr.f32.mxu0 0.0
    %3540 = vmatmul.mubr.f32.gmra.mrb[0].mxu0 %v3470
    %v3541 = vpop.f32.mrb[0].mxu0
    %v3542 = vadd.f32 %v3467, %v3541
    %v3543 = vpop.f32.mrb[0].mxu0
    %3544 = vmatprep.mubr.f32.mxu0 0.0
    %3545 = vmatmul.mubr.f32.gmra.mrb[0].mxu0 %v3473
    %v3546 = vpop.f32.mrb[0].mxu0
    %v3547 = vadd.f32 %v3467, %v3546
    %v3548 = vpop.f32.mrb[0].mxu0
    %3549 = vdwg.mxu0
    %v3550 = vmax.f32 %v3542, 0.0
    %v3551 = vmax.f32 %v3547, 0.0
    %s3552 = scalar_lea.vmem %s14, 64
    %v3553 = vld [vmem:[%s3552] sm:$0xff]
    %v3554 = vld [vmem:[%s3552 + $0x8] sm:$0xff]
    %v3555 = vld [vmem:[%s3552 + $0x10] sm:$0xff]
    %v3556 = vld [vmem:[%s3552 + $0x18] sm:$0xff]
    %v3557 = vld [vmem:[%s3552 + $0x20] sm:$0xff]
    %v3558 = vld [vmem:[%s3552 + $0x28] sm:$0xff]
    %v3559 = vld [vmem:[%s3552 + $0x30] sm:$0xff]
    %v3560 = vld [vmem:[%s3552 + $0x38] sm:$0xff]
    %s3561 = scalar_lea.vmem %s15, 1
    %v3562 = vld [vmem:[%s3561] sm:$0x1]
    %v3564 = vlaneseq
    %v3565 = vshrl.u32 %v3564, 7
    %v3566 = vsub.s32 0, %v3565
    %v3567 = vrot.slane %v3562, %v3566
    %v3570 = vsel %vm1798, %v3550, 0
    %v3573 = vsel %vm1798, %v3551, 0
    %3575 = vmatprep.subr.mxu0 0.0
    %3576 = vmatpush1.msra.mxu0 %v3553
    %3577 = vmatprep.subr.mxu0 0.0
    %3578 = vmatpush1.msra.mxu0 %v3554
    %3579 = vmatprep.subr.mxu0 0.0
    %3580 = vmatpush1.msra.mxu0 %v3555
    %3581 = vmatprep.subr.mxu0 0.0
    %3582 = vmatpush1.msra.mxu0 %v3556
    %3583 = vmatprep.subr.mxu0 0.0
    %3584 = vmatpush1.msra.mxu0 %v3557
    %3585 = vmatprep.subr.mxu0 0.0
    %3586 = vmatpush1.msra.mxu0 %v3558
    %3587 = vmatprep.subr.mxu0 0.0
    %3588 = vmatpush1.msra.mxu0 %v3559
    %3589 = vmatprep.subr.mxu0 0.0
    %3590 = vmatpush1.msra.mxu0 %v3560
    %3591 = vmatprep.subr.mxu0 0.0
    %3592 = vmatpush1.msra.mxu0 0.0
    %3593 = vmatprep.subr.mxu0 0.0
    %3594 = vmatpush1.msra.mxu0 0.0
    %3595 = vmatprep.subr.mxu0 0.0
    %3596 = vmatpush1.msra.mxu0 0.0
    %3597 = vmatprep.subr.mxu0 0.0
    %3598 = vmatpush1.msra.mxu0 0.0
    %3599 = vmatprep.subr.mxu0 0.0
    %3600 = vmatpush1.msra.mxu0 0.0
    %3601 = vmatprep.subr.mxu0 0.0
    %3602 = vmatpush1.msra.mxu0 0.0
    %3603 = vmatprep.subr.mxu0 0.0
    %3604 = vmatpush1.msra.mxu0 0.0
    %3605 = vmatprep.subr.mxu0 0.0
    %3606 = vmatpush1.msra.mxu0 0.0
    %3607 = vmatprep.subr.mxu0 0.0
    %3608 = vmatpush1.msra.mxu0 0.0
    %3609 = vmatprep.subr.mxu0 0.0
    %3610 = vmatpush1.msra.mxu0 0.0
    %3611 = vmatprep.subr.mxu0 0.0
    %3612 = vmatpush1.msra.mxu0 0.0
    %3613 = vmatprep.subr.mxu0 0.0
    %3614 = vmatpush1.msra.mxu0 0.0
    %3615 = vmatprep.subr.mxu0 0.0
    %3616 = vmatpush1.msra.mxu0 0.0
    %3617 = vmatprep.subr.mxu0 0.0
    %3618 = vmatpush1.msra.mxu0 0.0
    %3619 = vmatprep.subr.mxu0 0.0
    %3620 = vmatpush1.msra.mxu0 0.0
    %3621 = vmatprep.subr.mxu0 0.0
    %3622 = vmatpush1.msra.mxu0 0.0
    %3623 = vmatprep.subr.mxu0 0.0
    %3624 = vmatpush1.msra.mxu0 0.0
    %3625 = vmatprep.subr.mxu0 0.0
    %3626 = vmatpush1.msra.mxu0 0.0
    %3627 = vmatprep.subr.mxu0 0.0
    %3628 = vmatpush1.msra.mxu0 0.0
    %3629 = vmatprep.subr.mxu0 0.0
    %3630 = vmatpush1.msra.mxu0 0.0
    %3631 = vmatprep.subr.mxu0 0.0
    %3632 = vmatpush1.msra.mxu0 0.0
    %3633 = vmatprep.subr.mxu0 0.0
    %3634 = vmatpush1.msra.mxu0 0.0
    %3635 = vmatprep.subr.mxu0 0.0
    %3636 = vmatpush1.msra.mxu0 0.0
    %3637 = vmatprep.subr.mxu0 0.0
    %3638 = vmatpush1.msra.mxu0 0.0
    %3639 = vmatprep.mubr.f32.mxu0 0.0
    %3640 = vmatmul.mubr.f32.gmra.mrb[0].mxu0 %v3570
    %v3641 = vpop.f32.mrb[0].mxu0
    %v3642 = vadd.f32 %v3567, %v3641
    %v3643 = vpop.f32.mrb[0].mxu0
    %3644 = vmatprep.mubr.f32.mxu0 0.0
    %3645 = vmatmul.mubr.f32.gmra.mrb[0].mxu0 %v3573
    %v3646 = vpop.f32.mrb[0].mxu0
    %v3647 = vadd.f32 %v3567, %v3646
    %v3648 = vpop.f32.mrb[0].mxu0
    %3649 = vdwg.mxu0
    %v3650 = vadd.f32 %v3454, %v3642
    %v3651 = vadd.f32 %v3455, %v3647
    %s3652 = scalar_lea.vmem %s10, 1
    %v3653 = vld [vmem:[%s3652] sm:$0x1]
    %s3654 = scalar_lea.vmem %s11, 1
    %v3655 = vld [vmem:[%s3654] sm:$0x1]
    %v3656 = vsel %vm245, %v3650, 0.0
    %3657 = vadd.xlane.f32.xlu0 %v3656
    %v3658 = vpop.xlane.xlu0 %3657
    %v3659 = vsel %vm245, %v3651, 0.0
    %3660 = vadd.xlane.f32.xlu0 %v3659
    %v3661 = vpop.xlane.xlu0 %3660
    %v3662 = vmul.f32 %v3658, %v1652
    %v3663 = vmul.f32 %v3661, %v1652
    %v3664 = vsub.f32 %v3650, %v3662
    %v3665 = vsub.f32 %v3651, %v3663
    %v3666 = vmul.f32 %v3664, %v3664
    %v3667 = vmul.f32 %v3665, %v3665
    %v3668 = vsel %vm245, %v3666, 0.0
    %3669 = vadd.xlane.f32.xlu0 %v3668
    %v3670 = vpop.xlane.xlu0 %3669
    %v3671 = vsel %vm245, %v3667, 0.0
    %3672 = vadd.xlane.f32.xlu0 %v3671
    %v3673 = vpop.xlane.xlu0 %3672
    %v3674 = vmul.f32 %v3670, %v1652
    %v3675 = vmul.f32 %v3673, %v1652
    %v3676 = vadd.f32 %v3674, 1e-05
    %v3677 = vadd.f32 %v3675, 1e-05
    %v3678 = vrsqrt.pop %v3676
    %v3679 = vrsqrt.pop %v3677
    %v3680 = vmul.f32 %v3664, %v3678
    %v3681 = vmul.f32 %v3665, %v3679
    %v3683 = vlaneseq
    %v3684 = vshrl.u32 %v3683, 7
    %v3685 = vsub.s32 0, %v3684
    %v3686 = vrot.slane %v3653, %v3685
    %v3688 = vmul.f32 %v3680, %v3686
    %v3689 = vmul.f32 %v3681, %v3686
    %v3691 = vlaneseq
    %v3692 = vshrl.u32 %v3691, 7
    %v3693 = vsub.s32 0, %v3692
    %v3694 = vrot.slane %v3655, %v3693
    %v3696 = vadd.f32 %v3688, %v3694
    %v3697 = vadd.f32 %v3689, %v3694
    %v3698 = vld [vmem:[%s16] sm:$0x3]
    %v3700 = vsel %vm866, %v3698, 0
    %3702 = vmatprep.subr.mxu0 0.0
    %3703 = vmatpush1.msra.mxu0 %v3696
    %3704 = vmatprep.subr.mxu0 0.0
    %3705 = vmatpush1.msra.mxu0 %v3697
    %3706 = vmatprep.subr.mxu0 0.0
    %3707 = vmatpush1.msra.mxu0 0.0
    %3708 = vmatprep.subr.mxu0 0.0
    %3709 = vmatpush1.msra.mxu0 0.0
    %3710 = vmatprep.subr.mxu0 0.0
    %3711 = vmatpush1.msra.mxu0 0.0
    %3712 = vmatprep.subr.mxu0 0.0
    %3713 = vmatpush1.msra.mxu0 0.0
    %3714 = vmatprep.subr.mxu0 0.0
    %3715 = vmatpush1.msra.mxu0 0.0
    %3716 = vmatprep.subr.mxu0 0.0
    %3717 = vmatpush1.msra.mxu0 0.0
    %3718 = vmatprep.subr.mxu0 0.0
    %3719 = vmatpush1.msra.mxu0 0.0
    %3720 = vmatprep.subr.mxu0 0.0
    %3721 = vmatpush1.msra.mxu0 0.0
    %3722 = vmatprep.subr.mxu0 0.0
    %3723 = vmatpush1.msra.mxu0 0.0
    %3724 = vmatprep.subr.mxu0 0.0
    %3725 = vmatpush1.msra.mxu0 0.0
    %3726 = vmatprep.subr.mxu0 0.0
    %3727 = vmatpush1.msra.mxu0 0.0
    %3728 = vmatprep.subr.mxu0 0.0
    %3729 = vmatpush1.msra.mxu0 0.0
    %3730 = vmatprep.subr.mxu0 0.0
    %3731 = vmatpush1.msra.mxu0 0.0
    %3732 = vmatprep.subr.mxu0 0.0
    %3733 = vmatpush1.msra.mxu0 0.0
    %3734 = vmatprep.subr.mxu0 0.0
    %3735 = vmatpush1.msra.mxu0 0.0
    %3736 = vmatprep.subr.mxu0 0.0
    %3737 = vmatpush1.msra.mxu0 0.0
    %3738 = vmatprep.subr.mxu0 0.0
    %3739 = vmatpush1.msra.mxu0 0.0
    %3740 = vmatprep.subr.mxu0 0.0
    %3741 = vmatpush1.msra.mxu0 0.0
    %3742 = vmatprep.subr.mxu0 0.0
    %3743 = vmatpush1.msra.mxu0 0.0
    %3744 = vmatprep.subr.mxu0 0.0
    %3745 = vmatpush1.msra.mxu0 0.0
    %3746 = vmatprep.subr.mxu0 0.0
    %3747 = vmatpush1.msra.mxu0 0.0
    %3748 = vmatprep.subr.mxu0 0.0
    %3749 = vmatpush1.msra.mxu0 0.0
    %3750 = vmatprep.subr.mxu0 0.0
    %3751 = vmatpush1.msra.mxu0 0.0
    %3752 = vmatprep.subr.mxu0 0.0
    %3753 = vmatpush1.msra.mxu0 0.0
    %3754 = vmatprep.subr.mxu0 0.0
    %3755 = vmatpush1.msra.mxu0 0.0
    %3756 = vmatprep.subr.mxu0 0.0
    %3757 = vmatpush1.msra.mxu0 0.0
    %3758 = vmatprep.subr.mxu0 0.0
    %3759 = vmatpush1.msra.mxu0 0.0
    %3760 = vmatprep.subr.mxu0 0.0
    %3761 = vmatpush1.msra.mxu0 0.0
    %3762 = vmatprep.subr.mxu0 0.0
    %3763 = vmatpush1.msra.mxu0 0.0
    %3764 = vmatprep.subr.mxu0 0.0
    %3765 = vmatpush1.msra.mxu0 0.0
    %3766 = vmatprep.mubr.f32.mxu0 0.0
    %3767 = vmatmul.mubr.f32.gmra.mrb[0].mxu0 %v3700
    %v3768 = vpop.f32.mrb[0].mxu0
    %v3769 = vadd.f32 0.0, %v3768
    %v3770 = vpop.f32.mrb[0].mxu0
    %3771 = vdwg.mxu0
    %v3772 = vld [vmem:[%s17] sm:$0xff]
    %v3773 = vld [vmem:[%s17 + $0x8] sm:$0xff]
    %v3774 = vld [vmem:[%s17 + $0x10] sm:$0xff]
    %v3775 = vld [vmem:[%s17 + $0x18] sm:$0xff]
    %v3776 = vld [vmem:[%s18] sm:$0x1]
    %v3778 = vlaneseq
    %v3779 = vshrl.u32 %v3778, 7
    %v3780 = vsub.s32 0, %v3779
    %v3781 = vrot.slane %v3776, %v3780
    %v3784 = vsel %vm245, %v3769, 0
    %3786 = vmatprep.subr.mxu0 0.0
    %3787 = vmatpush1.msra.mxu0 %v3772
    %3788 = vmatprep.subr.mxu0 0.0
    %3789 = vmatpush1.msra.mxu0 %v3773
    %3790 = vmatprep.subr.mxu0 0.0
    %3791 = vmatpush1.msra.mxu0 %v3774
    %3792 = vmatprep.subr.mxu0 0.0
    %3793 = vmatpush1.msra.mxu0 %v3775
    %3794 = vmatprep.subr.mxu0 0.0
    %3795 = vmatpush1.msra.mxu0 0.0
    %3796 = vmatprep.subr.mxu0 0.0
    %3797 = vmatpush1.msra.mxu0 0.0
    %3798 = vmatprep.subr.mxu0 0.0
    %3799 = vmatpush1.msra.mxu0 0.0
    %3800 = vmatprep.subr.mxu0 0.0
    %3801 = vmatpush1.msra.mxu0 0.0
    %3802 = vmatprep.subr.mxu0 0.0
    %3803 = vmatpush1.msra.mxu0 0.0
    %3804 = vmatprep.subr.mxu0 0.0
    %3805 = vmatpush1.msra.mxu0 0.0
    %3806 = vmatprep.subr.mxu0 0.0
    %3807 = vmatpush1.msra.mxu0 0.0
    %3808 = vmatprep.subr.mxu0 0.0
    %3809 = vmatpush1.msra.mxu0 0.0
    %3810 = vmatprep.subr.mxu0 0.0
    %3811 = vmatpush1.msra.mxu0 0.0
    %3812 = vmatprep.subr.mxu0 0.0
    %3813 = vmatpush1.msra.mxu0 0.0
    %3814 = vmatprep.subr.mxu0 0.0
    %3815 = vmatpush1.msra.mxu0 0.0
    %3816 = vmatprep.subr.mxu0 0.0
    %3817 = vmatpush1.msra.mxu0 0.0
    %3818 = vmatprep.subr.mxu0 0.0
    %3819 = vmatpush1.msra.mxu0 0.0
    %3820 = vmatprep.subr.mxu0 0.0
    %3821 = vmatpush1.msra.mxu0 0.0
    %3822 = vmatprep.subr.mxu0 0.0
    %3823 = vmatpush1.msra.mxu0 0.0
    %3824 = vmatprep.subr.mxu0 0.0
    %3825 = vmatpush1.msra.mxu0 0.0
    %3826 = vmatprep.subr.mxu0 0.0
    %3827 = vmatpush1.msra.mxu0 0.0
    %3828 = vmatprep.subr.mxu0 0.0
    %3829 = vmatpush1.msra.mxu0 0.0
    %3830 = vmatprep.subr.mxu0 0.0
    %3831 = vmatpush1.msra.mxu0 0.0
    %3832 = vmatprep.subr.mxu0 0.0
    %3833 = vmatpush1.msra.mxu0 0.0
    %3834 = vmatprep.subr.mxu0 0.0
    %3835 = vmatpush1.msra.mxu0 0.0
    %3836 = vmatprep.subr.mxu0 0.0
    %3837 = vmatpush1.msra.mxu0 0.0
    %3838 = vmatprep.subr.mxu0 0.0
    %3839 = vmatpush1.msra.mxu0 0.0
    %3840 = vmatprep.subr.mxu0 0.0
    %3841 = vmatpush1.msra.mxu0 0.0
    %3842 = vmatprep.subr.mxu0 0.0
    %3843 = vmatpush1.msra.mxu0 0.0
    %3844 = vmatprep.subr.mxu0 0.0
    %3845 = vmatpush1.msra.mxu0 0.0
    %3846 = vmatprep.subr.mxu0 0.0
    %3847 = vmatpush1.msra.mxu0 0.0
    %3848 = vmatprep.subr.mxu0 0.0
    %3849 = vmatpush1.msra.mxu0 0.0
    %3850 = vmatprep.mubr.f32.mxu0 0.0
    %3851 = vmatmul.mubr.f32.gmra.mrb[0].mxu0 %v3784
    %v3852 = vpop.f32.mrb[0].mxu0
    %v3853 = vadd.f32 %v3781, %v3852
    %v3854 = vpop.f32.mrb[0].mxu0
    %3855 = vdwg.mxu0
    %vm3856 = vcmask 17408
    %3857 = vst.msk [vmem:[#allocation2] sm:$0x3] %vm3856, %v3853
    // Predicated region
    $region78: #{tpu_custom_call.1} parent=1 // pred_check
      _
    $region79: #{tpu_custom_call.1} parent=1 // pred_check_branch
      %3859 = sbr.rel (0) target = $region81
    $region80: #{tpu_custom_call.1} parent=1 // pred_region
      %s3861 = ssub.s32 32, 32
      %3862 = vsyncadd [#allocation3], %s3861
      %s3864 = sshll.u32 [#allocation2], 4
      %s3865 = int_to_ptr.vmem [resolvable:$true] %s3864
      %3867 = dma.vmem_to_hbm [thread:$0]  %s3865, 32, %s19, [#allocation3]
    $region81: #{tpu_custom_call.1} parent=1 // pred_fallthru
      _
    // Predicated region
    $region82: #{tpu_custom_call.1} parent=1 // pred_check
      _
    $region83: #{tpu_custom_call.1} parent=1 // pred_check_branch
      %3869 = sbr.rel (0) target = $region85
    $region84: #{tpu_custom_call.1} parent=1 // pred_region
      %3870 = dma.done [#allocation3], 32
    $region85: #{tpu_custom_call.1} parent=1 // pred_fallthru
      _
    %3871 = vsyncpa [#allocation3], 1

</llo_original>
